<compile_context>
chip_gen: v6e
topology: v6e:2x2x1
jax: 0.10.0
libtpu: 0.0.40
codegen_flags: <defaults>
</compile_context>

<pallas_src>
import jax
import jax.numpy as jnp
from jax.experimental import pallas as pl
from jax.experimental.pallas import tpu as pltpu

NUM_POINTS = 2048            # 3 * 2048 = 6144
D_IN, D_H, D_OUT = 128, 256, 3 * NUM_POINTS
BN_EPS = 1e-5


# ----------------------------------------------------------------------------
# Kernel
# ----------------------------------------------------------------------------
def _decoder_kernel(x_ref, w1_ref, c1_ref, w2_ref, c2_ref, w3_ref, c3_ref,
                    out_ref):
    # Layers 1+2: recomputed every grid step (tiny, hidden under DMA); no
    # scratch / cross-step state, so both grid axes can be "parallel".
    x = x_ref[...].astype(jnp.bfloat16)
    h1 = jnp.dot(x, w1_ref[...], preferred_element_type=jnp.float32)
    h1 = jnp.maximum(h1 + c1_ref[...], 0.0)                 # Linear+BN folded
    h2 = jnp.dot(h1.astype(jnp.bfloat16), w2_ref[...],
                 preferred_element_type=jnp.float32)
    h2 = jnp.maximum(h2 + c2_ref[...], 0.0)                 # Linear+BN folded

    # Layer 3, one (TB, TN) output tile: (TB, 256) @ (256, TN) on the MXU.
    h3 = jnp.dot(h2.astype(jnp.bfloat16), w3_ref[...],
                 preferred_element_type=jnp.float32)
    h3 = jnp.maximum(h3 + c3_ref[...], 0.0)
    out_ref[...] = h3.astype(out_ref.dtype)


# ----------------------------------------------------------------------------
# Wrapper
# ----------------------------------------------------------------------------
def decoder_forward(x, prepared_params, *, tn=3072):
    """x: (B, 128) float32 -> (B, 3, NUM_POINTS) float32."""
    (w1, c1, w2, c2, w3, c3) = prepared_params
    B = x.shape[0]
    x = x.astype(jnp.float32)

    # Pad the batch to a TPU-friendly multiple of 8; for large batches tile at
    # 256 rows so the batch axis can also parallelize.
    pb = -(-B // 8) * 8
    if pb > 256:
        pb = -(-B // 256) * 256
        tb = 256
    else:
        tb = pb
    if pb != B:
        x = jnp.pad(x, ((0, pb - B), (0, 0)))

    assert D_OUT % tn == 0
    # j-major grid: w3/c3 tiles (index depend only on j, the outer axis) are
    # DMA'd once per j and reused across every inner batch tile.
    grid = (D_OUT // tn, pb // tb)

    flat = pl.pallas_call(
        _decoder_kernel,
        out_shape=jax.ShapeDtypeStruct((pb, D_OUT), jnp.float32),
        grid_spec=pltpu.PrefetchScalarGridSpec(
            num_scalar_prefetch=0,
            grid=grid,
            in_specs=[
                pl.BlockSpec((tb, D_IN), lambda j, i: (i, 0)),   # x (per batch tile)
                pl.BlockSpec((D_IN, D_H), lambda j, i: (0, 0)),  # w1 (resident, bf16)
                pl.BlockSpec((1, D_H), lambda j, i: (0, 0)),     # shift1 (f32)
                pl.BlockSpec((D_H, D_H), lambda j, i: (0, 0)),   # w2 (resident, bf16)
                pl.BlockSpec((1, D_H), lambda j, i: (0, 0)),     # shift2 (f32)
                pl.BlockSpec((D_H, tn), lambda j, i: (0, j)),    # w3 tile (bf16, reused over i)
                pl.BlockSpec((1, tn), lambda j, i: (0, j)),      # b3 tile (f32)
            ],
            out_specs=pl.BlockSpec((tb, tn), lambda j, i: (i, j)),
        ),
        compiler_params=pltpu.CompilerParams(
            dimension_semantics=("parallel", "parallel"),
            vmem_limit_bytes=32 * 1024 * 1024),
    )(x, w1, c1, w2, c2, w3, c3)

    # out_3.view(-1, 3, num_points)
    return flat[:B].reshape(B, 3, NUM_POINTS)


# ----------------------------------------------------------------------------
# Parameter construction (PyTorch-like) and offline folding
# ----------------------------------------------------------------------------
def init_raw_params(key):
    """Synthetic params in PyTorch layout: W (out,in), b/gamma/beta/mean/var (feat,)."""
    ks = jax.random.split(key, 16)

    def linear(kw, kb, fan_in, fan_out):
        bound = 1.0 / (fan_in ** 0.5)
        W = jax.random.uniform(kw, (fan_out, fan_in), jnp.float32, -bound, bound)
        b = jax.random.uniform(kb, (fan_out,), jnp.float32, -bound, bound)
        return W, b

    def batchnorm(kg, kb, km, kv, feat):
        gamma = 1.0 + 0.1 * jax.random.normal(kg, (feat,), jnp.float32)
        beta = 0.1 * jax.random.normal(kb, (feat,), jnp.float32)
        rmean = 0.1 * jax.random.normal(km, (feat,), jnp.float32)
        rvar = jnp.abs(1.0 + 0.1 * jax.random.normal(kv, (feat,), jnp.float32))
        return gamma, beta, rmean, rvar

    W1, b1 = linear(ks[0], ks[1], D_IN, D_H)
    g1, be1, rm1, rv1 = batchnorm(ks[2], ks[3], ks[4], ks[5], D_H)
    W2, b2 = linear(ks[6], ks[7], D_H, D_H)
    g2, be2, rm2, rv2 = batchnorm(ks[8], ks[9], ks[10], ks[11], D_H)
    W3, b3 = linear(ks[12], ks[13], D_H, D_OUT)
    return (W1, b1, g1, be1, rm1, rv1, W2, b2, g2, be2, rm2, rv2, W3, b3)


def prepare_params(raw):
    """Fold eval-mode BN into the preceding Linear and cast weights to bf16.

      scale = gamma / sqrt(running_var + eps)
      relu(BN(x @ W^T + b)) == relu(x @ (W^T * scale) + (b*scale + beta - mean*scale))
    """
    (W1, b1, g1, be1, rm1, rv1,
     W2, b2, g2, be2, rm2, rv2,
     W3, b3) = raw

    s1 = g1 / jnp.sqrt(rv1 + BN_EPS)
    t1 = be1 - rm1 * s1
    s2 = g2 / jnp.sqrt(rv2 + BN_EPS)
    t2 = be2 - rm2 * s2

    w1 = (W1.T * s1[None, :]).astype(jnp.bfloat16)           # (128, 256)
    c1 = (b1 * s1 + t1)[None, :].astype(jnp.float32)         # (1, 256)
    w2 = (W2.T * s2[None, :]).astype(jnp.bfloat16)           # (256, 256)
    c2 = (b2 * s2 + t2)[None, :].astype(jnp.float32)         # (1, 256)
    w3 = W3.T.astype(jnp.bfloat16)                           # (256, 6144)
    c3 = b3[None, :].astype(jnp.float32)                     # (1, 6144)
    return (w1, c1, w2, c2, w3, c3)


# ----------------------------------------------------------------------------
# References
# ----------------------------------------------------------------------------
def _reference_prepared(x, prepared):
    """Pure-JAX reference with the same bf16-operand / f32-accumulate strategy."""
    (w1, c1, w2, c2, w3, c3) = prepared
    h1 = jnp.maximum(jnp.dot(x.astype(jnp.bfloat16), w1,
                             preferred_element_type=jnp.float32) + c1, 0.0)
    h2 = jnp.maximum(jnp.dot(h1.astype(jnp.bfloat16), w2,
                             preferred_element_type=jnp.float32) + c2, 0.0)
    h3 = jnp.maximum(jnp.dot(h2.astype(jnp.bfloat16), w3,
                             preferred_element_type=jnp.float32) + c3, 0.0)
    return h3.reshape(x.shape[0], 3, NUM_POINTS)


def _reference_f32(x, raw):
    """Full-f32, un-folded eval-mode reference matching the PyTorch module."""
    (W1, b1, g1, be1, rm1, rv1,
     W2, b2, g2, be2, rm2, rv2,
     W3, b3) = raw
    h = x @ W1.T + b1
    h = (h - rm1) / jnp.sqrt(rv1 + BN_EPS) * g1 + be1
    h = jnp.maximum(h, 0.0)
    h = h @ W2.T + b2
    h = (h - rm2) / jnp.sqrt(rv2 + BN_EPS) * g2 + be2
    h = jnp.maximum(h, 0.0)
    h = jnp.maximum(h @ W3.T + b3, 0.0)
    return h.reshape(x.shape[0], 3, NUM_POINTS)


if __name__ == "__main__":
    key = jax.random.PRNGKey(0)
    k_x, k_p = jax.random.split(key)

    B = 8  # small batch; latent dim 128 per the module
    x = jax.random.normal(k_x, (B, D_IN), jnp.float32)

    raw = init_raw_params(k_p)
    prepared = prepare_params(raw)

    out = decoder_forward(x, prepared)
    out = jax.block_until_ready(out)

    assert out.shape == (B, 3, NUM_POINTS), out.shape

    # Tight check against a reference using the same precision strategy.
    ref_match = _reference_prepared(x, prepared)
    err_match = float(jnp.max(jnp.abs(out - ref_match)))
    assert err_match < 5e-3, f"max abs err vs matched-precision ref {err_match}"

    # Looser check against the full-f32, un-folded PyTorch-style forward
    # (difference is only bf16 weight/activation quantization).
    ref_f32 = _reference_f32(x, raw)
    err_f32 = float(jnp.max(jnp.abs(out - ref_f32)))
    assert err_f32 < 5e-2, f"max abs err vs f32 ref {err_f32}"

    print("KERNEL_OK")
</pallas_src>

<mosaic_0001>
module attributes {stable_mosaic.version = 11 : i64} {
  func.func @_decoder_kernel(%arg0: i32, %arg1: i32, %arg2: memref<8x128xf32, #tpu.memory_space<vmem>>, %arg3: memref<128x256xbf16, #tpu.memory_space<vmem>>, %arg4: memref<1x256xf32, #tpu.memory_space<vmem>>, %arg5: memref<256x256xbf16, #tpu.memory_space<vmem>>, %arg6: memref<1x256xf32, #tpu.memory_space<vmem>>, %arg7: memref<256x3072xbf16, #tpu.memory_space<vmem>>, %arg8: memref<1x3072xf32, #tpu.memory_space<vmem>>, %arg9: memref<8x3072xf32, #tpu.memory_space<vmem>>) attributes {dimension_semantics = [#tpu.dimension_semantics<parallel>, #tpu.dimension_semantics<parallel>], iteration_bounds = array<i64: 2, 1>, scalar_prefetch = 0 : i64, scratch_operands = 0 : i64, tpu.core_type = #tpu.core_type<tc>, window_params = [{transform_indices = @transform_0, window_bounds = array<i64: 8, 128>}, {pipeline_mode = #tpu.pipeline_mode<synchronous>, transform_indices = @transform_1, window_bounds = array<i64: 128, 256>}, {pipeline_mode = #tpu.pipeline_mode<synchronous>, transform_indices = @transform_2, window_bounds = array<i64: 1, 256>}, {pipeline_mode = #tpu.pipeline_mode<synchronous>, transform_indices = @transform_3, window_bounds = array<i64: 256, 256>}, {pipeline_mode = #tpu.pipeline_mode<synchronous>, transform_indices = @transform_4, window_bounds = array<i64: 1, 256>}, {transform_indices = @transform_5, window_bounds = array<i64: 256, 3072>}, {transform_indices = @transform_6, window_bounds = array<i64: 1, 3072>}, {transform_indices = @transform_7, window_bounds = array<i64: 8, 3072>}]} {
    %c0 = arith.constant 0 : index
    %c0_0 = arith.constant 0 : index
    %0 = vector.load %arg2[%c0, %c0_0] : memref<8x128xf32, #tpu.memory_space<vmem>>, vector<8x128xf32>
    %1 = arith.truncf %0 : vector<8x128xf32> to vector<8x128xbf16>
    %c0_1 = arith.constant 0 : index
    %c0_2 = arith.constant 0 : index
    %2 = vector.load %arg3[%c0_1, %c0_2] : memref<128x256xbf16, #tpu.memory_space<vmem>>, vector<128x256xbf16>
    %cst = arith.constant dense<0.000000e+00> : vector<8x256xf32>
    %3 = tpu.matmul %1, %2, %cst {dimension_numbers = #tpu.dot_dimension_numbers<[1], [0], [0], [1], [0, 0, 1, 1], [], []>} : vector<8x128xbf16>, vector<128x256xbf16>, vector<8x256xf32> -> vector<8x256xf32>
    %c0_3 = arith.constant 0 : index
    %c0_4 = arith.constant 0 : index
    %4 = vector.load %arg4[%c0_3, %c0_4] : memref<1x256xf32, #tpu.memory_space<vmem>>, vector<1x256xf32>
    %5 = vector.broadcast %4 : vector<1x256xf32> to vector<8x256xf32>
    %6 = arith.addf %3, %5 : vector<8x256xf32>
    %cst_5 = arith.constant 0.000000e+00 : f32
    %7 = vector.broadcast %cst_5 : f32 to vector<8x256xf32>
    %8 = arith.maximumf %6, %7 : vector<8x256xf32>
    %9 = arith.truncf %8 : vector<8x256xf32> to vector<8x256xbf16>
    %c0_6 = arith.constant 0 : index
    %c0_7 = arith.constant 0 : index
    %10 = vector.load %arg5[%c0_6, %c0_7] : memref<256x256xbf16, #tpu.memory_space<vmem>>, vector<256x256xbf16>
    %cst_8 = arith.constant dense<0.000000e+00> : vector<8x256xf32>
    %11 = tpu.matmul %9, %10, %cst_8 {dimension_numbers = #tpu.dot_dimension_numbers<[1], [0], [0], [1], [0, 0, 1, 1], [], []>} : vector<8x256xbf16>, vector<256x256xbf16>, vector<8x256xf32> -> vector<8x256xf32>
    %c0_9 = arith.constant 0 : index
    %c0_10 = arith.constant 0 : index
    %12 = vector.load %arg6[%c0_9, %c0_10] : memref<1x256xf32, #tpu.memory_space<vmem>>, vector<1x256xf32>
    %13 = vector.broadcast %12 : vector<1x256xf32> to vector<8x256xf32>
    %14 = arith.addf %11, %13 : vector<8x256xf32>
    %cst_11 = arith.constant 0.000000e+00 : f32
    %15 = vector.broadcast %cst_11 : f32 to vector<8x256xf32>
    %16 = arith.maximumf %14, %15 : vector<8x256xf32>
    %17 = arith.truncf %16 : vector<8x256xf32> to vector<8x256xbf16>
    %c0_12 = arith.constant 0 : index
    %c0_13 = arith.constant 0 : index
    %18 = vector.load %arg7[%c0_12, %c0_13] : memref<256x3072xbf16, #tpu.memory_space<vmem>>, vector<256x3072xbf16>
    %cst_14 = arith.constant dense<0.000000e+00> : vector<8x3072xf32>
    %19 = tpu.matmul %17, %18, %cst_14 {dimension_numbers = #tpu.dot_dimension_numbers<[1], [0], [0], [1], [0, 0, 1, 1], [], []>} : vector<8x256xbf16>, vector<256x3072xbf16>, vector<8x3072xf32> -> vector<8x3072xf32>
    %c0_15 = arith.constant 0 : index
    %c0_16 = arith.constant 0 : index
    %20 = vector.load %arg8[%c0_15, %c0_16] : memref<1x3072xf32, #tpu.memory_space<vmem>>, vector<1x3072xf32>
    %21 = vector.broadcast %20 : vector<1x3072xf32> to vector<8x3072xf32>
    %22 = arith.addf %19, %21 : vector<8x3072xf32>
    %cst_17 = arith.constant 0.000000e+00 : f32
    %23 = vector.broadcast %cst_17 : f32 to vector<8x3072xf32>
    %24 = arith.maximumf %22, %23 : vector<8x3072xf32>
    %c0_18 = arith.constant 0 : index
    %c0_19 = arith.constant 0 : index
    %25 = vector.load %arg9[%c0_18, %c0_19] : memref<8x3072xf32, #tpu.memory_space<vmem>>, vector<8x3072xf32>
    tpu.vector_store %arg9[%c0_18, %c0_19], %24 {strides = array<i32>} : memref<8x3072xf32, #tpu.memory_space<vmem>>, vector<8x3072xf32>,
    return
  }
  func.func @transform_0(%arg0: i32, %arg1: i32) -> (i32, i32) {
    %c0_i32 = arith.constant 0 : i32
    %c0_i32_0 = arith.constant 0 : i32
    return %arg1, %c0_i32 : i32, i32
  }
  func.func @transform_1(%arg0: i32, %arg1: i32) -> (i32, i32) {
    %c0_i32 = arith.constant 0 : i32
    %c0_i32_0 = arith.constant 0 : i32
    %c0_i32_1 = arith.constant 0 : i32
    return %c0_i32, %c0_i32_0 : i32, i32
  }
  func.func @transform_2(%arg0: i32, %arg1: i32) -> (i32, i32) {
    %c0_i32 = arith.constant 0 : i32
    %c0_i32_0 = arith.constant 0 : i32
    %c0_i32_1 = arith.constant 0 : i32
    return %c0_i32, %c0_i32_0 : i32, i32
  }
  func.func @transform_3(%arg0: i32, %arg1: i32) -> (i32, i32) {
    %c0_i32 = arith.constant 0 : i32
    %c0_i32_0 = arith.constant 0 : i32
    %c0_i32_1 = arith.constant 0 : i32
    return %c0_i32, %c0_i32_0 : i32, i32
  }
  func.func @transform_4(%arg0: i32, %arg1: i32) -> (i32, i32) {
    %c0_i32 = arith.constant 0 : i32
    %c0_i32_0 = arith.constant 0 : i32
    %c0_i32_1 = arith.constant 0 : i32
    return %c0_i32, %c0_i32_0 : i32, i32
  }
  func.func @transform_5(%arg0: i32, %arg1: i32) -> (i32, i32) {
    %c0_i32 = arith.constant 0 : i32
    %c0_i32_0 = arith.constant 0 : i32
    return %c0_i32, %arg0 : i32, i32
  }
  func.func @transform_6(%arg0: i32, %arg1: i32) -> (i32, i32) {
    %c0_i32 = arith.constant 0 : i32
    %c0_i32_0 = arith.constant 0 : i32
    return %c0_i32, %arg0 : i32, i32
  }
  func.func @transform_7(%arg0: i32, %arg1: i32) -> (i32, i32) {
    %c0_i32 = arith.constant 0 : i32
    return %arg1, %arg0 : i32, i32
  }
}

</mosaic_0001>

<llo_original>
// kernel: tpu_custom_call.1
$region0: #{tpu_custom_call.1}
  #allocation0 [shape = 'u32[]', space=smem, size = 0x4, offset = 0x4, fixed_abs, tag = 'smem constant byte address 0x4 - core index']
  #allocation1 [shape = 'u32[144,128]{1,0:T(1,128)}', space=vmem, size = 0x12000, scoped, tag = 'internal scratch']
  %s0 = inlined_call_operand.hbm [shape: f32[8,128], index: 0, kind: input, shape index: {}]
  %s1 = inlined_call_operand.hbm [shape: bf16[128,256], index: 1, kind: input, shape index: {}]
  %s2 = inlined_call_operand.hbm [shape: f32[1,256], index: 2, kind: input, shape index: {}]
  %s3 = inlined_call_operand.hbm [shape: bf16[256,256], index: 3, kind: input, shape index: {}]
  %s4 = inlined_call_operand.hbm [shape: f32[1,256], index: 4, kind: input, shape index: {}]
  %s5 = inlined_call_operand.hbm [shape: bf16[256,6144], index: 5, kind: input, shape index: {}]
  %s6 = inlined_call_operand.hbm [shape: f32[1,6144], index: 6, kind: input, shape index: {}]
  %s7 = inlined_call_operand.hbm [shape: f32[8,6144], index: 7, kind: output, shape index: {}]
  %s8 = sld [smem:[#allocation0]]
  $region89: #{tpu_custom_call.1} parent=0
    _
  %s10 = ssub.s32 1, %s8
  %s11 = scalar_select 0, %s10, %s8
  $region1: #{tpu_custom_call.1} parent=0
    #allocation2 [shape = 'u8[4096]{0}', space=vmem, size = 0x1000, scoped, tag = 'input window, operand 0, single buffered']
    #allocation3 [shape = 's32[2]{0}', space=sflag, size = 0x8, scoped, tag = 'scoped memory for tpu_custom_call.1']
    #allocation4 [shape = 's32[2]{0}', space=sflag, size = 0x8, scoped, tag = 'scoped memory for tpu_custom_call.1']
    #allocation5 [shape = 'u8[65536]{0}', space=vmem, size = 0x10000, scoped, tag = 'input window, operand 1, single buffered']
    #allocation6 [shape = 's32[1]{0}', space=sflag, size = 0x4, scoped, tag = 'scoped memory for tpu_custom_call.1']
    #allocation7 [shape = 'u8[1024]{0}', space=vmem, size = 0x400, scoped, tag = 'input window, operand 2, single buffered']
    #allocation8 [shape = 'u8[131072]{0}', space=vmem, size = 0x20000, scoped, tag = 'input window, operand 3, single buffered']
    #allocation9 [shape = 's32[1]{0}', space=sflag, size = 0x4, scoped, tag = 'scoped memory for tpu_custom_call.1']
    #allocation10 [shape = 'u8[1024]{0}', space=vmem, size = 0x400, scoped, tag = 'input window, operand 4, single buffered']
    #allocation11 [shape = 'u8[3145728]{0}', space=vmem, size = 0x300000, scoped, tag = 'input window, operand 5']
    #allocation12 [shape = 's32[2]{0}', space=sflag, size = 0x8, scoped, tag = 'scoped memory for tpu_custom_call.1']
    #allocation13 [shape = 'u8[24576]{0}', space=vmem, size = 0x6000, scoped, tag = 'input window, operand 6']
    #allocation14 [shape = 'u8[196608]{0}', space=vmem, size = 0x30000, scoped, tag = 'output window, operand 0']
    %12 = vsyncpa [#allocation3], 0
    %13 = vsyncpa [#allocation6], 0
    %14 = vsyncpa [#allocation9], 0
    %15 = vsyncpa [#allocation12], 0
    %s16 = scalar_lea.sflag [#allocation12], 1
    %17 = vsyncpa %s16, 0
    %18 = vsyncpa [#allocation4], 0
    %s19 = scalar_lea.sflag [#allocation4], 1
    %20 = vsyncpa %s19, 0
    loop: start=0, step=1, limit=4
    $region2: #{tpu_custom_call.1} parent=1 // loop_pre_header
      _
    $region3: #{tpu_custom_call.1} parent=1 // loop_header
      %s22 = sphi 0, %s26
      %p23 = scmp.ge.s32.totalorder %s22, 4
      %s29 = sphi 0, %s41
      %s30 = sphi 0, %s37
      %s31 = sphi 0, %s29
      %s32 = sphi 0, %s30
      %s33 = sphi 0, %s31
      %s34 = sphi 0, %s32
      %s44 = sphi 0, %s46
      %s47 = sphi 0, %s44
      %s48 = sphi 0, %s47
      %s64 = sphi 0, %s48
      %s68 = sphi 0, %s68
      %s70 = sphi 0, %s68
      %s71 = sphi 0, %s70
      %s85 = sphi 0, %s71
      %s89 = sphi 0, %s89
      %s91 = sphi 0, %s89
      %s92 = sphi 0, %s91
      %s106 = sphi 0, %s92
      %s110 = sphi 0, %s110
      %s112 = sphi 0, %s110
      %s113 = sphi 0, %s112
      %s127 = sphi 0, %s113
      %s131 = sphi 0, %s131
      %s133 = sphi 0, %s131
      %s134 = sphi 0, %s133
      %s148 = sphi 0, %s134
      %s154 = sphi 0, %s156
      %s157 = sphi 0, %s154
      %s158 = sphi 0, %s157
      %s174 = sphi 0, %s158
      %s180 = sphi 0, %s182
      %s183 = sphi 0, %s180
      %s184 = sphi 0, %s183
      %s200 = sphi 0, %s184
      %s208 = sphi 0, %s210
      %s211 = sphi 0, %s208
      %s212 = sphi 0, %s211
      %s228 = sphi 0, %s212
    $region4: #{tpu_custom_call.1} parent=1 // loop_header_branch
      %25 = sbr.rel (%p23) target = $region8
    $region5: #{tpu_custom_call.1} parent=1 // loop_body
      %s27 = ssub.s32 %s22, 1
      %s28 = ssub.s32 %s22, 2
      %s35 = sadd.s32 1, %s30
      %p36 = scmp.ge.s32.totalorder %s35, 1
      %s37 = scalar_select %p36, 0, %s35
      %s38 = sadd.s32 1, %s29
      %s39 = scalar_select %p36, %s38, %s29
      %p40 = scmp.ge.s32.totalorder %s39, 2
      %s41 = scalar_select %p40, 0, %s39
      %s42 = ssub.s32 %s30, %s37
      %p43 = scmp.eq.s32.totalorder %s42, 0
      %s45 = sadd.s32 %s44, 1
      %s46 = scalar_select %p43, %s44, %s45
      %p49 = pneg %p43
      %p50 = scmp.eq.s32.totalorder %s22, 1
      %p51 = por %p49, %p50
      %p52 = scmp.ne.s32.totalorder %s44, %s47
      %p53 = scmp.eq.s32.totalorder %s22, 0
      %p54 = por %p52, %p53
      %p55 = scmp.ne.s32.totalorder %s44, %s47
      %p56 = scmp.eq.s32.totalorder %s27, 1
      %p57 = por %p55, %p56
      %p58 = scmp.ne.s32.totalorder %s47, %s48
      %p59 = scmp.eq.s32.totalorder %s27, 0
      %p60 = por %p58, %p59
      %p61 = scmp.ne.s32.totalorder %s47, %s48
      %p62 = scmp.eq.s32.totalorder %s28, 1
      %p63 = por %p61, %p62
      %p65 = scmp.ne.s32.totalorder %s48, %s64
      %p66 = scmp.eq.s32.totalorder %s28, 0
      %p67 = por %p65, %p66
      %s69 = sadd.s32 %s68, 1
      %p72 = scmp.eq.s32.totalorder %s22, 1
      %p73 = scmp.ne.s32.totalorder %s68, %s70
      %p74 = scmp.eq.s32.totalorder %s22, 0
      %p75 = por %p73, %p74
      %p76 = scmp.ne.s32.totalorder %s68, %s70
      %p77 = scmp.eq.s32.totalorder %s27, 1
      %p78 = por %p76, %p77
      %p79 = scmp.ne.s32.totalorder %s70, %s71
      %p80 = scmp.eq.s32.totalorder %s27, 0
      %p81 = por %p79, %p80
      %p82 = scmp.ne.s32.totalorder %s70, %s71
      %p83 = scmp.eq.s32.totalorder %s28, 1
      %p84 = por %p82, %p83
      %p86 = scmp.ne.s32.totalorder %s71, %s85
      %p87 = scmp.eq.s32.totalorder %s28, 0
      %p88 = por %p86, %p87
      %s90 = sadd.s32 %s89, 1
      %p93 = scmp.eq.s32.totalorder %s22, 1
      %p94 = scmp.ne.s32.totalorder %s89, %s91
      %p95 = scmp.eq.s32.totalorder %s22, 0
      %p96 = por %p94, %p95
      %p97 = scmp.ne.s32.totalorder %s89, %s91
      %p98 = scmp.eq.s32.totalorder %s27, 1
      %p99 = por %p97, %p98
      %p100 = scmp.ne.s32.totalorder %s91, %s92
      %p101 = scmp.eq.s32.totalorder %s27, 0
      %p102 = por %p100, %p101
      %p103 = scmp.ne.s32.totalorder %s91, %s92
      %p104 = scmp.eq.s32.totalorder %s28, 1
      %p105 = por %p103, %p104
      %p107 = scmp.ne.s32.totalorder %s92, %s106
      %p108 = scmp.eq.s32.totalorder %s28, 0
      %p109 = por %p107, %p108
      %s111 = sadd.s32 %s110, 1
      %p114 = scmp.eq.s32.totalorder %s22, 1
      %p115 = scmp.ne.s32.totalorder %s110, %s112
      %p116 = scmp.eq.s32.totalorder %s22, 0
      %p117 = por %p115, %p116
      %p118 = scmp.ne.s32.totalorder %s110, %s112
      %p119 = scmp.eq.s32.totalorder %s27, 1
      %p120 = por %p118, %p119
      %p121 = scmp.ne.s32.totalorder %s112, %s113
      %p122 = scmp.eq.s32.totalorder %s27, 0
      %p123 = por %p121, %p122
      %p124 = scmp.ne.s32.totalorder %s112, %s113
      %p125 = scmp.eq.s32.totalorder %s28, 1
      %p126 = por %p124, %p125
      %p128 = scmp.ne.s32.totalorder %s113, %s127
      %p129 = scmp.eq.s32.totalorder %s28, 0
      %p130 = por %p128, %p129
      %s132 = sadd.s32 %s131, 1
      %p135 = scmp.eq.s32.totalorder %s22, 1
      %p136 = scmp.ne.s32.totalorder %s131, %s133
      %p137 = scmp.eq.s32.totalorder %s22, 0
      %p138 = por %p136, %p137
      %p139 = scmp.ne.s32.totalorder %s131, %s133
      %p140 = scmp.eq.s32.totalorder %s27, 1
      %p141 = por %p139, %p140
      %p142 = scmp.ne.s32.totalorder %s133, %s134
      %p143 = scmp.eq.s32.totalorder %s27, 0
      %p144 = por %p142, %p143
      %p145 = scmp.ne.s32.totalorder %s133, %s134
      %p146 = scmp.eq.s32.totalorder %s28, 1
      %p147 = por %p145, %p146
      %p149 = scmp.ne.s32.totalorder %s134, %s148
      %p150 = scmp.eq.s32.totalorder %s28, 0
      %p151 = por %p149, %p150
      %s152 = ssub.s32 %s29, %s41
      %p153 = scmp.eq.s32.totalorder %s152, 0
      %s155 = sadd.s32 %s154, 1
      %s156 = scalar_select %p153, %s154, %s155
      %p159 = pneg %p153
      %p160 = scmp.eq.s32.totalorder %s22, 1
      %p161 = por %p159, %p160
      %p162 = scmp.ne.s32.totalorder %s154, %s157
      %p163 = scmp.eq.s32.totalorder %s22, 0
      %p164 = por %p162, %p163
      %p165 = scmp.ne.s32.totalorder %s154, %s157
      %p166 = scmp.eq.s32.totalorder %s27, 1
      %p167 = por %p165, %p166
      %p168 = scmp.ne.s32.totalorder %s157, %s158
      %p169 = scmp.eq.s32.totalorder %s27, 0
      %p170 = por %p168, %p169
      %p171 = scmp.ne.s32.totalorder %s157, %s158
      %p172 = scmp.eq.s32.totalorder %s28, 1
      %p173 = por %p171, %p172
      %p175 = scmp.ne.s32.totalorder %s158, %s174
      %p176 = scmp.eq.s32.totalorder %s28, 0
      %p177 = por %p175, %p176
      %s178 = ssub.s32 %s29, %s41
      %p179 = scmp.eq.s32.totalorder %s178, 0
      %s181 = sadd.s32 %s180, 1
      %s182 = scalar_select %p179, %s180, %s181
      %p185 = pneg %p179
      %p186 = scmp.eq.s32.totalorder %s22, 1
      %p187 = por %p185, %p186
      %p188 = scmp.ne.s32.totalorder %s180, %s183
      %p189 = scmp.eq.s32.totalorder %s22, 0
      %p190 = por %p188, %p189
      %p191 = scmp.ne.s32.totalorder %s180, %s183
      %p192 = scmp.eq.s32.totalorder %s27, 1
      %p193 = por %p191, %p192
      %p194 = scmp.ne.s32.totalorder %s183, %s184
      %p195 = scmp.eq.s32.totalorder %s27, 0
      %p196 = por %p194, %p195
      %p197 = scmp.ne.s32.totalorder %s183, %s184
      %p198 = scmp.eq.s32.totalorder %s28, 1
      %p199 = por %p197, %p198
      %p201 = scmp.ne.s32.totalorder %s184, %s200
      %p202 = scmp.eq.s32.totalorder %s28, 0
      %p203 = por %p201, %p202
      %s204 = ssub.s32 %s30, %s37
      %s205 = ssub.s32 %s29, %s41
      %s206 = sor.u32 %s204, %s205
      %p207 = scmp.eq.s32.totalorder %s206, 0
      %s209 = sadd.s32 %s208, 1
      %s210 = scalar_select %p207, %s208, %s209
      %p213 = pneg %p207
      %p214 = scmp.eq.s32.totalorder %s22, 1
      %p215 = por %p213, %p214
      %p216 = scmp.ne.s32.totalorder %s208, %s211
      %p217 = scmp.eq.s32.totalorder %s22, 0
      %p218 = por %p216, %p217
      %p219 = scmp.ne.s32.totalorder %s208, %s211
      %p220 = scmp.eq.s32.totalorder %s27, 1
      %p221 = por %p219, %p220
      %p222 = scmp.ne.s32.totalorder %s211, %s212
      %p223 = scmp.eq.s32.totalorder %s27, 0
      %p224 = por %p222, %p223
      %p225 = scmp.ne.s32.totalorder %s211, %s212
      %p226 = scmp.eq.s32.totalorder %s28, 1
      %p227 = por %p225, %p226
      %p229 = scmp.ne.s32.totalorder %s212, %s228
      %p230 = scmp.eq.s32.totalorder %s28, 0
      %p231 = por %p229, %p230
      %p232 = scmp.le.s32.totalorder 1, %s22
      %p233 = scmp.lt.s32.totalorder %s22, 3
      %p234 = pnand %p232, %p233
      %p235 = pneg %p234
      // Predicated region
      $region9: #{tpu_custom_call.1} parent=5 // pred_check
        _
      $region10: #{tpu_custom_call.1} parent=5 // pred_check_branch
        %237 = sbr.rel (%p234) target = $region12
      $region11: #{tpu_custom_call.1} parent=5 // pred_region
        %s238 = ssub.s32 %s22, 1
        // Predicated region
        $region13: #{tpu_custom_call.1} parent=11 // pred_check
          %p239 = pneg %p60
        $region14: #{tpu_custom_call.1} parent=11 // pred_check_branch
          %241 = sbr.rel (%p239) target = $region16
        $region15: #{tpu_custom_call.1} parent=11 // pred_region
          %s243 = ssub.s32 128, 128
          %244 = vsyncadd [#allocation3], %s243
          %s245 = smul.addr %s32, 128
          %s246 = scalar_lea.hbm %s0, %s245
          %s248 = sshll.u32 [#allocation2], 4
          %s249 = int_to_ptr.vmem [resolvable:$true] %s248
          %251 = dma.hbm_to_vmem [thread:$0]  %s246, 128, %s249, [#allocation3]
        $region16: #{tpu_custom_call.1} parent=11 // pred_fallthru
          _
        // Predicated region
        $region17: #{tpu_custom_call.1} parent=11 // pred_check
          %p252 = pneg %p81
        $region18: #{tpu_custom_call.1} parent=11 // pred_check_branch
          %254 = sbr.rel (%p252) target = $region20
        $region19: #{tpu_custom_call.1} parent=11 // pred_region
          %s256 = ssub.s32 2048, 2048
          %257 = vsyncadd [#allocation6], %s256
          %s258 = sshll.u32 [#allocation5], 4
          %s259 = int_to_ptr.vmem [resolvable:$true] %s258
          %264 = dma.hbm_to_vmem [thread:$0]  %s1, 2048, %s259, [#allocation6], 128, 128, 8
        $region20: #{tpu_custom_call.1} parent=11 // pred_fallthru
          _
        // Predicated region
        $region21: #{tpu_custom_call.1} parent=11 // pred_check
          %p265 = pneg %p102
        $region22: #{tpu_custom_call.1} parent=11 // pred_check_branch
          %267 = sbr.rel (%p265) target = $region24
        $region23: #{tpu_custom_call.1} parent=11 // pred_region
          %s269 = ssub.s32 32, 32
          %270 = vsyncadd [#allocation6], %s269
          %s272 = sshll.u32 [#allocation7], 4
          %s273 = int_to_ptr.vmem [resolvable:$true] %s272
          %275 = dma.hbm_to_vmem [thread:$0]  %s2, 32, %s273, [#allocation6]
        $region24: #{tpu_custom_call.1} parent=11 // pred_fallthru
          _
        // Predicated region
        $region25: #{tpu_custom_call.1} parent=11 // pred_check
          %p276 = pneg %p123
        $region26: #{tpu_custom_call.1} parent=11 // pred_check_branch
          %278 = sbr.rel (%p276) target = $region28
        $region27: #{tpu_custom_call.1} parent=11 // pred_region
          %s280 = ssub.s32 4096, 4096
          %281 = vsyncadd [#allocation9], %s280
          %s282 = sshll.u32 [#allocation8], 4
          %s283 = int_to_ptr.vmem [resolvable:$true] %s282
          %288 = dma.hbm_to_vmem [thread:$0]  %s3, 4096, %s283, [#allocation9], 128, 128, 8
        $region28: #{tpu_custom_call.1} parent=11 // pred_fallthru
          _
        // Predicated region
        $region29: #{tpu_custom_call.1} parent=11 // pred_check
          %p289 = pneg %p144
        $region30: #{tpu_custom_call.1} parent=11 // pred_check_branch
          %291 = sbr.rel (%p289) target = $region32
        $region31: #{tpu_custom_call.1} parent=11 // pred_region
          %s293 = ssub.s32 32, 32
          %294 = vsyncadd [#allocation9], %s293
          %s296 = sshll.u32 [#allocation10], 4
          %s297 = int_to_ptr.vmem [resolvable:$true] %s296
          %299 = dma.hbm_to_vmem [thread:$0]  %s4, 32, %s297, [#allocation9]
        $region32: #{tpu_custom_call.1} parent=11 // pred_fallthru
          _
      $region12: #{tpu_custom_call.1} parent=5 // pred_fallthru
        _
      %p300 = scmp.lt.s32.totalorder %s22, 2
      // Predicated region
      $region33: #{tpu_custom_call.1} parent=5 // pred_check
        %p301 = pneg %p300
      $region34: #{tpu_custom_call.1} parent=5 // pred_check_branch
        %303 = sbr.rel (%p301) target = $region36
      $region35: #{tpu_custom_call.1} parent=5 // pred_region
        // Predicated region
        $region37: #{tpu_custom_call.1} parent=35 // pred_check
          %p304 = pneg %p164
        $region38: #{tpu_custom_call.1} parent=35 // pred_check_branch
          %306 = sbr.rel (%p304) target = $region40
        $region39: #{tpu_custom_call.1} parent=35 // pred_region
          %s307 = sand.u32 %s22, 1
          %s308 = scalar_lea.sflag [#allocation12], %s307
          %s309 = sand.u32 %s154, 1
          %s310 = smul.addr %s309, 3072
          %s311 = scalar_lea.vmem [#allocation11], %s310
          %s312 = smul.u32 24, %s29
          %s314 = ssub.s32 49152, 49152
          %315 = vsyncadd %s308, %s314
          %s316 = smul.addr %s312, 64
          %s317 = scalar_lea.hbm %s5, %s316
          %s318 = sshll.u32 %s311, 4
          %s319 = int_to_ptr.vmem [resolvable:$true] %s318
          %324 = dma.hbm_to_vmem [thread:$0]  %s317, 49152, %s319, %s308, 3072, 1536, 96
        $region40: #{tpu_custom_call.1} parent=35 // pred_fallthru
          _
        // Predicated region
        $region41: #{tpu_custom_call.1} parent=35 // pred_check
          %p325 = pneg %p190
        $region42: #{tpu_custom_call.1} parent=35 // pred_check_branch
          %327 = sbr.rel (%p325) target = $region44
        $region43: #{tpu_custom_call.1} parent=35 // pred_region
          %s328 = sand.u32 %s22, 1
          %s329 = scalar_lea.sflag [#allocation12], %s328
          %s330 = sand.u32 %s180, 1
          %s331 = smul.addr %s330, 24
          %s332 = scalar_lea.vmem [#allocation13], %s331
          %s333 = smul.u32 24, %s29
          %s335 = ssub.s32 384, 384
          %336 = vsyncadd %s329, %s335
          %s337 = smul.addr %s333, 16
          %s338 = scalar_lea.hbm %s6, %s337
          %s340 = sshll.u32 %s332, 4
          %s341 = int_to_ptr.vmem [resolvable:$true] %s340
          %343 = dma.hbm_to_vmem [thread:$0]  %s338, 384, %s341, %s329
        $region44: #{tpu_custom_call.1} parent=35 // pred_fallthru
          _
      $region36: #{tpu_custom_call.1} parent=5 // pred_fallthru
        _
      %p344 = scmp.le.s32.totalorder 1, %s22
      %p345 = scmp.lt.s32.totalorder %s22, 3
      %p346 = pnand %p344, %p345
      %p347 = pneg %p346
      // Predicated region
      $region45: #{tpu_custom_call.1} parent=5 // pred_check
        _
      $region46: #{tpu_custom_call.1} parent=5 // pred_check_branch
        %349 = sbr.rel (%p346) target = $region48
      $region47: #{tpu_custom_call.1} parent=5 // pred_region
        %s350 = ssub.s32 %s22, 1
        // Predicated region
        $region49: #{tpu_custom_call.1} parent=47 // pred_check
          %p351 = pneg %p60
        $region50: #{tpu_custom_call.1} parent=47 // pred_check_branch
          %353 = sbr.rel (%p351) target = $region52
        $region51: #{tpu_custom_call.1} parent=47 // pred_region
          %354 = dma.done [#allocation3], 128
        $region52: #{tpu_custom_call.1} parent=47 // pred_fallthru
          _
        // Predicated region
        $region53: #{tpu_custom_call.1} parent=47 // pred_check
          %p355 = pneg %p81
        $region54: #{tpu_custom_call.1} parent=47 // pred_check_branch
          %357 = sbr.rel (%p355) target = $region56
        $region55: #{tpu_custom_call.1} parent=47 // pred_region
          %358 = dma.done [#allocation6], 2048
        $region56: #{tpu_custom_call.1} parent=47 // pred_fallthru
          _
        // Predicated region
        $region57: #{tpu_custom_call.1} parent=47 // pred_check
          %p359 = pneg %p102
        $region58: #{tpu_custom_call.1} parent=47 // pred_check_branch
          %361 = sbr.rel (%p359) target = $region60
        $region59: #{tpu_custom_call.1} parent=47 // pred_region
          %362 = dma.done [#allocation6], 32
        $region60: #{tpu_custom_call.1} parent=47 // pred_fallthru
          _
        // Predicated region
        $region61: #{tpu_custom_call.1} parent=47 // pred_check
          %p363 = pneg %p123
        $region62: #{tpu_custom_call.1} parent=47 // pred_check_branch
          %365 = sbr.rel (%p363) target = $region64
        $region63: #{tpu_custom_call.1} parent=47 // pred_region
          %366 = dma.done [#allocation9], 4096
        $region64: #{tpu_custom_call.1} parent=47 // pred_fallthru
          _
        // Predicated region
        $region65: #{tpu_custom_call.1} parent=47 // pred_check
          %p367 = pneg %p144
        $region66: #{tpu_custom_call.1} parent=47 // pred_check_branch
          %369 = sbr.rel (%p367) target = $region68
        $region67: #{tpu_custom_call.1} parent=47 // pred_region
          %370 = dma.done [#allocation9], 32
        $region68: #{tpu_custom_call.1} parent=47 // pred_fallthru
          _
        %s371 = sand.u32 %s27, 1
        %s372 = scalar_lea.sflag [#allocation12], %s371
        %s373 = sand.u32 %s157, 1
        %s374 = smul.addr %s373, 3072
        %s375 = scalar_lea.vmem [#allocation11], %s374
        // Predicated region
        $region69: #{tpu_custom_call.1} parent=47 // pred_check
          %p376 = pneg %p170
        $region70: #{tpu_custom_call.1} parent=47 // pred_check_branch
          %378 = sbr.rel (%p376) target = $region72
        $region71: #{tpu_custom_call.1} parent=47 // pred_region
          %379 = dma.done %s372, 49152
        $region72: #{tpu_custom_call.1} parent=47 // pred_fallthru
          _
        %s380 = sand.u32 %s27, 1
        %s381 = scalar_lea.sflag [#allocation12], %s380
        %s382 = sand.u32 %s183, 1
        %s383 = smul.addr %s382, 24
        %s384 = scalar_lea.vmem [#allocation13], %s383
        // Predicated region
        $region73: #{tpu_custom_call.1} parent=47 // pred_check
          %p385 = pneg %p196
        $region74: #{tpu_custom_call.1} parent=47 // pred_check_branch
          %387 = sbr.rel (%p385) target = $region76
        $region75: #{tpu_custom_call.1} parent=47 // pred_region
          %388 = dma.done %s381, 384
        $region76: #{tpu_custom_call.1} parent=47 // pred_fallthru
          _
        %p389 = pneg %p60
        %p390 = pneg %p57
        %p391 = pneg %p81
        %p392 = pneg %p78
        %p393 = pneg %p102
        %p394 = pneg %p99
        %p395 = pneg %p123
        %p396 = pneg %p120
        %p397 = pneg %p144
        %p398 = pneg %p141
        %s399 = sand.u32 %s27, 1
        %s400 = scalar_lea.sflag [#allocation12], %s399
        %s401 = sand.u32 %s157, 1
        %s402 = smul.addr %s401, 3072
        %s403 = scalar_lea.vmem [#allocation11], %s402
        %p404 = pneg %p170
        %p405 = pneg %p167
        %s406 = sand.u32 %s27, 1
        %s407 = scalar_lea.sflag [#allocation12], %s406
        %s408 = sand.u32 %s183, 1
        %s409 = smul.addr %s408, 24
        %s410 = scalar_lea.vmem [#allocation13], %s409
        %p411 = pneg %p196
        %p412 = pneg %p193
        %p413 = pneg %p224
        %p414 = pneg %p221
        %s415 = sand.u32 %s211, 1
        %s416 = scalar_lea.sflag [#allocation4], %s415
        %s417 = sand.u32 %s211, 1
        %s418 = smul.addr %s417, 192
        %s419 = scalar_lea.vmem [#allocation14], %s418
        %s420 = smul.u32 24, %s31
        %s421 = smul.u32 24, %s31
        %s422 = smul.u32 24, %s31
        %v424 = vld [vmem:[#allocation2] sm:$0xff]
        %v425 = vpack.c.bf16 %v424, %v424
        %v426 = vld [vmem:[#allocation5] sm:$0xff]
        %v427 = vld [vmem:[#allocation5 + $0x8] sm:$0xff]
        %v428 = vld [vmem:[#allocation5 + $0x10] sm:$0xff]
        %v429 = vld [vmem:[#allocation5 + $0x18] sm:$0xff]
        %v430 = vld [vmem:[#allocation5 + $0x20] sm:$0xff]
        %v431 = vld [vmem:[#allocation5 + $0x28] sm:$0xff]
        %v432 = vld [vmem:[#allocation5 + $0x30] sm:$0xff]
        %v433 = vld [vmem:[#allocation5 + $0x38] sm:$0xff]
        %v434 = vld [vmem:[#allocation5 + $0x40] sm:$0xff]
        %v435 = vld [vmem:[#allocation5 + $0x48] sm:$0xff]
        %v436 = vld [vmem:[#allocation5 + $0x50] sm:$0xff]
        %v437 = vld [vmem:[#allocation5 + $0x58] sm:$0xff]
        %v438 = vld [vmem:[#allocation5 + $0x60] sm:$0xff]
        %v439 = vld [vmem:[#allocation5 + $0x68] sm:$0xff]
        %v440 = vld [vmem:[#allocation5 + $0x70] sm:$0xff]
        %v441 = vld [vmem:[#allocation5 + $0x78] sm:$0xff]
        %v442 = vld [vmem:[#allocation7] sm:$0x3]
        %v444 = vlaneseq
        %v445 = vshrl.u32 %v444, 7
        %v446 = vsub.s32 0, %v445
        %v447 = vrot.slane %v442, %v446
        %v448 = vlaneseq
        %v449 = vshrl.u32 %v448, 7
        %v450 = vsub.s32 1, %v449
        %v451 = vrot.slane %v442, %v450
        %v470 = vunpack.c.l.b16 %v426
        %v471 = vunpack.c.h.b16 %v426
        %v472 = vunpack.c.l.b16 %v427
        %v473 = vunpack.c.h.b16 %v427
        %v474 = vunpack.c.l.b16 %v428
        %v475 = vunpack.c.h.b16 %v428
        %v476 = vunpack.c.l.b16 %v429
        %v477 = vunpack.c.h.b16 %v429
        %v478 = vunpack.c.l.b16 %v430
        %v479 = vunpack.c.h.b16 %v430
        %v480 = vunpack.c.l.b16 %v431
        %v481 = vunpack.c.h.b16 %v431
        %v482 = vunpack.c.l.b16 %v432
        %v483 = vunpack.c.h.b16 %v432
        %v484 = vunpack.c.l.b16 %v433
        %v485 = vunpack.c.h.b16 %v433
        %v486 = vunpack.c.l.b16 %v434
        %v487 = vunpack.c.h.b16 %v434
        %v488 = vunpack.c.l.b16 %v435
        %v489 = vunpack.c.h.b16 %v435
        %v490 = vunpack.c.l.b16 %v436
        %v491 = vunpack.c.h.b16 %v436
        %v492 = vunpack.c.l.b16 %v437
        %v493 = vunpack.c.h.b16 %v437
        %v494 = vunpack.c.l.b16 %v438
        %v495 = vunpack.c.h.b16 %v438
        %v496 = vunpack.c.l.b16 %v439
        %v497 = vunpack.c.h.b16 %v439
        %v498 = vunpack.c.l.b16 %v440
        %v499 = vunpack.c.h.b16 %v440
        %v500 = vunpack.c.l.b16 %v441
        %v501 = vunpack.c.h.b16 %v441
        %v502 = vpack.c.b16 %v472, %v470
        %v503 = vpack.c.b16 %v473, %v471
        %v504 = vpack.c.b16 %v476, %v474
        %v505 = vpack.c.b16 %v477, %v475
        %v506 = vpack.c.b16 %v480, %v478
        %v507 = vpack.c.b16 %v481, %v479
        %v508 = vpack.c.b16 %v484, %v482
        %v509 = vpack.c.b16 %v485, %v483
        %v510 = vpack.c.b16 %v488, %v486
        %v511 = vpack.c.b16 %v489, %v487
        %v512 = vpack.c.b16 %v492, %v490
        %v513 = vpack.c.b16 %v493, %v491
        %v514 = vpack.c.b16 %v496, %v494
        %v515 = vpack.c.b16 %v497, %v495
        %v516 = vpack.c.b16 %v500, %v498
        %v517 = vpack.c.b16 %v501, %v499
        %534 = vmatprep.subr.bf16.mxu0 %v517
        %535 = vmatpush1.bf16.msra.mxu0 %v516
        %536 = vmatprep.subr.bf16.mxu0 %v515
        %537 = vmatpush1.bf16.msra.mxu0 %v514
        %538 = vmatprep.subr.bf16.mxu0 %v513
        %539 = vmatpush1.bf16.msra.mxu0 %v512
        %540 = vmatprep.subr.bf16.mxu0 %v511
        %541 = vmatpush1.bf16.msra.mxu0 %v510
        %542 = vmatprep.subr.bf16.mxu0 %v509
        %543 = vmatpush1.bf16.msra.mxu0 %v508
        %544 = vmatprep.subr.bf16.mxu0 %v507
        %545 = vmatpush1.bf16.msra.mxu0 %v506
        %546 = vmatprep.subr.bf16.mxu0 %v505
        %547 = vmatpush1.bf16.msra.mxu0 %v504
        %548 = vmatprep.subr.bf16.mxu0 %v503
        %549 = vmatpush1.bf16.msra.mxu0 %v502
        %550 = vmatprep.subr.bf16.mxu0 0
        %551 = vmatpush2.bf16.msra.mxu0 0
        %552 = vmatprep.subr.bf16.mxu0 0
        %553 = vmatpush2.bf16.msra.mxu0 0
        %554 = vmatprep.subr.bf16.mxu0 0
        %555 = vmatpush2.bf16.msra.mxu0 0
        %556 = vmatprep.subr.bf16.mxu0 0
        %557 = vmatpush2.bf16.msra.mxu0 0
        %558 = vmatprep.subr.bf16.mxu0 0
        %559 = vmatpush2.bf16.msra.mxu0 0
        %560 = vmatprep.subr.bf16.mxu0 0
        %561 = vmatpush2.bf16.msra.mxu0 0
        %562 = vmatprep.subr.bf16.mxu0 0
        %563 = vmatpush2.bf16.msra.mxu0 0
        %564 = vmatprep.subr.bf16.mxu0 0
        %565 = vmatpush2.bf16.msra.mxu0 0
        %566 = vmatprep.mubr.bf16.mxu0 0
        %567 = vmatmul.mubr.bf16.gmra.mxu0 %v425
        %v568 = vpop.f32.mrf.mxu0
        %v569 = vadd.f32 %v447, %v568
        %v570 = vpop.f32.mrf.mxu0
        %v571 = vadd.f32 %v451, %v570
        %v572 = vpop.f32.mrf.mxu0
        %v573 = vpop.f32.mrf.mxu0
        %574 = vdwg.mxu0
        %v575 = vmax.f32 %v569, 0.0
        %v576 = vmax.f32 %v571, 0.0
        %v577 = vpack.c.bf16 %v575, %v575
        %v578 = vpack.c.bf16 %v576, %v576
        %v579 = vld [vmem:[#allocation8] sm:$0xff]
        %v580 = vld [vmem:[#allocation8 + $0x8] sm:$0xff]
        %v581 = vld [vmem:[#allocation8 + $0x10] sm:$0xff]
        %v582 = vld [vmem:[#allocation8 + $0x18] sm:$0xff]
        %v583 = vld [vmem:[#allocation8 + $0x20] sm:$0xff]
        %v584 = vld [vmem:[#allocation8 + $0x28] sm:$0xff]
        %v585 = vld [vmem:[#allocation8 + $0x30] sm:$0xff]
        %v586 = vld [vmem:[#allocation8 + $0x38] sm:$0xff]
        %v587 = vld [vmem:[#allocation8 + $0x40] sm:$0xff]
        %v588 = vld [vmem:[#allocation8 + $0x48] sm:$0xff]
        %v589 = vld [vmem:[#allocation8 + $0x50] sm:$0xff]
        %v590 = vld [vmem:[#allocation8 + $0x58] sm:$0xff]
        %v591 = vld [vmem:[#allocation8 + $0x60] sm:$0xff]
        %v592 = vld [vmem:[#allocation8 + $0x68] sm:$0xff]
        %v593 = vld [vmem:[#allocation8 + $0x70] sm:$0xff]
        %v594 = vld [vmem:[#allocation8 + $0x78] sm:$0xff]
        %v595 = vld [vmem:[#allocation8 + $0x80] sm:$0xff]
        %v596 = vld [vmem:[#allocation8 + $0x88] sm:$0xff]
        %v597 = vld [vmem:[#allocation8 + $0x90] sm:$0xff]
        %v598 = vld [vmem:[#allocation8 + $0x98] sm:$0xff]
        %v599 = vld [vmem:[#allocation8 + $0xa0] sm:$0xff]
        %v600 = vld [vmem:[#allocation8 + $0xa8] sm:$0xff]
        %v601 = vld [vmem:[#allocation8 + $0xb0] sm:$0xff]
        %v602 = vld [vmem:[#allocation8 + $0xb8] sm:$0xff]
        %v603 = vld [vmem:[#allocation8 + $0xc0] sm:$0xff]
        %v604 = vld [vmem:[#allocation8 + $0xc8] sm:$0xff]
        %v605 = vld [vmem:[#allocation8 + $0xd0] sm:$0xff]
        %v606 = vld [vmem:[#allocation8 + $0xd8] sm:$0xff]
        %v607 = vld [vmem:[#allocation8 + $0xe0] sm:$0xff]
        %v608 = vld [vmem:[#allocation8 + $0xe8] sm:$0xff]
        %v609 = vld [vmem:[#allocation8 + $0xf0] sm:$0xff]
        %v610 = vld [vmem:[#allocation8 + $0xf8] sm:$0xff]
        %v611 = vld [vmem:[#allocation10] sm:$0x3]
        %v613 = vlaneseq
        %v614 = vshrl.u32 %v613, 7
        %v615 = vsub.s32 0, %v614
        %v616 = vrot.slane %v611, %v615
        %v617 = vlaneseq
        %v618 = vshrl.u32 %v617, 7
        %v619 = vsub.s32 1, %v618
        %v620 = vrot.slane %v611, %v619
        %v655 = vunpack.c.l.b16 %v579
        %v656 = vunpack.c.h.b16 %v579
        %v657 = vunpack.c.l.b16 %v580
        %v658 = vunpack.c.h.b16 %v580
        %v659 = vunpack.c.l.b16 %v581
        %v660 = vunpack.c.h.b16 %v581
        %v661 = vunpack.c.l.b16 %v582
        %v662 = vunpack.c.h.b16 %v582
        %v663 = vunpack.c.l.b16 %v583
        %v664 = vunpack.c.h.b16 %v583
        %v665 = vunpack.c.l.b16 %v584
        %v666 = vunpack.c.h.b16 %v584
        %v667 = vunpack.c.l.b16 %v585
        %v668 = vunpack.c.h.b16 %v585
        %v669 = vunpack.c.l.b16 %v586
        %v670 = vunpack.c.h.b16 %v586
        %v671 = vunpack.c.l.b16 %v587
        %v672 = vunpack.c.h.b16 %v587
        %v673 = vunpack.c.l.b16 %v588
        %v674 = vunpack.c.h.b16 %v588
        %v675 = vunpack.c.l.b16 %v589
        %v676 = vunpack.c.h.b16 %v589
        %v677 = vunpack.c.l.b16 %v590
        %v678 = vunpack.c.h.b16 %v590
        %v679 = vunpack.c.l.b16 %v591
        %v680 = vunpack.c.h.b16 %v591
        %v681 = vunpack.c.l.b16 %v592
        %v682 = vunpack.c.h.b16 %v592
        %v683 = vunpack.c.l.b16 %v593
        %v684 = vunpack.c.h.b16 %v593
        %v685 = vunpack.c.l.b16 %v594
        %v686 = vunpack.c.h.b16 %v594
        %v687 = vunpack.c.l.b16 %v595
        %v688 = vunpack.c.h.b16 %v595
        %v689 = vunpack.c.l.b16 %v596
        %v690 = vunpack.c.h.b16 %v596
        %v691 = vunpack.c.l.b16 %v597
        %v692 = vunpack.c.h.b16 %v597
        %v693 = vunpack.c.l.b16 %v598
        %v694 = vunpack.c.h.b16 %v598
        %v695 = vunpack.c.l.b16 %v599
        %v696 = vunpack.c.h.b16 %v599
        %v697 = vunpack.c.l.b16 %v600
        %v698 = vunpack.c.h.b16 %v600
        %v699 = vunpack.c.l.b16 %v601
        %v700 = vunpack.c.h.b16 %v601
        %v701 = vunpack.c.l.b16 %v602
        %v702 = vunpack.c.h.b16 %v602
        %v703 = vunpack.c.l.b16 %v603
        %v704 = vunpack.c.h.b16 %v603
        %v705 = vunpack.c.l.b16 %v604
        %v706 = vunpack.c.h.b16 %v604
        %v707 = vunpack.c.l.b16 %v605
        %v708 = vunpack.c.h.b16 %v605
        %v709 = vunpack.c.l.b16 %v606
        %v710 = vunpack.c.h.b16 %v606
        %v711 = vunpack.c.l.b16 %v607
        %v712 = vunpack.c.h.b16 %v607
        %v713 = vunpack.c.l.b16 %v608
        %v714 = vunpack.c.h.b16 %v608
        %v715 = vunpack.c.l.b16 %v609
        %v716 = vunpack.c.h.b16 %v609
        %v717 = vunpack.c.l.b16 %v610
        %v718 = vunpack.c.h.b16 %v610
        %v719 = vpack.c.b16 %v657, %v655
        %v720 = vpack.c.b16 %v658, %v656
        %v721 = vpack.c.b16 %v661, %v659
        %v722 = vpack.c.b16 %v662, %v660
        %v723 = vpack.c.b16 %v665, %v663
        %v724 = vpack.c.b16 %v666, %v664
        %v725 = vpack.c.b16 %v669, %v667
        %v726 = vpack.c.b16 %v670, %v668
        %v727 = vpack.c.b16 %v673, %v671
        %v728 = vpack.c.b16 %v674, %v672
        %v729 = vpack.c.b16 %v677, %v675
        %v730 = vpack.c.b16 %v678, %v676
        %v731 = vpack.c.b16 %v681, %v679
        %v732 = vpack.c.b16 %v682, %v680
        %v733 = vpack.c.b16 %v685, %v683
        %v734 = vpack.c.b16 %v686, %v684
        %v735 = vpack.c.b16 %v689, %v687
        %v736 = vpack.c.b16 %v690, %v688
        %v737 = vpack.c.b16 %v693, %v691
        %v738 = vpack.c.b16 %v694, %v692
        %v739 = vpack.c.b16 %v697, %v695
        %v740 = vpack.c.b16 %v698, %v696
        %v741 = vpack.c.b16 %v701, %v699
        %v742 = vpack.c.b16 %v702, %v700
        %v743 = vpack.c.b16 %v705, %v703
        %v744 = vpack.c.b16 %v706, %v704
        %v745 = vpack.c.b16 %v709, %v707
        %v746 = vpack.c.b16 %v710, %v708
        %v747 = vpack.c.b16 %v713, %v711
        %v748 = vpack.c.b16 %v714, %v712
        %v749 = vpack.c.b16 %v717, %v715
        %v750 = vpack.c.b16 %v718, %v716
        %783 = vmatprep.subr.bf16.mxu0 %v734
        %784 = vmatpush1.bf16.msra.mxu0 %v733
        %785 = vmatprep.subr.bf16.mxu0 %v732
        %786 = vmatpush1.bf16.msra.mxu0 %v731
        %787 = vmatprep.subr.bf16.mxu0 %v730
        %788 = vmatpush1.bf16.msra.mxu0 %v729
        %789 = vmatprep.subr.bf16.mxu0 %v728
        %790 = vmatpush1.bf16.msra.mxu0 %v727
        %791 = vmatprep.subr.bf16.mxu0 %v726
        %792 = vmatpush1.bf16.msra.mxu0 %v725
        %793 = vmatprep.subr.bf16.mxu0 %v724
        %794 = vmatpush1.bf16.msra.mxu0 %v723
        %795 = vmatprep.subr.bf16.mxu0 %v722
        %796 = vmatpush1.bf16.msra.mxu0 %v721
        %797 = vmatprep.subr.bf16.mxu0 %v720
        %798 = vmatpush1.bf16.msra.mxu0 %v719
        %799 = vmatprep.subr.bf16.mxu0 %v750
        %800 = vmatpush2.bf16.msra.mxu0 %v749
        %801 = vmatprep.subr.bf16.mxu0 %v748
        %802 = vmatpush2.bf16.msra.mxu0 %v747
        %803 = vmatprep.subr.bf16.mxu0 %v746
        %804 = vmatpush2.bf16.msra.mxu0 %v745
        %805 = vmatprep.subr.bf16.mxu0 %v744
        %806 = vmatpush2.bf16.msra.mxu0 %v743
        %807 = vmatprep.subr.bf16.mxu0 %v742
        %808 = vmatpush2.bf16.msra.mxu0 %v741
        %809 = vmatprep.subr.bf16.mxu0 %v740
        %810 = vmatpush2.bf16.msra.mxu0 %v739
        %811 = vmatprep.subr.bf16.mxu0 %v738
        %812 = vmatpush2.bf16.msra.mxu0 %v737
        %813 = vmatprep.subr.bf16.mxu0 %v736
        %814 = vmatpush2.bf16.msra.mxu0 %v735
        %815 = vmatprep.mubr.bf16.mxu0 %v578
        %816 = vmatmul.mubr.bf16.gmra.mxu0 %v577
        %v817 = vpop.f32.mrf.mxu0
        %v818 = vadd.f32 %v616, %v817
        %v819 = vpop.f32.mrf.mxu0
        %v820 = vadd.f32 %v620, %v819
        %v821 = vpop.f32.mrf.mxu0
        %v822 = vpop.f32.mrf.mxu0
        %823 = vdwg.mxu0
        %v824 = vmax.f32 %v818, 0.0
        %v825 = vmax.f32 %v820, 0.0
        %v826 = vpack.c.bf16 %v824, %v824
        %v827 = vpack.c.bf16 %v825, %v825
        %v828 = vld [vmem:[%s375] sm:$0xff]
        %v829 = vld [vmem:[%s375 + $0x8] sm:$0xff]
        %v830 = vld [vmem:[%s375 + $0x10] sm:$0xff]
        %v831 = vld [vmem:[%s375 + $0x18] sm:$0xff]
        %v832 = vld [vmem:[%s375 + $0x20] sm:$0xff]
        %v833 = vld [vmem:[%s375 + $0x28] sm:$0xff]
        %v834 = vld [vmem:[%s375 + $0x30] sm:$0xff]
        %v835 = vld [vmem:[%s375 + $0x38] sm:$0xff]
        %v836 = vld [vmem:[%s375 + $0x40] sm:$0xff]
        %v837 = vld [vmem:[%s375 + $0x48] sm:$0xff]
        %v838 = vld [vmem:[%s375 + $0x50] sm:$0xff]
        %v839 = vld [vmem:[%s375 + $0x58] sm:$0xff]
        %v840 = vld [vmem:[%s375 + $0x60] sm:$0xff]
        %v841 = vld [vmem:[%s375 + $0x68] sm:$0xff]
        %v842 = vld [vmem:[%s375 + $0x70] sm:$0xff]
        %v843 = vld [vmem:[%s375 + $0x78] sm:$0xff]
        %v844 = vld [vmem:[%s375 + $0x80] sm:$0xff]
        %v845 = vld [vmem:[%s375 + $0x88] sm:$0xff]
        %v846 = vld [vmem:[%s375 + $0x90] sm:$0xff]
        %v847 = vld [vmem:[%s375 + $0x98] sm:$0xff]
        %v848 = vld [vmem:[%s375 + $0xa0] sm:$0xff]
        %v849 = vld [vmem:[%s375 + $0xa8] sm:$0xff]
        %v850 = vld [vmem:[%s375 + $0xb0] sm:$0xff]
        %v851 = vld [vmem:[%s375 + $0xb8] sm:$0xff]
        %v852 = vld [vmem:[%s375 + $0xc0] sm:$0xff]
        %v853 = vld [vmem:[%s375 + $0xc8] sm:$0xff]
        %v854 = vld [vmem:[%s375 + $0xd0] sm:$0xff]
        %v855 = vld [vmem:[%s375 + $0xd8] sm:$0xff]
        %v856 = vld [vmem:[%s375 + $0xe0] sm:$0xff]
        %v857 = vld [vmem:[%s375 + $0xe8] sm:$0xff]
        %v858 = vld [vmem:[%s375 + $0xf0] sm:$0xff]
        %v859 = vld [vmem:[%s375 + $0xf8] sm:$0xff]
        %v860 = vld [vmem:[%s375 + $0x100] sm:$0xff]
        %v861 = vld [vmem:[%s375 + $0x108] sm:$0xff]
        %v862 = vld [vmem:[%s375 + $0x110] sm:$0xff]
        %v863 = vld [vmem:[%s375 + $0x118] sm:$0xff]
        %v864 = vld [vmem:[%s375 + $0x120] sm:$0xff]
        %v865 = vld [vmem:[%s375 + $0x128] sm:$0xff]
        %v866 = vld [vmem:[%s375 + $0x130] sm:$0xff]
        %v867 = vld [vmem:[%s375 + $0x138] sm:$0xff]
        %v868 = vld [vmem:[%s375 + $0x140] sm:$0xff]
        %v869 = vld [vmem:[%s375 + $0x148] sm:$0xff]
        %v870 = vld [vmem:[%s375 + $0x150] sm:$0xff]
        %v871 = vld [vmem:[%s375 + $0x158] sm:$0xff]
        %v872 = vld [vmem:[%s375 + $0x160] sm:$0xff]
        %v873 = vld [vmem:[%s375 + $0x168] sm:$0xff]
        %v874 = vld [vmem:[%s375 + $0x170] sm:$0xff]
        %v875 = vld [vmem:[%s375 + $0x178] sm:$0xff]
        %v876 = vld [vmem:[%s375 + $0x180] sm:$0xff]
        %v877 = vld [vmem:[%s375 + $0x188] sm:$0xff]
        %v878 = vld [vmem:[%s375 + $0x190] sm:$0xff]
        %v879 = vld [vmem:[%s375 + $0x198] sm:$0xff]
        %v880 = vld [vmem:[%s375 + $0x1a0] sm:$0xff]
        %v881 = vld [vmem:[%s375 + $0x1a8] sm:$0xff]
        %v882 = vld [vmem:[%s375 + $0x1b0] sm:$0xff]
        %v883 = vld [vmem:[%s375 + $0x1b8] sm:$0xff]
        %v884 = vld [vmem:[%s375 + $0x1c0] sm:$0xff]
        %v885 = vld [vmem:[%s375 + $0x1c8] sm:$0xff]
        %v886 = vld [vmem:[%s375 + $0x1d0] sm:$0xff]
        %v887 = vld [vmem:[%s375 + $0x1d8] sm:$0xff]
        %v888 = vld [vmem:[%s375 + $0x1e0] sm:$0xff]
        %v889 = vld [vmem:[%s375 + $0x1e8] sm:$0xff]
        %v890 = vld [vmem:[%s375 + $0x1f0] sm:$0xff]
        %v891 = vld [vmem:[%s375 + $0x1f8] sm:$0xff]
        %v892 = vld [vmem:[%s375 + $0x200] sm:$0xff]
        %v893 = vld [vmem:[%s375 + $0x208] sm:$0xff]
        %v894 = vld [vmem:[%s375 + $0x210] sm:$0xff]
        %v895 = vld [vmem:[%s375 + $0x218] sm:$0xff]
        %v896 = vld [vmem:[%s375 + $0x220] sm:$0xff]
        %v897 = vld [vmem:[%s375 + $0x228] sm:$0xff]
        %v898 = vld [vmem:[%s375 + $0x230] sm:$0xff]
        %v899 = vld [vmem:[%s375 + $0x238] sm:$0xff]
        %v900 = vld [vmem:[%s375 + $0x240] sm:$0xff]
        %v901 = vld [vmem:[%s375 + $0x248] sm:$0xff]
        %v902 = vld [vmem:[%s375 + $0x250] sm:$0xff]
        %v903 = vld [vmem:[%s375 + $0x258] sm:$0xff]
        %v904 = vld [vmem:[%s375 + $0x260] sm:$0xff]
        %v905 = vld [vmem:[%s375 + $0x268] sm:$0xff]
        %v906 = vld [vmem:[%s375 + $0x270] sm:$0xff]
        %v907 = vld [vmem:[%s375 + $0x278] sm:$0xff]
        %v908 = vld [vmem:[%s375 + $0x280] sm:$0xff]
        %v909 = vld [vmem:[%s375 + $0x288] sm:$0xff]
        %v910 = vld [vmem:[%s375 + $0x290] sm:$0xff]
        %v911 = vld [vmem:[%s375 + $0x298] sm:$0xff]
        %v912 = vld [vmem:[%s375 + $0x2a0] sm:$0xff]
        %v913 = vld [vmem:[%s375 + $0x2a8] sm:$0xff]
        %v914 = vld [vmem:[%s375 + $0x2b0] sm:$0xff]
        %v915 = vld [vmem:[%s375 + $0x2b8] sm:$0xff]
        %v916 = vld [vmem:[%s375 + $0x2c0] sm:$0xff]
        %v917 = vld [vmem:[%s375 + $0x2c8] sm:$0xff]
        %v918 = vld [vmem:[%s375 + $0x2d0] sm:$0xff]
        %v919 = vld [vmem:[%s375 + $0x2d8] sm:$0xff]
        %v920 = vld [vmem:[%s375 + $0x2e0] sm:$0xff]
        %v921 = vld [vmem:[%s375 + $0x2e8] sm:$0xff]
        %v922 = vld [vmem:[%s375 + $0x2f0] sm:$0xff]
        %v923 = vld [vmem:[%s375 + $0x2f8] sm:$0xff]
        %v924 = vld [vmem:[%s375 + $0x300] sm:$0xff]
        %v925 = vld [vmem:[%s375 + $0x308] sm:$0xff]
        %v926 = vld [vmem:[%s375 + $0x310] sm:$0xff]
        %v927 = vld [vmem:[%s375 + $0x318] sm:$0xff]
        %v928 = vld [vmem:[%s375 + $0x320] sm:$0xff]
        %v929 = vld [vmem:[%s375 + $0x328] sm:$0xff]
        %v930 = vld [vmem:[%s375 + $0x330] sm:$0xff]
        %v931 = vld [vmem:[%s375 + $0x338] sm:$0xff]
        %v932 = vld [vmem:[%s375 + $0x340] sm:$0xff]
        %v933 = vld [vmem:[%s375 + $0x348] sm:$0xff]
        %v934 = vld [vmem:[%s375 + $0x350] sm:$0xff]
        %v935 = vld [vmem:[%s375 + $0x358] sm:$0xff]
        %v936 = vld [vmem:[%s375 + $0x360] sm:$0xff]
        %v937 = vld [vmem:[%s375 + $0x368] sm:$0xff]
        %v938 = vld [vmem:[%s375 + $0x370] sm:$0xff]
        %v939 = vld [vmem:[%s375 + $0x378] sm:$0xff]
        %v940 = vld [vmem:[%s375 + $0x380] sm:$0xff]
        %v941 = vld [vmem:[%s375 + $0x388] sm:$0xff]
        %v942 = vld [vmem:[%s375 + $0x390] sm:$0xff]
        %v943 = vld [vmem:[%s375 + $0x398] sm:$0xff]
        %v944 = vld [vmem:[%s375 + $0x3a0] sm:$0xff]
        %v945 = vld [vmem:[%s375 + $0x3a8] sm:$0xff]
        %v946 = vld [vmem:[%s375 + $0x3b0] sm:$0xff]
        %v947 = vld [vmem:[%s375 + $0x3b8] sm:$0xff]
        %v948 = vld [vmem:[%s375 + $0x3c0] sm:$0xff]
        %v949 = vld [vmem:[%s375 + $0x3c8] sm:$0xff]
        %v950 = vld [vmem:[%s375 + $0x3d0] sm:$0xff]
        %v951 = vld [vmem:[%s375 + $0x3d8] sm:$0xff]
        %v952 = vld [vmem:[%s375 + $0x3e0] sm:$0xff]
        %v953 = vld [vmem:[%s375 + $0x3e8] sm:$0xff]
        %v954 = vld [vmem:[%s375 + $0x3f0] sm:$0xff]
        %v955 = vld [vmem:[%s375 + $0x3f8] sm:$0xff]
        %v956 = vld [vmem:[%s375 + $0x400] sm:$0xff]
        %v957 = vld [vmem:[%s375 + $0x408] sm:$0xff]
        %v958 = vld [vmem:[%s375 + $0x410] sm:$0xff]
        %v959 = vld [vmem:[%s375 + $0x418] sm:$0xff]
        %v960 = vld [vmem:[%s375 + $0x420] sm:$0xff]
        %v961 = vld [vmem:[%s375 + $0x428] sm:$0xff]
        %v962 = vld [vmem:[%s375 + $0x430] sm:$0xff]
        %v963 = vld [vmem:[%s375 + $0x438] sm:$0xff]
        %v964 = vld [vmem:[%s375 + $0x440] sm:$0xff]
        %v965 = vld [vmem:[%s375 + $0x448] sm:$0xff]
        %v966 = vld [vmem:[%s375 + $0x450] sm:$0xff]
        %v967 = vld [vmem:[%s375 + $0x458] sm:$0xff]
        %v968 = vld [vmem:[%s375 + $0x460] sm:$0xff]
        %v969 = vld [vmem:[%s375 + $0x468] sm:$0xff]
        %v970 = vld [vmem:[%s375 + $0x470] sm:$0xff]
        %v971 = vld [vmem:[%s375 + $0x478] sm:$0xff]
        %v972 = vld [vmem:[%s375 + $0x480] sm:$0xff]
        %v973 = vld [vmem:[%s375 + $0x488] sm:$0xff]
        %v974 = vld [vmem:[%s375 + $0x490] sm:$0xff]
        %v975 = vld [vmem:[%s375 + $0x498] sm:$0xff]
        %v976 = vld [vmem:[%s375 + $0x4a0] sm:$0xff]
        %v977 = vld [vmem:[%s375 + $0x4a8] sm:$0xff]
        %v978 = vld [vmem:[%s375 + $0x4b0] sm:$0xff]
        %v979 = vld [vmem:[%s375 + $0x4b8] sm:$0xff]
        %v980 = vld [vmem:[%s375 + $0x4c0] sm:$0xff]
        %v981 = vld [vmem:[%s375 + $0x4c8] sm:$0xff]
        %v982 = vld [vmem:[%s375 + $0x4d0] sm:$0xff]
        %v983 = vld [vmem:[%s375 + $0x4d8] sm:$0xff]
        %v984 = vld [vmem:[%s375 + $0x4e0] sm:$0xff]
        %v985 = vld [vmem:[%s375 + $0x4e8] sm:$0xff]
        %v986 = vld [vmem:[%s375 + $0x4f0] sm:$0xff]
        %v987 = vld [vmem:[%s375 + $0x4f8] sm:$0xff]
        %v988 = vld [vmem:[%s375 + $0x500] sm:$0xff]
        %v989 = vld [vmem:[%s375 + $0x508] sm:$0xff]
        %v990 = vld [vmem:[%s375 + $0x510] sm:$0xff]
        %v991 = vld [vmem:[%s375 + $0x518] sm:$0xff]
        %v992 = vld [vmem:[%s375 + $0x520] sm:$0xff]
        %v993 = vld [vmem:[%s375 + $0x528] sm:$0xff]
        %v994 = vld [vmem:[%s375 + $0x530] sm:$0xff]
        %v995 = vld [vmem:[%s375 + $0x538] sm:$0xff]
        %v996 = vld [vmem:[%s375 + $0x540] sm:$0xff]
        %v997 = vld [vmem:[%s375 + $0x548] sm:$0xff]
        %v998 = vld [vmem:[%s375 + $0x550] sm:$0xff]
        %v999 = vld [vmem:[%s375 + $0x558] sm:$0xff]
        %v1000 = vld [vmem:[%s375 + $0x560] sm:$0xff]
        %v1001 = vld [vmem:[%s375 + $0x568] sm:$0xff]
        %v1002 = vld [vmem:[%s375 + $0x570] sm:$0xff]
        %v1003 = vld [vmem:[%s375 + $0x578] sm:$0xff]
        %v1004 = vld [vmem:[%s375 + $0x580] sm:$0xff]
        %v1005 = vld [vmem:[%s375 + $0x588] sm:$0xff]
        %v1006 = vld [vmem:[%s375 + $0x590] sm:$0xff]
        %v1007 = vld [vmem:[%s375 + $0x598] sm:$0xff]
        %v1008 = vld [vmem:[%s375 + $0x5a0] sm:$0xff]
        %v1009 = vld [vmem:[%s375 + $0x5a8] sm:$0xff]
        %v1010 = vld [vmem:[%s375 + $0x5b0] sm:$0xff]
        %v1011 = vld [vmem:[%s375 + $0x5b8] sm:$0xff]
        %v1012 = vld [vmem:[%s375 + $0x5c0] sm:$0xff]
        %v1013 = vld [vmem:[%s375 + $0x5c8] sm:$0xff]
        %v1014 = vld [vmem:[%s375 + $0x5d0] sm:$0xff]
        %v1015 = vld [vmem:[%s375 + $0x5d8] sm:$0xff]
        %v1016 = vld [vmem:[%s375 + $0x5e0] sm:$0xff]
        %v1017 = vld [vmem:[%s375 + $0x5e8] sm:$0xff]
        %v1018 = vld [vmem:[%s375 + $0x5f0] sm:$0xff]
        %v1019 = vld [vmem:[%s375 + $0x5f8] sm:$0xff]
        %v1020 = vld [vmem:[%s375 + $0x600] sm:$0xff]
        %v1021 = vld [vmem:[%s375 + $0x608] sm:$0xff]
        %v1022 = vld [vmem:[%s375 + $0x610] sm:$0xff]
        %v1023 = vld [vmem:[%s375 + $0x618] sm:$0xff]
        %v1024 = vld [vmem:[%s375 + $0x620] sm:$0xff]
        %v1025 = vld [vmem:[%s375 + $0x628] sm:$0xff]
        %v1026 = vld [vmem:[%s375 + $0x630] sm:$0xff]
        %v1027 = vld [vmem:[%s375 + $0x638] sm:$0xff]
        %v1028 = vld [vmem:[%s375 + $0x640] sm:$0xff]
        %v1029 = vld [vmem:[%s375 + $0x648] sm:$0xff]
        %v1030 = vld [vmem:[%s375 + $0x650] sm:$0xff]
        %v1031 = vld [vmem:[%s375 + $0x658] sm:$0xff]
        %v1032 = vld [vmem:[%s375 + $0x660] sm:$0xff]
        %v1033 = vld [vmem:[%s375 + $0x668] sm:$0xff]
        %v1034 = vld [vmem:[%s375 + $0x670] sm:$0xff]
        %v1035 = vld [vmem:[%s375 + $0x678] sm:$0xff]
        %v1036 = vld [vmem:[%s375 + $0x680] sm:$0xff]
        %v1037 = vld [vmem:[%s375 + $0x688] sm:$0xff]
        %v1038 = vld [vmem:[%s375 + $0x690] sm:$0xff]
        %v1039 = vld [vmem:[%s375 + $0x698] sm:$0xff]
        %v1040 = vld [vmem:[%s375 + $0x6a0] sm:$0xff]
        %v1041 = vld [vmem:[%s375 + $0x6a8] sm:$0xff]
        %v1042 = vld [vmem:[%s375 + $0x6b0] sm:$0xff]
        %v1043 = vld [vmem:[%s375 + $0x6b8] sm:$0xff]
        %v1044 = vld [vmem:[%s375 + $0x6c0] sm:$0xff]
        %v1045 = vld [vmem:[%s375 + $0x6c8] sm:$0xff]
        %v1046 = vld [vmem:[%s375 + $0x6d0] sm:$0xff]
        %v1047 = vld [vmem:[%s375 + $0x6d8] sm:$0xff]
        %v1048 = vld [vmem:[%s375 + $0x6e0] sm:$0xff]
        %v1049 = vld [vmem:[%s375 + $0x6e8] sm:$0xff]
        %v1050 = vld [vmem:[%s375 + $0x6f0] sm:$0xff]
        %v1051 = vld [vmem:[%s375 + $0x6f8] sm:$0xff]
        %v1052 = vld [vmem:[%s375 + $0x700] sm:$0xff]
        %v1053 = vld [vmem:[%s375 + $0x708] sm:$0xff]
        %v1054 = vld [vmem:[%s375 + $0x710] sm:$0xff]
        %v1055 = vld [vmem:[%s375 + $0x718] sm:$0xff]
        %v1056 = vld [vmem:[%s375 + $0x720] sm:$0xff]
        %v1057 = vld [vmem:[%s375 + $0x728] sm:$0xff]
        %v1058 = vld [vmem:[%s375 + $0x730] sm:$0xff]
        %v1059 = vld [vmem:[%s375 + $0x738] sm:$0xff]
        %v1060 = vld [vmem:[%s375 + $0x740] sm:$0xff]
        %v1061 = vld [vmem:[%s375 + $0x748] sm:$0xff]
        %v1062 = vld [vmem:[%s375 + $0x750] sm:$0xff]
        %v1063 = vld [vmem:[%s375 + $0x758] sm:$0xff]
        %v1064 = vld [vmem:[%s375 + $0x760] sm:$0xff]
        %v1065 = vld [vmem:[%s375 + $0x768] sm:$0xff]
        %v1066 = vld [vmem:[%s375 + $0x770] sm:$0xff]
        %v1067 = vld [vmem:[%s375 + $0x778] sm:$0xff]
        %v1068 = vld [vmem:[%s375 + $0x780] sm:$0xff]
        %v1069 = vld [vmem:[%s375 + $0x788] sm:$0xff]
        %v1070 = vld [vmem:[%s375 + $0x790] sm:$0xff]
        %v1071 = vld [vmem:[%s375 + $0x798] sm:$0xff]
        %v1072 = vld [vmem:[%s375 + $0x7a0] sm:$0xff]
        %v1073 = vld [vmem:[%s375 + $0x7a8] sm:$0xff]
        %v1074 = vld [vmem:[%s375 + $0x7b0] sm:$0xff]
        %v1075 = vld [vmem:[%s375 + $0x7b8] sm:$0xff]
        %v1076 = vld [vmem:[%s375 + $0x7c0] sm:$0xff]
        %v1077 = vld [vmem:[%s375 + $0x7c8] sm:$0xff]
        %v1078 = vld [vmem:[%s375 + $0x7d0] sm:$0xff]
        %v1079 = vld [vmem:[%s375 + $0x7d8] sm:$0xff]
        %v1080 = vld [vmem:[%s375 + $0x7e0] sm:$0xff]
        %v1081 = vld [vmem:[%s375 + $0x7e8] sm:$0xff]
        %v1082 = vld [vmem:[%s375 + $0x7f0] sm:$0xff]
        %v1083 = vld [vmem:[%s375 + $0x7f8] sm:$0xff]
        %v1084 = vld [vmem:[%s375 + $0x800] sm:$0xff]
        %v1085 = vld [vmem:[%s375 + $0x808] sm:$0xff]
        %v1086 = vld [vmem:[%s375 + $0x810] sm:$0xff]
        %v1087 = vld [vmem:[%s375 + $0x818] sm:$0xff]
        %v1088 = vld [vmem:[%s375 + $0x820] sm:$0xff]
        %v1089 = vld [vmem:[%s375 + $0x828] sm:$0xff]
        %v1090 = vld [vmem:[%s375 + $0x830] sm:$0xff]
        %v1091 = vld [vmem:[%s375 + $0x838] sm:$0xff]
        %v1092 = vld [vmem:[%s375 + $0x840] sm:$0xff]
        %v1093 = vld [vmem:[%s375 + $0x848] sm:$0xff]
        %v1094 = vld [vmem:[%s375 + $0x850] sm:$0xff]
        %v1095 = vld [vmem:[%s375 + $0x858] sm:$0xff]
        %v1096 = vld [vmem:[%s375 + $0x860] sm:$0xff]
        %v1097 = vld [vmem:[%s375 + $0x868] sm:$0xff]
        %v1098 = vld [vmem:[%s375 + $0x870] sm:$0xff]
        %v1099 = vld [vmem:[%s375 + $0x878] sm:$0xff]
        %v1100 = vld [vmem:[%s375 + $0x880] sm:$0xff]
        %v1101 = vld [vmem:[%s375 + $0x888] sm:$0xff]
        %v1102 = vld [vmem:[%s375 + $0x890] sm:$0xff]
        %v1103 = vld [vmem:[%s375 + $0x898] sm:$0xff]
        %v1104 = vld [vmem:[%s375 + $0x8a0] sm:$0xff]
        %v1105 = vld [vmem:[%s375 + $0x8a8] sm:$0xff]
        %v1106 = vld [vmem:[%s375 + $0x8b0] sm:$0xff]
        %v1107 = vld [vmem:[%s375 + $0x8b8] sm:$0xff]
        %v1108 = vld [vmem:[%s375 + $0x8c0] sm:$0xff]
        %v1109 = vld [vmem:[%s375 + $0x8c8] sm:$0xff]
        %v1110 = vld [vmem:[%s375 + $0x8d0] sm:$0xff]
        %v1111 = vld [vmem:[%s375 + $0x8d8] sm:$0xff]
        %v1112 = vld [vmem:[%s375 + $0x8e0] sm:$0xff]
        %v1113 = vld [vmem:[%s375 + $0x8e8] sm:$0xff]
        %v1114 = vld [vmem:[%s375 + $0x8f0] sm:$0xff]
        %v1115 = vld [vmem:[%s375 + $0x8f8] sm:$0xff]
        %v1116 = vld [vmem:[%s375 + $0x900] sm:$0xff]
        %v1117 = vld [vmem:[%s375 + $0x908] sm:$0xff]
        %v1118 = vld [vmem:[%s375 + $0x910] sm:$0xff]
        %v1119 = vld [vmem:[%s375 + $0x918] sm:$0xff]
        %v1120 = vld [vmem:[%s375 + $0x920] sm:$0xff]
        %v1121 = vld [vmem:[%s375 + $0x928] sm:$0xff]
        %v1122 = vld [vmem:[%s375 + $0x930] sm:$0xff]
        %v1123 = vld [vmem:[%s375 + $0x938] sm:$0xff]
        %v1124 = vld [vmem:[%s375 + $0x940] sm:$0xff]
        %v1125 = vld [vmem:[%s375 + $0x948] sm:$0xff]
        %v1126 = vld [vmem:[%s375 + $0x950] sm:$0xff]
        %v1127 = vld [vmem:[%s375 + $0x958] sm:$0xff]
        %v1128 = vld [vmem:[%s375 + $0x960] sm:$0xff]
        %v1129 = vld [vmem:[%s375 + $0x968] sm:$0xff]
        %v1130 = vld [vmem:[%s375 + $0x970] sm:$0xff]
        %v1131 = vld [vmem:[%s375 + $0x978] sm:$0xff]
        %v1132 = vld [vmem:[%s375 + $0x980] sm:$0xff]
        %v1133 = vld [vmem:[%s375 + $0x988] sm:$0xff]
        %v1134 = vld [vmem:[%s375 + $0x990] sm:$0xff]
        %v1135 = vld [vmem:[%s375 + $0x998] sm:$0xff]
        %v1136 = vld [vmem:[%s375 + $0x9a0] sm:$0xff]
        %v1137 = vld [vmem:[%s375 + $0x9a8] sm:$0xff]
        %v1138 = vld [vmem:[%s375 + $0x9b0] sm:$0xff]
        %v1139 = vld [vmem:[%s375 + $0x9b8] sm:$0xff]
        %v1140 = vld [vmem:[%s375 + $0x9c0] sm:$0xff]
        %v1141 = vld [vmem:[%s375 + $0x9c8] sm:$0xff]
        %v1142 = vld [vmem:[%s375 + $0x9d0] sm:$0xff]
        %v1143 = vld [vmem:[%s375 + $0x9d8] sm:$0xff]
        %v1144 = vld [vmem:[%s375 + $0x9e0] sm:$0xff]
        %v1145 = vld [vmem:[%s375 + $0x9e8] sm:$0xff]
        %v1146 = vld [vmem:[%s375 + $0x9f0] sm:$0xff]
        %v1147 = vld [vmem:[%s375 + $0x9f8] sm:$0xff]
        %v1148 = vld [vmem:[%s375 + $0xa00] sm:$0xff]
        %v1149 = vld [vmem:[%s375 + $0xa08] sm:$0xff]
        %v1150 = vld [vmem:[%s375 + $0xa10] sm:$0xff]
        %v1151 = vld [vmem:[%s375 + $0xa18] sm:$0xff]
        %v1152 = vld [vmem:[%s375 + $0xa20] sm:$0xff]
        %v1153 = vld [vmem:[%s375 + $0xa28] sm:$0xff]
        %v1154 = vld [vmem:[%s375 + $0xa30] sm:$0xff]
        %v1155 = vld [vmem:[%s375 + $0xa38] sm:$0xff]
        %v1156 = vld [vmem:[%s375 + $0xa40] sm:$0xff]
        %v1157 = vld [vmem:[%s375 + $0xa48] sm:$0xff]
        %v1158 = vld [vmem:[%s375 + $0xa50] sm:$0xff]
        %v1159 = vld [vmem:[%s375 + $0xa58] sm:$0xff]
        %v1160 = vld [vmem:[%s375 + $0xa60] sm:$0xff]
        %v1161 = vld [vmem:[%s375 + $0xa68] sm:$0xff]
        %v1162 = vld [vmem:[%s375 + $0xa70] sm:$0xff]
        %v1163 = vld [vmem:[%s375 + $0xa78] sm:$0xff]
        %v1164 = vld [vmem:[%s375 + $0xa80] sm:$0xff]
        %v1165 = vld [vmem:[%s375 + $0xa88] sm:$0xff]
        %v1166 = vld [vmem:[%s375 + $0xa90] sm:$0xff]
        %v1167 = vld [vmem:[%s375 + $0xa98] sm:$0xff]
        %v1168 = vld [vmem:[%s375 + $0xaa0] sm:$0xff]
        %v1169 = vld [vmem:[%s375 + $0xaa8] sm:$0xff]
        %v1170 = vld [vmem:[%s375 + $0xab0] sm:$0xff]
        %v1171 = vld [vmem:[%s375 + $0xab8] sm:$0xff]
        %v1172 = vld [vmem:[%s375 + $0xac0] sm:$0xff]
        %v1173 = vld [vmem:[%s375 + $0xac8] sm:$0xff]
        %v1174 = vld [vmem:[%s375 + $0xad0] sm:$0xff]
        %v1175 = vld [vmem:[%s375 + $0xad8] sm:$0xff]
        %v1176 = vld [vmem:[%s375 + $0xae0] sm:$0xff]
        %v1177 = vld [vmem:[%s375 + $0xae8] sm:$0xff]
        %v1178 = vld [vmem:[%s375 + $0xaf0] sm:$0xff]
        %v1179 = vld [vmem:[%s375 + $0xaf8] sm:$0xff]
        %v1180 = vld [vmem:[%s375 + $0xb00] sm:$0xff]
        %v1181 = vld [vmem:[%s375 + $0xb08] sm:$0xff]
        %v1182 = vld [vmem:[%s375 + $0xb10] sm:$0xff]
        %v1183 = vld [vmem:[%s375 + $0xb18] sm:$0xff]
        %v1184 = vld [vmem:[%s375 + $0xb20] sm:$0xff]
        %v1185 = vld [vmem:[%s375 + $0xb28] sm:$0xff]
        %v1186 = vld [vmem:[%s375 + $0xb30] sm:$0xff]
        %v1187 = vld [vmem:[%s375 + $0xb38] sm:$0xff]
        %v1188 = vld [vmem:[%s375 + $0xb40] sm:$0xff]
        %v1189 = vld [vmem:[%s375 + $0xb48] sm:$0xff]
        %v1190 = vld [vmem:[%s375 + $0xb50] sm:$0xff]
        %v1191 = vld [vmem:[%s375 + $0xb58] sm:$0xff]
        %v1192 = vld [vmem:[%s375 + $0xb60] sm:$0xff]
        %v1193 = vld [vmem:[%s375 + $0xb68] sm:$0xff]
        %v1194 = vld [vmem:[%s375 + $0xb70] sm:$0xff]
        %v1195 = vld [vmem:[%s375 + $0xb78] sm:$0xff]
        %v1196 = vld [vmem:[%s375 + $0xb80] sm:$0xff]
        %v1197 = vld [vmem:[%s375 + $0xb88] sm:$0xff]
        %v1198 = vld [vmem:[%s375 + $0xb90] sm:$0xff]
        %v1199 = vld [vmem:[%s375 + $0xb98] sm:$0xff]
        %v1200 = vld [vmem:[%s375 + $0xba0] sm:$0xff]
        %v1201 = vld [vmem:[%s375 + $0xba8] sm:$0xff]
        %v1202 = vld [vmem:[%s375 + $0xbb0] sm:$0xff]
        %v1203 = vld [vmem:[%s375 + $0xbb8] sm:$0xff]
        %v1204 = vld [vmem:[%s375 + $0xbc0] sm:$0xff]
        %v1205 = vld [vmem:[%s375 + $0xbc8] sm:$0xff]
        %v1206 = vld [vmem:[%s375 + $0xbd0] sm:$0xff]
        %v1207 = vld [vmem:[%s375 + $0xbd8] sm:$0xff]
        %v1208 = vld [vmem:[%s375 + $0xbe0] sm:$0xff]
        %v1209 = vld [vmem:[%s375 + $0xbe8] sm:$0xff]
        %v1210 = vld [vmem:[%s375 + $0xbf0] sm:$0xff]
        %v1211 = vld [vmem:[%s375 + $0xbf8] sm:$0xff]
        %v1212 = vld [vmem:[%s384] sm:$0xff]
        %v1213 = vld [vmem:[%s384 + $0x8] sm:$0xff]
        %v1214 = vld [vmem:[%s384 + $0x10] sm:$0xff]
        %v1218 = vlaneseq
        %v1219 = vshrl.u32 %v1218, 7
        %v1220 = vsub.s32 0, %v1219
        %v1221 = vrot.slane %v1212, %v1220
        %v1222 = vlaneseq
        %v1223 = vshrl.u32 %v1222, 7
        %v1224 = vsub.s32 1, %v1223
        %v1225 = vrot.slane %v1212, %v1224
        %v1226 = vlaneseq
        %v1227 = vshrl.u32 %v1226, 7
        %v1228 = vsub.s32 2, %v1227
        %v1229 = vrot.slane %v1212, %v1228
        %v1230 = vlaneseq
        %v1231 = vshrl.u32 %v1230, 7
        %v1232 = vsub.s32 3, %v1231
        %v1233 = vrot.slane %v1212, %v1232
        %v1234 = vlaneseq
        %v1235 = vshrl.u32 %v1234, 7
        %v1236 = vsub.s32 4, %v1235
        %v1237 = vrot.slane %v1212, %v1236
        %v1238 = vlaneseq
        %v1239 = vshrl.u32 %v1238, 7
        %v1240 = vsub.s32 5, %v1239
        %v1241 = vrot.slane %v1212, %v1240
        %v1242 = vlaneseq
        %v1243 = vshrl.u32 %v1242, 7
        %v1244 = vsub.s32 6, %v1243
        %v1245 = vrot.slane %v1212, %v1244
        %v1246 = vlaneseq
        %v1247 = vshrl.u32 %v1246, 7
        %v1248 = vsub.s32 7, %v1247
        %v1249 = vrot.slane %v1212, %v1248
        %v1250 = vlaneseq
        %v1251 = vshrl.u32 %v1250, 7
        %v1252 = vsub.s32 0, %v1251
        %v1253 = vrot.slane %v1213, %v1252
        %v1254 = vlaneseq
        %v1255 = vshrl.u32 %v1254, 7
        %v1256 = vsub.s32 1, %v1255
        %v1257 = vrot.slane %v1213, %v1256
        %v1258 = vlaneseq
        %v1259 = vshrl.u32 %v1258, 7
        %v1260 = vsub.s32 2, %v1259
        %v1261 = vrot.slane %v1213, %v1260
        %v1262 = vlaneseq
        %v1263 = vshrl.u32 %v1262, 7
        %v1264 = vsub.s32 3, %v1263
        %v1265 = vrot.slane %v1213, %v1264
        %v1266 = vlaneseq
        %v1267 = vshrl.u32 %v1266, 7
        %v1268 = vsub.s32 4, %v1267
        %v1269 = vrot.slane %v1213, %v1268
        %v1270 = vlaneseq
        %v1271 = vshrl.u32 %v1270, 7
        %v1272 = vsub.s32 5, %v1271
        %v1273 = vrot.slane %v1213, %v1272
        %v1274 = vlaneseq
        %v1275 = vshrl.u32 %v1274, 7
        %v1276 = vsub.s32 6, %v1275
        %v1277 = vrot.slane %v1213, %v1276
        %v1278 = vlaneseq
        %v1279 = vshrl.u32 %v1278, 7
        %v1280 = vsub.s32 7, %v1279
        %v1281 = vrot.slane %v1213, %v1280
        %v1282 = vlaneseq
        %v1283 = vshrl.u32 %v1282, 7
        %v1284 = vsub.s32 0, %v1283
        %v1285 = vrot.slane %v1214, %v1284
        %v1286 = vlaneseq
        %v1287 = vshrl.u32 %v1286, 7
        %v1288 = vsub.s32 1, %v1287
        %v1289 = vrot.slane %v1214, %v1288
        %v1290 = vlaneseq
        %v1291 = vshrl.u32 %v1290, 7
        %v1292 = vsub.s32 2, %v1291
        %v1293 = vrot.slane %v1214, %v1292
        %v1294 = vlaneseq
        %v1295 = vshrl.u32 %v1294, 7
        %v1296 = vsub.s32 3, %v1295
        %v1297 = vrot.slane %v1214, %v1296
        %v1298 = vlaneseq
        %v1299 = vshrl.u32 %v1298, 7
        %v1300 = vsub.s32 4, %v1299
        %v1301 = vrot.slane %v1214, %v1300
        %v1302 = vlaneseq
        %v1303 = vshrl.u32 %v1302, 7
        %v1304 = vsub.s32 5, %v1303
        %v1305 = vrot.slane %v1214, %v1304
        %v1306 = vlaneseq
        %v1307 = vshrl.u32 %v1306, 7
        %v1308 = vsub.s32 6, %v1307
        %v1309 = vrot.slane %v1214, %v1308
        %v1310 = vlaneseq
        %v1311 = vshrl.u32 %v1310, 7
        %v1312 = vsub.s32 7, %v1311
        %v1313 = vrot.slane %v1214, %v1312
        %v1722 = vunpack.c.l.b16 %v828
        %v1723 = vunpack.c.h.b16 %v828
        %v1724 = vunpack.c.l.b16 %v829
        %v1725 = vunpack.c.h.b16 %v829
        %v1726 = vunpack.c.l.b16 %v830
        %v1727 = vunpack.c.h.b16 %v830
        %v1728 = vunpack.c.l.b16 %v831
        %v1729 = vunpack.c.h.b16 %v831
        %v1730 = vunpack.c.l.b16 %v832
        %v1731 = vunpack.c.h.b16 %v832
        %v1732 = vunpack.c.l.b16 %v833
        %v1733 = vunpack.c.h.b16 %v833
        %v1734 = vunpack.c.l.b16 %v834
        %v1735 = vunpack.c.h.b16 %v834
        %v1736 = vunpack.c.l.b16 %v835
        %v1737 = vunpack.c.h.b16 %v835
        %v1738 = vunpack.c.l.b16 %v836
        %v1739 = vunpack.c.h.b16 %v836
        %v1740 = vunpack.c.l.b16 %v837
        %v1741 = vunpack.c.h.b16 %v837
        %v1742 = vunpack.c.l.b16 %v838
        %v1743 = vunpack.c.h.b16 %v838
        %v1744 = vunpack.c.l.b16 %v839
        %v1745 = vunpack.c.h.b16 %v839
        %v1746 = vunpack.c.l.b16 %v840
        %v1747 = vunpack.c.h.b16 %v840
        %v1748 = vunpack.c.l.b16 %v841
        %v1749 = vunpack.c.h.b16 %v841
        %v1750 = vunpack.c.l.b16 %v842
        %v1751 = vunpack.c.h.b16 %v842
        %v1752 = vunpack.c.l.b16 %v843
        %v1753 = vunpack.c.h.b16 %v843
        %v1754 = vunpack.c.l.b16 %v844
        %v1755 = vunpack.c.h.b16 %v844
        %v1756 = vunpack.c.l.b16 %v845
        %v1757 = vunpack.c.h.b16 %v845
        %v1758 = vunpack.c.l.b16 %v846
        %v1759 = vunpack.c.h.b16 %v846
        %v1760 = vunpack.c.l.b16 %v847
        %v1761 = vunpack.c.h.b16 %v847
        %v1762 = vunpack.c.l.b16 %v848
        %v1763 = vunpack.c.h.b16 %v848
        %v1764 = vunpack.c.l.b16 %v849
        %v1765 = vunpack.c.h.b16 %v849
        %v1766 = vunpack.c.l.b16 %v850
        %v1767 = vunpack.c.h.b16 %v850
        %v1768 = vunpack.c.l.b16 %v851
        %v1769 = vunpack.c.h.b16 %v851
        %v1770 = vunpack.c.l.b16 %v852
        %v1771 = vunpack.c.h.b16 %v852
        %v1772 = vunpack.c.l.b16 %v853
        %v1773 = vunpack.c.h.b16 %v853
        %v1774 = vunpack.c.l.b16 %v854
        %v1775 = vunpack.c.h.b16 %v854
        %v1776 = vunpack.c.l.b16 %v855
        %v1777 = vunpack.c.h.b16 %v855
        %v1778 = vunpack.c.l.b16 %v856
        %v1779 = vunpack.c.h.b16 %v856
        %v1780 = vunpack.c.l.b16 %v857
        %v1781 = vunpack.c.h.b16 %v857
        %v1782 = vunpack.c.l.b16 %v858
        %v1783 = vunpack.c.h.b16 %v858
        %v1784 = vunpack.c.l.b16 %v859
        %v1785 = vunpack.c.h.b16 %v859
        %v1786 = vunpack.c.l.b16 %v860
        %v1787 = vunpack.c.h.b16 %v860
        %v1788 = vunpack.c.l.b16 %v861
        %v1789 = vunpack.c.h.b16 %v861
        %v1790 = vunpack.c.l.b16 %v862
        %v1791 = vunpack.c.h.b16 %v862
        %v1792 = vunpack.c.l.b16 %v863
        %v1793 = vunpack.c.h.b16 %v863
        %v1794 = vunpack.c.l.b16 %v864
        %v1795 = vunpack.c.h.b16 %v864
        %v1796 = vunpack.c.l.b16 %v865
        %v1797 = vunpack.c.h.b16 %v865
        %v1798 = vunpack.c.l.b16 %v866
        %v1799 = vunpack.c.h.b16 %v866
        %v1800 = vunpack.c.l.b16 %v867
        %v1801 = vunpack.c.h.b16 %v867
        %v1802 = vunpack.c.l.b16 %v868
        %v1803 = vunpack.c.h.b16 %v868
        %v1804 = vunpack.c.l.b16 %v869
        %v1805 = vunpack.c.h.b16 %v869
        %v1806 = vunpack.c.l.b16 %v870
        %v1807 = vunpack.c.h.b16 %v870
        %v1808 = vunpack.c.l.b16 %v871
        %v1809 = vunpack.c.h.b16 %v871
        %v1810 = vunpack.c.l.b16 %v872
        %v1811 = vunpack.c.h.b16 %v872
        %v1812 = vunpack.c.l.b16 %v873
        %v1813 = vunpack.c.h.b16 %v873
        %v1814 = vunpack.c.l.b16 %v874
        %v1815 = vunpack.c.h.b16 %v874
        %v1816 = vunpack.c.l.b16 %v875
        %v1817 = vunpack.c.h.b16 %v875
        %v1818 = vunpack.c.l.b16 %v876
        %v1819 = vunpack.c.h.b16 %v876
        %v1820 = vunpack.c.l.b16 %v877
        %v1821 = vunpack.c.h.b16 %v877
        %v1822 = vunpack.c.l.b16 %v878
        %v1823 = vunpack.c.h.b16 %v878
        %v1824 = vunpack.c.l.b16 %v879
        %v1825 = vunpack.c.h.b16 %v879
        %v1826 = vunpack.c.l.b16 %v880
        %v1827 = vunpack.c.h.b16 %v880
        %v1828 = vunpack.c.l.b16 %v881
        %v1829 = vunpack.c.h.b16 %v881
        %v1830 = vunpack.c.l.b16 %v882
        %v1831 = vunpack.c.h.b16 %v882
        %v1832 = vunpack.c.l.b16 %v883
        %v1833 = vunpack.c.h.b16 %v883
        %v1834 = vunpack.c.l.b16 %v884
        %v1835 = vunpack.c.h.b16 %v884
        %v1836 = vunpack.c.l.b16 %v885
        %v1837 = vunpack.c.h.b16 %v885
        %v1838 = vunpack.c.l.b16 %v886
        %v1839 = vunpack.c.h.b16 %v886
        %v1840 = vunpack.c.l.b16 %v887
        %v1841 = vunpack.c.h.b16 %v887
        %v1842 = vunpack.c.l.b16 %v888
        %v1843 = vunpack.c.h.b16 %v888
        %v1844 = vunpack.c.l.b16 %v889
        %v1845 = vunpack.c.h.b16 %v889
        %v1846 = vunpack.c.l.b16 %v890
        %v1847 = vunpack.c.h.b16 %v890
        %v1848 = vunpack.c.l.b16 %v891
        %v1849 = vunpack.c.h.b16 %v891
        %v1850 = vunpack.c.l.b16 %v892
        %v1851 = vunpack.c.h.b16 %v892
        %v1852 = vunpack.c.l.b16 %v893
        %v1853 = vunpack.c.h.b16 %v893
        %v1854 = vunpack.c.l.b16 %v894
        %v1855 = vunpack.c.h.b16 %v894
        %v1856 = vunpack.c.l.b16 %v895
        %v1857 = vunpack.c.h.b16 %v895
        %v1858 = vunpack.c.l.b16 %v896
        %v1859 = vunpack.c.h.b16 %v896
        %v1860 = vunpack.c.l.b16 %v897
        %v1861 = vunpack.c.h.b16 %v897
        %v1862 = vunpack.c.l.b16 %v898
        %v1863 = vunpack.c.h.b16 %v898
        %v1864 = vunpack.c.l.b16 %v899
        %v1865 = vunpack.c.h.b16 %v899
        %v1866 = vunpack.c.l.b16 %v900
        %v1867 = vunpack.c.h.b16 %v900
        %v1868 = vunpack.c.l.b16 %v901
        %v1869 = vunpack.c.h.b16 %v901
        %v1870 = vunpack.c.l.b16 %v902
        %v1871 = vunpack.c.h.b16 %v902
        %v1872 = vunpack.c.l.b16 %v903
        %v1873 = vunpack.c.h.b16 %v903
        %v1874 = vunpack.c.l.b16 %v904
        %v1875 = vunpack.c.h.b16 %v904
        %v1876 = vunpack.c.l.b16 %v905
        %v1877 = vunpack.c.h.b16 %v905
        %v1878 = vunpack.c.l.b16 %v906
        %v1879 = vunpack.c.h.b16 %v906
        %v1880 = vunpack.c.l.b16 %v907
        %v1881 = vunpack.c.h.b16 %v907
        %v1882 = vunpack.c.l.b16 %v908
        %v1883 = vunpack.c.h.b16 %v908
        %v1884 = vunpack.c.l.b16 %v909
        %v1885 = vunpack.c.h.b16 %v909
        %v1886 = vunpack.c.l.b16 %v910
        %v1887 = vunpack.c.h.b16 %v910
        %v1888 = vunpack.c.l.b16 %v911
        %v1889 = vunpack.c.h.b16 %v911
        %v1890 = vunpack.c.l.b16 %v912
        %v1891 = vunpack.c.h.b16 %v912
        %v1892 = vunpack.c.l.b16 %v913
        %v1893 = vunpack.c.h.b16 %v913
        %v1894 = vunpack.c.l.b16 %v914
        %v1895 = vunpack.c.h.b16 %v914
        %v1896 = vunpack.c.l.b16 %v915
        %v1897 = vunpack.c.h.b16 %v915
        %v1898 = vunpack.c.l.b16 %v916
        %v1899 = vunpack.c.h.b16 %v916
        %v1900 = vunpack.c.l.b16 %v917
        %v1901 = vunpack.c.h.b16 %v917
        %v1902 = vunpack.c.l.b16 %v918
        %v1903 = vunpack.c.h.b16 %v918
        %v1904 = vunpack.c.l.b16 %v919
        %v1905 = vunpack.c.h.b16 %v919
        %v1906 = vunpack.c.l.b16 %v920
        %v1907 = vunpack.c.h.b16 %v920
        %v1908 = vunpack.c.l.b16 %v921
        %v1909 = vunpack.c.h.b16 %v921
        %v1910 = vunpack.c.l.b16 %v922
        %v1911 = vunpack.c.h.b16 %v922
        %v1912 = vunpack.c.l.b16 %v923
        %v1913 = vunpack.c.h.b16 %v923
        %v1914 = vunpack.c.l.b16 %v924
        %v1915 = vunpack.c.h.b16 %v924
        %v1916 = vunpack.c.l.b16 %v925
        %v1917 = vunpack.c.h.b16 %v925
        %v1918 = vunpack.c.l.b16 %v926
        %v1919 = vunpack.c.h.b16 %v926
        %v1920 = vunpack.c.l.b16 %v927
        %v1921 = vunpack.c.h.b16 %v927
        %v1922 = vunpack.c.l.b16 %v928
        %v1923 = vunpack.c.h.b16 %v928
        %v1924 = vunpack.c.l.b16 %v929
        %v1925 = vunpack.c.h.b16 %v929
        %v1926 = vunpack.c.l.b16 %v930
        %v1927 = vunpack.c.h.b16 %v930
        %v1928 = vunpack.c.l.b16 %v931
        %v1929 = vunpack.c.h.b16 %v931
        %v1930 = vunpack.c.l.b16 %v932
        %v1931 = vunpack.c.h.b16 %v932
        %v1932 = vunpack.c.l.b16 %v933
        %v1933 = vunpack.c.h.b16 %v933
        %v1934 = vunpack.c.l.b16 %v934
        %v1935 = vunpack.c.h.b16 %v934
        %v1936 = vunpack.c.l.b16 %v935
        %v1937 = vunpack.c.h.b16 %v935
        %v1938 = vunpack.c.l.b16 %v936
        %v1939 = vunpack.c.h.b16 %v936
        %v1940 = vunpack.c.l.b16 %v937
        %v1941 = vunpack.c.h.b16 %v937
        %v1942 = vunpack.c.l.b16 %v938
        %v1943 = vunpack.c.h.b16 %v938
        %v1944 = vunpack.c.l.b16 %v939
        %v1945 = vunpack.c.h.b16 %v939
        %v1946 = vunpack.c.l.b16 %v940
        %v1947 = vunpack.c.h.b16 %v940
        %v1948 = vunpack.c.l.b16 %v941
        %v1949 = vunpack.c.h.b16 %v941
        %v1950 = vunpack.c.l.b16 %v942
        %v1951 = vunpack.c.h.b16 %v942
        %v1952 = vunpack.c.l.b16 %v943
        %v1953 = vunpack.c.h.b16 %v943
        %v1954 = vunpack.c.l.b16 %v944
        %v1955 = vunpack.c.h.b16 %v944
        %v1956 = vunpack.c.l.b16 %v945
        %v1957 = vunpack.c.h.b16 %v945
        %v1958 = vunpack.c.l.b16 %v946
        %v1959 = vunpack.c.h.b16 %v946
        %v1960 = vunpack.c.l.b16 %v947
        %v1961 = vunpack.c.h.b16 %v947
        %v1962 = vunpack.c.l.b16 %v948
        %v1963 = vunpack.c.h.b16 %v948
        %v1964 = vunpack.c.l.b16 %v949
        %v1965 = vunpack.c.h.b16 %v949
        %v1966 = vunpack.c.l.b16 %v950
        %v1967 = vunpack.c.h.b16 %v950
        %v1968 = vunpack.c.l.b16 %v951
        %v1969 = vunpack.c.h.b16 %v951
        %v1970 = vunpack.c.l.b16 %v952
        %v1971 = vunpack.c.h.b16 %v952
        %v1972 = vunpack.c.l.b16 %v953
        %v1973 = vunpack.c.h.b16 %v953
        %v1974 = vunpack.c.l.b16 %v954
        %v1975 = vunpack.c.h.b16 %v954
        %v1976 = vunpack.c.l.b16 %v955
        %v1977 = vunpack.c.h.b16 %v955
        %v1978 = vunpack.c.l.b16 %v956
        %v1979 = vunpack.c.h.b16 %v956
        %v1980 = vunpack.c.l.b16 %v957
        %v1981 = vunpack.c.h.b16 %v957
        %v1982 = vunpack.c.l.b16 %v958
        %v1983 = vunpack.c.h.b16 %v958
        %v1984 = vunpack.c.l.b16 %v959
        %v1985 = vunpack.c.h.b16 %v959
        %v1986 = vunpack.c.l.b16 %v960
        %v1987 = vunpack.c.h.b16 %v960
        %v1988 = vunpack.c.l.b16 %v961
        %v1989 = vunpack.c.h.b16 %v961
        %v1990 = vunpack.c.l.b16 %v962
        %v1991 = vunpack.c.h.b16 %v962
        %v1992 = vunpack.c.l.b16 %v963
        %v1993 = vunpack.c.h.b16 %v963
        %v1994 = vunpack.c.l.b16 %v964
        %v1995 = vunpack.c.h.b16 %v964
        %v1996 = vunpack.c.l.b16 %v965
        %v1997 = vunpack.c.h.b16 %v965
        %v1998 = vunpack.c.l.b16 %v966
        %v1999 = vunpack.c.h.b16 %v966
        %v2000 = vunpack.c.l.b16 %v967
        %v2001 = vunpack.c.h.b16 %v967
        %v2002 = vunpack.c.l.b16 %v968
        %v2003 = vunpack.c.h.b16 %v968
        %v2004 = vunpack.c.l.b16 %v969
        %v2005 = vunpack.c.h.b16 %v969
        %v2006 = vunpack.c.l.b16 %v970
        %v2007 = vunpack.c.h.b16 %v970
        %v2008 = vunpack.c.l.b16 %v971
        %v2009 = vunpack.c.h.b16 %v971
        %v2010 = vunpack.c.l.b16 %v972
        %v2011 = vunpack.c.h.b16 %v972
        %v2012 = vunpack.c.l.b16 %v973
        %v2013 = vunpack.c.h.b16 %v973
        %v2014 = vunpack.c.l.b16 %v974
        %v2015 = vunpack.c.h.b16 %v974
        %v2016 = vunpack.c.l.b16 %v975
        %v2017 = vunpack.c.h.b16 %v975
        %v2018 = vunpack.c.l.b16 %v976
        %v2019 = vunpack.c.h.b16 %v976
        %v2020 = vunpack.c.l.b16 %v977
        %v2021 = vunpack.c.h.b16 %v977
        %v2022 = vunpack.c.l.b16 %v978
        %v2023 = vunpack.c.h.b16 %v978
        %v2024 = vunpack.c.l.b16 %v979
        %v2025 = vunpack.c.h.b16 %v979
        %v2026 = vunpack.c.l.b16 %v980
        %v2027 = vunpack.c.h.b16 %v980
        %v2028 = vunpack.c.l.b16 %v981
        %v2029 = vunpack.c.h.b16 %v981
        %v2030 = vunpack.c.l.b16 %v982
        %v2031 = vunpack.c.h.b16 %v982
        %v2032 = vunpack.c.l.b16 %v983
        %v2033 = vunpack.c.h.b16 %v983
        %v2034 = vunpack.c.l.b16 %v984
        %v2035 = vunpack.c.h.b16 %v984
        %v2036 = vunpack.c.l.b16 %v985
        %v2037 = vunpack.c.h.b16 %v985
        %v2038 = vunpack.c.l.b16 %v986
        %v2039 = vunpack.c.h.b16 %v986
        %v2040 = vunpack.c.l.b16 %v987
        %v2041 = vunpack.c.h.b16 %v987
        %v2042 = vunpack.c.l.b16 %v988
        %v2043 = vunpack.c.h.b16 %v988
        %v2044 = vunpack.c.l.b16 %v989
        %v2045 = vunpack.c.h.b16 %v989
        %v2046 = vunpack.c.l.b16 %v990
        %v2047 = vunpack.c.h.b16 %v990
        %v2048 = vunpack.c.l.b16 %v991
        %v2049 = vunpack.c.h.b16 %v991
        %v2050 = vunpack.c.l.b16 %v992
        %v2051 = vunpack.c.h.b16 %v992
        %v2052 = vunpack.c.l.b16 %v993
        %v2053 = vunpack.c.h.b16 %v993
        %v2054 = vunpack.c.l.b16 %v994
        %v2055 = vunpack.c.h.b16 %v994
        %v2056 = vunpack.c.l.b16 %v995
        %v2057 = vunpack.c.h.b16 %v995
        %v2058 = vunpack.c.l.b16 %v996
        %v2059 = vunpack.c.h.b16 %v996
        %v2060 = vunpack.c.l.b16 %v997
        %v2061 = vunpack.c.h.b16 %v997
        %v2062 = vunpack.c.l.b16 %v998
        %v2063 = vunpack.c.h.b16 %v998
        %v2064 = vunpack.c.l.b16 %v999
        %v2065 = vunpack.c.h.b16 %v999
        %v2066 = vunpack.c.l.b16 %v1000
        %v2067 = vunpack.c.h.b16 %v1000
        %v2068 = vunpack.c.l.b16 %v1001
        %v2069 = vunpack.c.h.b16 %v1001
        %v2070 = vunpack.c.l.b16 %v1002
        %v2071 = vunpack.c.h.b16 %v1002
        %v2072 = vunpack.c.l.b16 %v1003
        %v2073 = vunpack.c.h.b16 %v1003
        %v2074 = vunpack.c.l.b16 %v1004
        %v2075 = vunpack.c.h.b16 %v1004
        %v2076 = vunpack.c.l.b16 %v1005
        %v2077 = vunpack.c.h.b16 %v1005
        %v2078 = vunpack.c.l.b16 %v1006
        %v2079 = vunpack.c.h.b16 %v1006
        %v2080 = vunpack.c.l.b16 %v1007
        %v2081 = vunpack.c.h.b16 %v1007
        %v2082 = vunpack.c.l.b16 %v1008
        %v2083 = vunpack.c.h.b16 %v1008
        %v2084 = vunpack.c.l.b16 %v1009
        %v2085 = vunpack.c.h.b16 %v1009
        %v2086 = vunpack.c.l.b16 %v1010
        %v2087 = vunpack.c.h.b16 %v1010
        %v2088 = vunpack.c.l.b16 %v1011
        %v2089 = vunpack.c.h.b16 %v1011
        %v2090 = vunpack.c.l.b16 %v1012
        %v2091 = vunpack.c.h.b16 %v1012
        %v2092 = vunpack.c.l.b16 %v1013
        %v2093 = vunpack.c.h.b16 %v1013
        %v2094 = vunpack.c.l.b16 %v1014
        %v2095 = vunpack.c.h.b16 %v1014
        %v2096 = vunpack.c.l.b16 %v1015
        %v2097 = vunpack.c.h.b16 %v1015
        %v2098 = vunpack.c.l.b16 %v1016
        %v2099 = vunpack.c.h.b16 %v1016
        %v2100 = vunpack.c.l.b16 %v1017
        %v2101 = vunpack.c.h.b16 %v1017
        %v2102 = vunpack.c.l.b16 %v1018
        %v2103 = vunpack.c.h.b16 %v1018
        %v2104 = vunpack.c.l.b16 %v1019
        %v2105 = vunpack.c.h.b16 %v1019
        %v2106 = vunpack.c.l.b16 %v1020
        %v2107 = vunpack.c.h.b16 %v1020
        %v2108 = vunpack.c.l.b16 %v1021
        %v2109 = vunpack.c.h.b16 %v1021
        %v2110 = vunpack.c.l.b16 %v1022
        %v2111 = vunpack.c.h.b16 %v1022
        %v2112 = vunpack.c.l.b16 %v1023
        %v2113 = vunpack.c.h.b16 %v1023
        %v2114 = vunpack.c.l.b16 %v1024
        %v2115 = vunpack.c.h.b16 %v1024
        %v2116 = vunpack.c.l.b16 %v1025
        %v2117 = vunpack.c.h.b16 %v1025
        %v2118 = vunpack.c.l.b16 %v1026
        %v2119 = vunpack.c.h.b16 %v1026
        %v2120 = vunpack.c.l.b16 %v1027
        %v2121 = vunpack.c.h.b16 %v1027
        %v2122 = vunpack.c.l.b16 %v1028
        %v2123 = vunpack.c.h.b16 %v1028
        %v2124 = vunpack.c.l.b16 %v1029
        %v2125 = vunpack.c.h.b16 %v1029
        %v2126 = vunpack.c.l.b16 %v1030
        %v2127 = vunpack.c.h.b16 %v1030
        %v2128 = vunpack.c.l.b16 %v1031
        %v2129 = vunpack.c.h.b16 %v1031
        %v2130 = vunpack.c.l.b16 %v1032
        %v2131 = vunpack.c.h.b16 %v1032
        %v2132 = vunpack.c.l.b16 %v1033
        %v2133 = vunpack.c.h.b16 %v1033
        %v2134 = vunpack.c.l.b16 %v1034
        %v2135 = vunpack.c.h.b16 %v1034
        %v2136 = vunpack.c.l.b16 %v1035
        %v2137 = vunpack.c.h.b16 %v1035
        %v2138 = vunpack.c.l.b16 %v1036
        %v2139 = vunpack.c.h.b16 %v1036
        %v2140 = vunpack.c.l.b16 %v1037
        %v2141 = vunpack.c.h.b16 %v1037
        %v2142 = vunpack.c.l.b16 %v1038
        %v2143 = vunpack.c.h.b16 %v1038
        %v2144 = vunpack.c.l.b16 %v1039
        %v2145 = vunpack.c.h.b16 %v1039
        %v2146 = vunpack.c.l.b16 %v1040
        %v2147 = vunpack.c.h.b16 %v1040
        %v2148 = vunpack.c.l.b16 %v1041
        %v2149 = vunpack.c.h.b16 %v1041
        %v2150 = vunpack.c.l.b16 %v1042
        %v2151 = vunpack.c.h.b16 %v1042
        %v2152 = vunpack.c.l.b16 %v1043
        %v2153 = vunpack.c.h.b16 %v1043
        %v2154 = vunpack.c.l.b16 %v1044
        %v2155 = vunpack.c.h.b16 %v1044
        %v2156 = vunpack.c.l.b16 %v1045
        %v2157 = vunpack.c.h.b16 %v1045
        %v2158 = vunpack.c.l.b16 %v1046
        %v2159 = vunpack.c.h.b16 %v1046
        %v2160 = vunpack.c.l.b16 %v1047
        %v2161 = vunpack.c.h.b16 %v1047
        %v2162 = vunpack.c.l.b16 %v1048
        %v2163 = vunpack.c.h.b16 %v1048
        %v2164 = vunpack.c.l.b16 %v1049
        %v2165 = vunpack.c.h.b16 %v1049
        %v2166 = vunpack.c.l.b16 %v1050
        %v2167 = vunpack.c.h.b16 %v1050
        %v2168 = vunpack.c.l.b16 %v1051
        %v2169 = vunpack.c.h.b16 %v1051
        %v2170 = vunpack.c.l.b16 %v1052
        %v2171 = vunpack.c.h.b16 %v1052
        %v2172 = vunpack.c.l.b16 %v1053
        %v2173 = vunpack.c.h.b16 %v1053
        %v2174 = vunpack.c.l.b16 %v1054
        %v2175 = vunpack.c.h.b16 %v1054
        %v2176 = vunpack.c.l.b16 %v1055
        %v2177 = vunpack.c.h.b16 %v1055
        %v2178 = vunpack.c.l.b16 %v1056
        %v2179 = vunpack.c.h.b16 %v1056
        %v2180 = vunpack.c.l.b16 %v1057
        %v2181 = vunpack.c.h.b16 %v1057
        %v2182 = vunpack.c.l.b16 %v1058
        %v2183 = vunpack.c.h.b16 %v1058
        %v2184 = vunpack.c.l.b16 %v1059
        %v2185 = vunpack.c.h.b16 %v1059
        %v2186 = vunpack.c.l.b16 %v1060
        %v2187 = vunpack.c.h.b16 %v1060
        %v2188 = vunpack.c.l.b16 %v1061
        %v2189 = vunpack.c.h.b16 %v1061
        %v2190 = vunpack.c.l.b16 %v1062
        %v2191 = vunpack.c.h.b16 %v1062
        %v2192 = vunpack.c.l.b16 %v1063
        %v2193 = vunpack.c.h.b16 %v1063
        %v2194 = vunpack.c.l.b16 %v1064
        %v2195 = vunpack.c.h.b16 %v1064
        %v2196 = vunpack.c.l.b16 %v1065
        %v2197 = vunpack.c.h.b16 %v1065
        %v2198 = vunpack.c.l.b16 %v1066
        %v2199 = vunpack.c.h.b16 %v1066
        %v2200 = vunpack.c.l.b16 %v1067
        %v2201 = vunpack.c.h.b16 %v1067
        %v2202 = vunpack.c.l.b16 %v1068
        %v2203 = vunpack.c.h.b16 %v1068
        %v2204 = vunpack.c.l.b16 %v1069
        %v2205 = vunpack.c.h.b16 %v1069
        %v2206 = vunpack.c.l.b16 %v1070
        %v2207 = vunpack.c.h.b16 %v1070
        %v2208 = vunpack.c.l.b16 %v1071
        %v2209 = vunpack.c.h.b16 %v1071
        %v2210 = vunpack.c.l.b16 %v1072
        %v2211 = vunpack.c.h.b16 %v1072
        %v2212 = vunpack.c.l.b16 %v1073
        %v2213 = vunpack.c.h.b16 %v1073
        %v2214 = vunpack.c.l.b16 %v1074
        %v2215 = vunpack.c.h.b16 %v1074
        %v2216 = vunpack.c.l.b16 %v1075
        %v2217 = vunpack.c.h.b16 %v1075
        %v2218 = vunpack.c.l.b16 %v1076
        %v2219 = vunpack.c.h.b16 %v1076
        %v2220 = vunpack.c.l.b16 %v1077
        %v2221 = vunpack.c.h.b16 %v1077
        %v2222 = vunpack.c.l.b16 %v1078
        %v2223 = vunpack.c.h.b16 %v1078
        %v2224 = vunpack.c.l.b16 %v1079
        %v2225 = vunpack.c.h.b16 %v1079
        %v2226 = vunpack.c.l.b16 %v1080
        %v2227 = vunpack.c.h.b16 %v1080
        %v2228 = vunpack.c.l.b16 %v1081
        %v2229 = vunpack.c.h.b16 %v1081
        %v2230 = vunpack.c.l.b16 %v1082
        %v2231 = vunpack.c.h.b16 %v1082
        %v2232 = vunpack.c.l.b16 %v1083
        %v2233 = vunpack.c.h.b16 %v1083
        %v2234 = vunpack.c.l.b16 %v1084
        %v2235 = vunpack.c.h.b16 %v1084
        %v2236 = vunpack.c.l.b16 %v1085
        %v2237 = vunpack.c.h.b16 %v1085
        %v2238 = vunpack.c.l.b16 %v1086
        %v2239 = vunpack.c.h.b16 %v1086
        %v2240 = vunpack.c.l.b16 %v1087
        %v2241 = vunpack.c.h.b16 %v1087
        %v2242 = vunpack.c.l.b16 %v1088
        %v2243 = vunpack.c.h.b16 %v1088
        %v2244 = vunpack.c.l.b16 %v1089
        %v2245 = vunpack.c.h.b16 %v1089
        %v2246 = vunpack.c.l.b16 %v1090
        %v2247 = vunpack.c.h.b16 %v1090
        %v2248 = vunpack.c.l.b16 %v1091
        %v2249 = vunpack.c.h.b16 %v1091
        %v2250 = vunpack.c.l.b16 %v1092
        %v2251 = vunpack.c.h.b16 %v1092
        %v2252 = vunpack.c.l.b16 %v1093
        %v2253 = vunpack.c.h.b16 %v1093
        %v2254 = vunpack.c.l.b16 %v1094
        %v2255 = vunpack.c.h.b16 %v1094
        %v2256 = vunpack.c.l.b16 %v1095
        %v2257 = vunpack.c.h.b16 %v1095
        %v2258 = vunpack.c.l.b16 %v1096
        %v2259 = vunpack.c.h.b16 %v1096
        %v2260 = vunpack.c.l.b16 %v1097
        %v2261 = vunpack.c.h.b16 %v1097
        %v2262 = vunpack.c.l.b16 %v1098
        %v2263 = vunpack.c.h.b16 %v1098
        %v2264 = vunpack.c.l.b16 %v1099
        %v2265 = vunpack.c.h.b16 %v1099
        %v2266 = vunpack.c.l.b16 %v1100
        %v2267 = vunpack.c.h.b16 %v1100
        %v2268 = vunpack.c.l.b16 %v1101
        %v2269 = vunpack.c.h.b16 %v1101
        %v2270 = vunpack.c.l.b16 %v1102
        %v2271 = vunpack.c.h.b16 %v1102
        %v2272 = vunpack.c.l.b16 %v1103
        %v2273 = vunpack.c.h.b16 %v1103
        %v2274 = vunpack.c.l.b16 %v1104
        %v2275 = vunpack.c.h.b16 %v1104
        %v2276 = vunpack.c.l.b16 %v1105
        %v2277 = vunpack.c.h.b16 %v1105
        %v2278 = vunpack.c.l.b16 %v1106
        %v2279 = vunpack.c.h.b16 %v1106
        %v2280 = vunpack.c.l.b16 %v1107
        %v2281 = vunpack.c.h.b16 %v1107
        %v2282 = vunpack.c.l.b16 %v1108
        %v2283 = vunpack.c.h.b16 %v1108
        %v2284 = vunpack.c.l.b16 %v1109
        %v2285 = vunpack.c.h.b16 %v1109
        %v2286 = vunpack.c.l.b16 %v1110
        %v2287 = vunpack.c.h.b16 %v1110
        %v2288 = vunpack.c.l.b16 %v1111
        %v2289 = vunpack.c.h.b16 %v1111
        %v2290 = vunpack.c.l.b16 %v1112
        %v2291 = vunpack.c.h.b16 %v1112
        %v2292 = vunpack.c.l.b16 %v1113
        %v2293 = vunpack.c.h.b16 %v1113
        %v2294 = vunpack.c.l.b16 %v1114
        %v2295 = vunpack.c.h.b16 %v1114
        %v2296 = vunpack.c.l.b16 %v1115
        %v2297 = vunpack.c.h.b16 %v1115
        %v2298 = vunpack.c.l.b16 %v1116
        %v2299 = vunpack.c.h.b16 %v1116
        %v2300 = vunpack.c.l.b16 %v1117
        %v2301 = vunpack.c.h.b16 %v1117
        %v2302 = vunpack.c.l.b16 %v1118
        %v2303 = vunpack.c.h.b16 %v1118
        %v2304 = vunpack.c.l.b16 %v1119
        %v2305 = vunpack.c.h.b16 %v1119
        %v2306 = vunpack.c.l.b16 %v1120
        %v2307 = vunpack.c.h.b16 %v1120
        %v2308 = vunpack.c.l.b16 %v1121
        %v2309 = vunpack.c.h.b16 %v1121
        %v2310 = vunpack.c.l.b16 %v1122
        %v2311 = vunpack.c.h.b16 %v1122
        %v2312 = vunpack.c.l.b16 %v1123
        %v2313 = vunpack.c.h.b16 %v1123
        %v2314 = vunpack.c.l.b16 %v1124
        %v2315 = vunpack.c.h.b16 %v1124
        %v2316 = vunpack.c.l.b16 %v1125
        %v2317 = vunpack.c.h.b16 %v1125
        %v2318 = vunpack.c.l.b16 %v1126
        %v2319 = vunpack.c.h.b16 %v1126
        %v2320 = vunpack.c.l.b16 %v1127
        %v2321 = vunpack.c.h.b16 %v1127
        %v2322 = vunpack.c.l.b16 %v1128
        %v2323 = vunpack.c.h.b16 %v1128
        %v2324 = vunpack.c.l.b16 %v1129
        %v2325 = vunpack.c.h.b16 %v1129
        %v2326 = vunpack.c.l.b16 %v1130
        %v2327 = vunpack.c.h.b16 %v1130
        %v2328 = vunpack.c.l.b16 %v1131
        %v2329 = vunpack.c.h.b16 %v1131
        %v2330 = vunpack.c.l.b16 %v1132
        %v2331 = vunpack.c.h.b16 %v1132
        %v2332 = vunpack.c.l.b16 %v1133
        %v2333 = vunpack.c.h.b16 %v1133
        %v2334 = vunpack.c.l.b16 %v1134
        %v2335 = vunpack.c.h.b16 %v1134
        %v2336 = vunpack.c.l.b16 %v1135
        %v2337 = vunpack.c.h.b16 %v1135
        %v2338 = vunpack.c.l.b16 %v1136
        %v2339 = vunpack.c.h.b16 %v1136
        %v2340 = vunpack.c.l.b16 %v1137
        %v2341 = vunpack.c.h.b16 %v1137
        %v2342 = vunpack.c.l.b16 %v1138
        %v2343 = vunpack.c.h.b16 %v1138
        %v2344 = vunpack.c.l.b16 %v1139
        %v2345 = vunpack.c.h.b16 %v1139
        %v2346 = vunpack.c.l.b16 %v1140
        %v2347 = vunpack.c.h.b16 %v1140
        %v2348 = vunpack.c.l.b16 %v1141
        %v2349 = vunpack.c.h.b16 %v1141
        %v2350 = vunpack.c.l.b16 %v1142
        %v2351 = vunpack.c.h.b16 %v1142
        %v2352 = vunpack.c.l.b16 %v1143
        %v2353 = vunpack.c.h.b16 %v1143
        %v2354 = vunpack.c.l.b16 %v1144
        %v2355 = vunpack.c.h.b16 %v1144
        %v2356 = vunpack.c.l.b16 %v1145
        %v2357 = vunpack.c.h.b16 %v1145
        %v2358 = vunpack.c.l.b16 %v1146
        %v2359 = vunpack.c.h.b16 %v1146
        %v2360 = vunpack.c.l.b16 %v1147
        %v2361 = vunpack.c.h.b16 %v1147
        %v2362 = vunpack.c.l.b16 %v1148
        %v2363 = vunpack.c.h.b16 %v1148
        %v2364 = vunpack.c.l.b16 %v1149
        %v2365 = vunpack.c.h.b16 %v1149
        %v2366 = vunpack.c.l.b16 %v1150
        %v2367 = vunpack.c.h.b16 %v1150
        %v2368 = vunpack.c.l.b16 %v1151
        %v2369 = vunpack.c.h.b16 %v1151
        %v2370 = vunpack.c.l.b16 %v1152
        %v2371 = vunpack.c.h.b16 %v1152
        %v2372 = vunpack.c.l.b16 %v1153
        %v2373 = vunpack.c.h.b16 %v1153
        %v2374 = vunpack.c.l.b16 %v1154
        %v2375 = vunpack.c.h.b16 %v1154
        %v2376 = vunpack.c.l.b16 %v1155
        %v2377 = vunpack.c.h.b16 %v1155
        %v2378 = vunpack.c.l.b16 %v1156
        %v2379 = vunpack.c.h.b16 %v1156
        %v2380 = vunpack.c.l.b16 %v1157
        %v2381 = vunpack.c.h.b16 %v1157
        %v2382 = vunpack.c.l.b16 %v1158
        %v2383 = vunpack.c.h.b16 %v1158
        %v2384 = vunpack.c.l.b16 %v1159
        %v2385 = vunpack.c.h.b16 %v1159
        %v2386 = vunpack.c.l.b16 %v1160
        %v2387 = vunpack.c.h.b16 %v1160
        %v2388 = vunpack.c.l.b16 %v1161
        %v2389 = vunpack.c.h.b16 %v1161
        %v2390 = vunpack.c.l.b16 %v1162
        %v2391 = vunpack.c.h.b16 %v1162
        %v2392 = vunpack.c.l.b16 %v1163
        %v2393 = vunpack.c.h.b16 %v1163
        %v2394 = vunpack.c.l.b16 %v1164
        %v2395 = vunpack.c.h.b16 %v1164
        %v2396 = vunpack.c.l.b16 %v1165
        %v2397 = vunpack.c.h.b16 %v1165
        %v2398 = vunpack.c.l.b16 %v1166
        %v2399 = vunpack.c.h.b16 %v1166
        %v2400 = vunpack.c.l.b16 %v1167
        %v2401 = vunpack.c.h.b16 %v1167
        %v2402 = vunpack.c.l.b16 %v1168
        %v2403 = vunpack.c.h.b16 %v1168
        %v2404 = vunpack.c.l.b16 %v1169
        %v2405 = vunpack.c.h.b16 %v1169
        %v2406 = vunpack.c.l.b16 %v1170
        %v2407 = vunpack.c.h.b16 %v1170
        %v2408 = vunpack.c.l.b16 %v1171
        %v2409 = vunpack.c.h.b16 %v1171
        %v2410 = vunpack.c.l.b16 %v1172
        %v2411 = vunpack.c.h.b16 %v1172
        %v2412 = vunpack.c.l.b16 %v1173
        %v2413 = vunpack.c.h.b16 %v1173
        %v2414 = vunpack.c.l.b16 %v1174
        %v2415 = vunpack.c.h.b16 %v1174
        %v2416 = vunpack.c.l.b16 %v1175
        %v2417 = vunpack.c.h.b16 %v1175
        %v2418 = vunpack.c.l.b16 %v1176
        %v2419 = vunpack.c.h.b16 %v1176
        %v2420 = vunpack.c.l.b16 %v1177
        %v2421 = vunpack.c.h.b16 %v1177
        %v2422 = vunpack.c.l.b16 %v1178
        %v2423 = vunpack.c.h.b16 %v1178
        %v2424 = vunpack.c.l.b16 %v1179
        %v2425 = vunpack.c.h.b16 %v1179
        %v2426 = vunpack.c.l.b16 %v1180
        %v2427 = vunpack.c.h.b16 %v1180
        %v2428 = vunpack.c.l.b16 %v1181
        %v2429 = vunpack.c.h.b16 %v1181
        %v2430 = vunpack.c.l.b16 %v1182
        %v2431 = vunpack.c.h.b16 %v1182
        %v2432 = vunpack.c.l.b16 %v1183
        %v2433 = vunpack.c.h.b16 %v1183
        %v2434 = vunpack.c.l.b16 %v1184
        %v2435 = vunpack.c.h.b16 %v1184
        %v2436 = vunpack.c.l.b16 %v1185
        %v2437 = vunpack.c.h.b16 %v1185
        %v2438 = vunpack.c.l.b16 %v1186
        %v2439 = vunpack.c.h.b16 %v1186
        %v2440 = vunpack.c.l.b16 %v1187
        %v2441 = vunpack.c.h.b16 %v1187
        %v2442 = vunpack.c.l.b16 %v1188
        %v2443 = vunpack.c.h.b16 %v1188
        %v2444 = vunpack.c.l.b16 %v1189
        %v2445 = vunpack.c.h.b16 %v1189
        %v2446 = vunpack.c.l.b16 %v1190
        %v2447 = vunpack.c.h.b16 %v1190
        %v2448 = vunpack.c.l.b16 %v1191
        %v2449 = vunpack.c.h.b16 %v1191
        %v2450 = vunpack.c.l.b16 %v1192
        %v2451 = vunpack.c.h.b16 %v1192
        %v2452 = vunpack.c.l.b16 %v1193
        %v2453 = vunpack.c.h.b16 %v1193
        %v2454 = vunpack.c.l.b16 %v1194
        %v2455 = vunpack.c.h.b16 %v1194
        %v2456 = vunpack.c.l.b16 %v1195
        %v2457 = vunpack.c.h.b16 %v1195
        %v2458 = vunpack.c.l.b16 %v1196
        %v2459 = vunpack.c.h.b16 %v1196
        %v2460 = vunpack.c.l.b16 %v1197
        %v2461 = vunpack.c.h.b16 %v1197
        %v2462 = vunpack.c.l.b16 %v1198
        %v2463 = vunpack.c.h.b16 %v1198
        %v2464 = vunpack.c.l.b16 %v1199
        %v2465 = vunpack.c.h.b16 %v1199
        %v2466 = vunpack.c.l.b16 %v1200
        %v2467 = vunpack.c.h.b16 %v1200
        %v2468 = vunpack.c.l.b16 %v1201
        %v2469 = vunpack.c.h.b16 %v1201
        %v2470 = vunpack.c.l.b16 %v1202
        %v2471 = vunpack.c.h.b16 %v1202
        %v2472 = vunpack.c.l.b16 %v1203
        %v2473 = vunpack.c.h.b16 %v1203
        %v2474 = vunpack.c.l.b16 %v1204
        %v2475 = vunpack.c.h.b16 %v1204
        %v2476 = vunpack.c.l.b16 %v1205
        %v2477 = vunpack.c.h.b16 %v1205
        %v2478 = vunpack.c.l.b16 %v1206
        %v2479 = vunpack.c.h.b16 %v1206
        %v2480 = vunpack.c.l.b16 %v1207
        %v2481 = vunpack.c.h.b16 %v1207
        %v2482 = vunpack.c.l.b16 %v1208
        %v2483 = vunpack.c.h.b16 %v1208
        %v2484 = vunpack.c.l.b16 %v1209
        %v2485 = vunpack.c.h.b16 %v1209
        %v2486 = vunpack.c.l.b16 %v1210
        %v2487 = vunpack.c.h.b16 %v1210
        %v2488 = vunpack.c.l.b16 %v1211
        %v2489 = vunpack.c.h.b16 %v1211
        %v2490 = vpack.c.b16 %v1746, %v1722
        %v2491 = vpack.c.b16 %v1747, %v1723
        %v2492 = vpack.c.b16 %v1748, %v1724
        %v2493 = vpack.c.b16 %v1749, %v1725
        %v2494 = vpack.c.b16 %v1750, %v1726
        %v2495 = vpack.c.b16 %v1751, %v1727
        %v2496 = vpack.c.b16 %v1752, %v1728
        %v2497 = vpack.c.b16 %v1753, %v1729
        %v2498 = vpack.c.b16 %v1754, %v1730
        %v2499 = vpack.c.b16 %v1755, %v1731
        %v2500 = vpack.c.b16 %v1756, %v1732
        %v2501 = vpack.c.b16 %v1757, %v1733
        %v2502 = vpack.c.b16 %v1758, %v1734
        %v2503 = vpack.c.b16 %v1759, %v1735
        %v2504 = vpack.c.b16 %v1760, %v1736
        %v2505 = vpack.c.b16 %v1761, %v1737
        %v2506 = vpack.c.b16 %v1762, %v1738
        %v2507 = vpack.c.b16 %v1763, %v1739
        %v2508 = vpack.c.b16 %v1764, %v1740
        %v2509 = vpack.c.b16 %v1765, %v1741
        %v2510 = vpack.c.b16 %v1766, %v1742
        %v2511 = vpack.c.b16 %v1767, %v1743
        %v2512 = vpack.c.b16 %v1768, %v1744
        %v2513 = vpack.c.b16 %v1769, %v1745
        %v2514 = vpack.c.b16 %v1794, %v1770
        %v2515 = vpack.c.b16 %v1795, %v1771
        %v2516 = vpack.c.b16 %v1796, %v1772
        %v2517 = vpack.c.b16 %v1797, %v1773
        %v2518 = vpack.c.b16 %v1798, %v1774
        %v2519 = vpack.c.b16 %v1799, %v1775
        %v2520 = vpack.c.b16 %v1800, %v1776
        %v2521 = vpack.c.b16 %v1801, %v1777
        %v2522 = vpack.c.b16 %v1802, %v1778
        %v2523 = vpack.c.b16 %v1803, %v1779
        %v2524 = vpack.c.b16 %v1804, %v1780
        %v2525 = vpack.c.b16 %v1805, %v1781
        %v2526 = vpack.c.b16 %v1806, %v1782
        %v2527 = vpack.c.b16 %v1807, %v1783
        %v2528 = vpack.c.b16 %v1808, %v1784
        %v2529 = vpack.c.b16 %v1809, %v1785
        %v2530 = vpack.c.b16 %v1810, %v1786
        %v2531 = vpack.c.b16 %v1811, %v1787
        %v2532 = vpack.c.b16 %v1812, %v1788
        %v2533 = vpack.c.b16 %v1813, %v1789
        %v2534 = vpack.c.b16 %v1814, %v1790
        %v2535 = vpack.c.b16 %v1815, %v1791
        %v2536 = vpack.c.b16 %v1816, %v1792
        %v2537 = vpack.c.b16 %v1817, %v1793
        %v2538 = vpack.c.b16 %v1842, %v1818
        %v2539 = vpack.c.b16 %v1843, %v1819
        %v2540 = vpack.c.b16 %v1844, %v1820
        %v2541 = vpack.c.b16 %v1845, %v1821
        %v2542 = vpack.c.b16 %v1846, %v1822
        %v2543 = vpack.c.b16 %v1847, %v1823
        %v2544 = vpack.c.b16 %v1848, %v1824
        %v2545 = vpack.c.b16 %v1849, %v1825
        %v2546 = vpack.c.b16 %v1850, %v1826
        %v2547 = vpack.c.b16 %v1851, %v1827
        %v2548 = vpack.c.b16 %v1852, %v1828
        %v2549 = vpack.c.b16 %v1853, %v1829
        %v2550 = vpack.c.b16 %v1854, %v1830
        %v2551 = vpack.c.b16 %v1855, %v1831
        %v2552 = vpack.c.b16 %v1856, %v1832
        %v2553 = vpack.c.b16 %v1857, %v1833
        %v2554 = vpack.c.b16 %v1858, %v1834
        %v2555 = vpack.c.b16 %v1859, %v1835
        %v2556 = vpack.c.b16 %v1860, %v1836
        %v2557 = vpack.c.b16 %v1861, %v1837
        %v2558 = vpack.c.b16 %v1862, %v1838
        %v2559 = vpack.c.b16 %v1863, %v1839
        %v2560 = vpack.c.b16 %v1864, %v1840
        %v2561 = vpack.c.b16 %v1865, %v1841
        %v2562 = vpack.c.b16 %v1890, %v1866
        %v2563 = vpack.c.b16 %v1891, %v1867
        %v2564 = vpack.c.b16 %v1892, %v1868
        %v2565 = vpack.c.b16 %v1893, %v1869
        %v2566 = vpack.c.b16 %v1894, %v1870
        %v2567 = vpack.c.b16 %v1895, %v1871
        %v2568 = vpack.c.b16 %v1896, %v1872
        %v2569 = vpack.c.b16 %v1897, %v1873
        %v2570 = vpack.c.b16 %v1898, %v1874
        %v2571 = vpack.c.b16 %v1899, %v1875
        %v2572 = vpack.c.b16 %v1900, %v1876
        %v2573 = vpack.c.b16 %v1901, %v1877
        %v2574 = vpack.c.b16 %v1902, %v1878
        %v2575 = vpack.c.b16 %v1903, %v1879
        %v2576 = vpack.c.b16 %v1904, %v1880
        %v2577 = vpack.c.b16 %v1905, %v1881
        %v2578 = vpack.c.b16 %v1906, %v1882
        %v2579 = vpack.c.b16 %v1907, %v1883
        %v2580 = vpack.c.b16 %v1908, %v1884
        %v2581 = vpack.c.b16 %v1909, %v1885
        %v2582 = vpack.c.b16 %v1910, %v1886
        %v2583 = vpack.c.b16 %v1911, %v1887
        %v2584 = vpack.c.b16 %v1912, %v1888
        %v2585 = vpack.c.b16 %v1913, %v1889
        %v2586 = vpack.c.b16 %v1938, %v1914
        %v2587 = vpack.c.b16 %v1939, %v1915
        %v2588 = vpack.c.b16 %v1940, %v1916
        %v2589 = vpack.c.b16 %v1941, %v1917
        %v2590 = vpack.c.b16 %v1942, %v1918
        %v2591 = vpack.c.b16 %v1943, %v1919
        %v2592 = vpack.c.b16 %v1944, %v1920
        %v2593 = vpack.c.b16 %v1945, %v1921
        %v2594 = vpack.c.b16 %v1946, %v1922
        %v2595 = vpack.c.b16 %v1947, %v1923
        %v2596 = vpack.c.b16 %v1948, %v1924
        %v2597 = vpack.c.b16 %v1949, %v1925
        %v2598 = vpack.c.b16 %v1950, %v1926
        %v2599 = vpack.c.b16 %v1951, %v1927
        %v2600 = vpack.c.b16 %v1952, %v1928
        %v2601 = vpack.c.b16 %v1953, %v1929
        %v2602 = vpack.c.b16 %v1954, %v1930
        %v2603 = vpack.c.b16 %v1955, %v1931
        %v2604 = vpack.c.b16 %v1956, %v1932
        %v2605 = vpack.c.b16 %v1957, %v1933
        %v2606 = vpack.c.b16 %v1958, %v1934
        %v2607 = vpack.c.b16 %v1959, %v1935
        %v2608 = vpack.c.b16 %v1960, %v1936
        %v2609 = vpack.c.b16 %v1961, %v1937
        %v2610 = vpack.c.b16 %v1986, %v1962
        %v2611 = vpack.c.b16 %v1987, %v1963
        %v2612 = vpack.c.b16 %v1988, %v1964
        %v2613 = vpack.c.b16 %v1989, %v1965
        %v2614 = vpack.c.b16 %v1990, %v1966
        %v2615 = vpack.c.b16 %v1991, %v1967
        %v2616 = vpack.c.b16 %v1992, %v1968
        %v2617 = vpack.c.b16 %v1993, %v1969
        %v2618 = vpack.c.b16 %v1994, %v1970
        %v2619 = vpack.c.b16 %v1995, %v1971
        %v2620 = vpack.c.b16 %v1996, %v1972
        %v2621 = vpack.c.b16 %v1997, %v1973
        %v2622 = vpack.c.b16 %v1998, %v1974
        %v2623 = vpack.c.b16 %v1999, %v1975
        %v2624 = vpack.c.b16 %v2000, %v1976
        %v2625 = vpack.c.b16 %v2001, %v1977
        %v2626 = vpack.c.b16 %v2002, %v1978
        %v2627 = vpack.c.b16 %v2003, %v1979
        %v2628 = vpack.c.b16 %v2004, %v1980
        %v2629 = vpack.c.b16 %v2005, %v1981
        %v2630 = vpack.c.b16 %v2006, %v1982
        %v2631 = vpack.c.b16 %v2007, %v1983
        %v2632 = vpack.c.b16 %v2008, %v1984
        %v2633 = vpack.c.b16 %v2009, %v1985
        %v2634 = vpack.c.b16 %v2034, %v2010
        %v2635 = vpack.c.b16 %v2035, %v2011
        %v2636 = vpack.c.b16 %v2036, %v2012
        %v2637 = vpack.c.b16 %v2037, %v2013
        %v2638 = vpack.c.b16 %v2038, %v2014
        %v2639 = vpack.c.b16 %v2039, %v2015
        %v2640 = vpack.c.b16 %v2040, %v2016
        %v2641 = vpack.c.b16 %v2041, %v2017
        %v2642 = vpack.c.b16 %v2042, %v2018
        %v2643 = vpack.c.b16 %v2043, %v2019
        %v2644 = vpack.c.b16 %v2044, %v2020
        %v2645 = vpack.c.b16 %v2045, %v2021
        %v2646 = vpack.c.b16 %v2046, %v2022
        %v2647 = vpack.c.b16 %v2047, %v2023
        %v2648 = vpack.c.b16 %v2048, %v2024
        %v2649 = vpack.c.b16 %v2049, %v2025
        %v2650 = vpack.c.b16 %v2050, %v2026
        %v2651 = vpack.c.b16 %v2051, %v2027
        %v2652 = vpack.c.b16 %v2052, %v2028
        %v2653 = vpack.c.b16 %v2053, %v2029
        %v2654 = vpack.c.b16 %v2054, %v2030
        %v2655 = vpack.c.b16 %v2055, %v2031
        %v2656 = vpack.c.b16 %v2056, %v2032
        %v2657 = vpack.c.b16 %v2057, %v2033
        %v2658 = vpack.c.b16 %v2082, %v2058
        %v2659 = vpack.c.b16 %v2083, %v2059
        %v2660 = vpack.c.b16 %v2084, %v2060
        %v2661 = vpack.c.b16 %v2085, %v2061
        %v2662 = vpack.c.b16 %v2086, %v2062
        %v2663 = vpack.c.b16 %v2087, %v2063
        %v2664 = vpack.c.b16 %v2088, %v2064
        %v2665 = vpack.c.b16 %v2089, %v2065
        %v2666 = vpack.c.b16 %v2090, %v2066
        %v2667 = vpack.c.b16 %v2091, %v2067
        %v2668 = vpack.c.b16 %v2092, %v2068
        %v2669 = vpack.c.b16 %v2093, %v2069
        %v2670 = vpack.c.b16 %v2094, %v2070
        %v2671 = vpack.c.b16 %v2095, %v2071
        %v2672 = vpack.c.b16 %v2096, %v2072
        %v2673 = vpack.c.b16 %v2097, %v2073
        %v2674 = vpack.c.b16 %v2098, %v2074
        %v2675 = vpack.c.b16 %v2099, %v2075
        %v2676 = vpack.c.b16 %v2100, %v2076
        %v2677 = vpack.c.b16 %v2101, %v2077
        %v2678 = vpack.c.b16 %v2102, %v2078
        %v2679 = vpack.c.b16 %v2103, %v2079
        %v2680 = vpack.c.b16 %v2104, %v2080
        %v2681 = vpack.c.b16 %v2105, %v2081
        %v2682 = vpack.c.b16 %v2130, %v2106
        %v2683 = vpack.c.b16 %v2131, %v2107
        %v2684 = vpack.c.b16 %v2132, %v2108
        %v2685 = vpack.c.b16 %v2133, %v2109
        %v2686 = vpack.c.b16 %v2134, %v2110
        %v2687 = vpack.c.b16 %v2135, %v2111
        %v2688 = vpack.c.b16 %v2136, %v2112
        %v2689 = vpack.c.b16 %v2137, %v2113
        %v2690 = vpack.c.b16 %v2138, %v2114
        %v2691 = vpack.c.b16 %v2139, %v2115
        %v2692 = vpack.c.b16 %v2140, %v2116
        %v2693 = vpack.c.b16 %v2141, %v2117
        %v2694 = vpack.c.b16 %v2142, %v2118
        %v2695 = vpack.c.b16 %v2143, %v2119
        %v2696 = vpack.c.b16 %v2144, %v2120
        %v2697 = vpack.c.b16 %v2145, %v2121
        %v2698 = vpack.c.b16 %v2146, %v2122
        %v2699 = vpack.c.b16 %v2147, %v2123
        %v2700 = vpack.c.b16 %v2148, %v2124
        %v2701 = vpack.c.b16 %v2149, %v2125
        %v2702 = vpack.c.b16 %v2150, %v2126
        %v2703 = vpack.c.b16 %v2151, %v2127
        %v2704 = vpack.c.b16 %v2152, %v2128
        %v2705 = vpack.c.b16 %v2153, %v2129
        %v2706 = vpack.c.b16 %v2178, %v2154
        %v2707 = vpack.c.b16 %v2179, %v2155
        %v2708 = vpack.c.b16 %v2180, %v2156
        %v2709 = vpack.c.b16 %v2181, %v2157
        %v2710 = vpack.c.b16 %v2182, %v2158
        %v2711 = vpack.c.b16 %v2183, %v2159
        %v2712 = vpack.c.b16 %v2184, %v2160
        %v2713 = vpack.c.b16 %v2185, %v2161
        %v2714 = vpack.c.b16 %v2186, %v2162
        %v2715 = vpack.c.b16 %v2187, %v2163
        %v2716 = vpack.c.b16 %v2188, %v2164
        %v2717 = vpack.c.b16 %v2189, %v2165
        %v2718 = vpack.c.b16 %v2190, %v2166
        %v2719 = vpack.c.b16 %v2191, %v2167
        %v2720 = vpack.c.b16 %v2192, %v2168
        %v2721 = vpack.c.b16 %v2193, %v2169
        %v2722 = vpack.c.b16 %v2194, %v2170
        %v2723 = vpack.c.b16 %v2195, %v2171
        %v2724 = vpack.c.b16 %v2196, %v2172
        %v2725 = vpack.c.b16 %v2197, %v2173
        %v2726 = vpack.c.b16 %v2198, %v2174
        %v2727 = vpack.c.b16 %v2199, %v2175
        %v2728 = vpack.c.b16 %v2200, %v2176
        %v2729 = vpack.c.b16 %v2201, %v2177
        %v2730 = vpack.c.b16 %v2226, %v2202
        %v2731 = vpack.c.b16 %v2227, %v2203
        %v2732 = vpack.c.b16 %v2228, %v2204
        %v2733 = vpack.c.b16 %v2229, %v2205
        %v2734 = vpack.c.b16 %v2230, %v2206
        %v2735 = vpack.c.b16 %v2231, %v2207
        %v2736 = vpack.c.b16 %v2232, %v2208
        %v2737 = vpack.c.b16 %v2233, %v2209
        %v2738 = vpack.c.b16 %v2234, %v2210
        %v2739 = vpack.c.b16 %v2235, %v2211
        %v2740 = vpack.c.b16 %v2236, %v2212
        %v2741 = vpack.c.b16 %v2237, %v2213
        %v2742 = vpack.c.b16 %v2238, %v2214
        %v2743 = vpack.c.b16 %v2239, %v2215
        %v2744 = vpack.c.b16 %v2240, %v2216
        %v2745 = vpack.c.b16 %v2241, %v2217
        %v2746 = vpack.c.b16 %v2242, %v2218
        %v2747 = vpack.c.b16 %v2243, %v2219
        %v2748 = vpack.c.b16 %v2244, %v2220
        %v2749 = vpack.c.b16 %v2245, %v2221
        %v2750 = vpack.c.b16 %v2246, %v2222
        %v2751 = vpack.c.b16 %v2247, %v2223
        %v2752 = vpack.c.b16 %v2248, %v2224
        %v2753 = vpack.c.b16 %v2249, %v2225
        %v2754 = vpack.c.b16 %v2274, %v2250
        %v2755 = vpack.c.b16 %v2275, %v2251
        %v2756 = vpack.c.b16 %v2276, %v2252
        %v2757 = vpack.c.b16 %v2277, %v2253
        %v2758 = vpack.c.b16 %v2278, %v2254
        %v2759 = vpack.c.b16 %v2279, %v2255
        %v2760 = vpack.c.b16 %v2280, %v2256
        %v2761 = vpack.c.b16 %v2281, %v2257
        %v2762 = vpack.c.b16 %v2282, %v2258
        %v2763 = vpack.c.b16 %v2283, %v2259
        %v2764 = vpack.c.b16 %v2284, %v2260
        %v2765 = vpack.c.b16 %v2285, %v2261
        %v2766 = vpack.c.b16 %v2286, %v2262
        %v2767 = vpack.c.b16 %v2287, %v2263
        %v2768 = vpack.c.b16 %v2288, %v2264
        %v2769 = vpack.c.b16 %v2289, %v2265
        %v2770 = vpack.c.b16 %v2290, %v2266
        %v2771 = vpack.c.b16 %v2291, %v2267
        %v2772 = vpack.c.b16 %v2292, %v2268
        %v2773 = vpack.c.b16 %v2293, %v2269
        %v2774 = vpack.c.b16 %v2294, %v2270
        %v2775 = vpack.c.b16 %v2295, %v2271
        %v2776 = vpack.c.b16 %v2296, %v2272
        %v2777 = vpack.c.b16 %v2297, %v2273
        %v2778 = vpack.c.b16 %v2322, %v2298
        %v2779 = vpack.c.b16 %v2323, %v2299
        %v2780 = vpack.c.b16 %v2324, %v2300
        %v2781 = vpack.c.b16 %v2325, %v2301
        %v2782 = vpack.c.b16 %v2326, %v2302
        %v2783 = vpack.c.b16 %v2327, %v2303
        %v2784 = vpack.c.b16 %v2328, %v2304
        %v2785 = vpack.c.b16 %v2329, %v2305
        %v2786 = vpack.c.b16 %v2330, %v2306
        %v2787 = vpack.c.b16 %v2331, %v2307
        %v2788 = vpack.c.b16 %v2332, %v2308
        %v2789 = vpack.c.b16 %v2333, %v2309
        %v2790 = vpack.c.b16 %v2334, %v2310
        %v2791 = vpack.c.b16 %v2335, %v2311
        %v2792 = vpack.c.b16 %v2336, %v2312
        %v2793 = vpack.c.b16 %v2337, %v2313
        %v2794 = vpack.c.b16 %v2338, %v2314
        %v2795 = vpack.c.b16 %v2339, %v2315
        %v2796 = vpack.c.b16 %v2340, %v2316
        %v2797 = vpack.c.b16 %v2341, %v2317
        %v2798 = vpack.c.b16 %v2342, %v2318
        %v2799 = vpack.c.b16 %v2343, %v2319
        %v2800 = vpack.c.b16 %v2344, %v2320
        %v2801 = vpack.c.b16 %v2345, %v2321
        %v2802 = vpack.c.b16 %v2370, %v2346
        %v2803 = vpack.c.b16 %v2371, %v2347
        %v2804 = vpack.c.b16 %v2372, %v2348
        %v2805 = vpack.c.b16 %v2373, %v2349
        %v2806 = vpack.c.b16 %v2374, %v2350
        %v2807 = vpack.c.b16 %v2375, %v2351
        %v2808 = vpack.c.b16 %v2376, %v2352
        %v2809 = vpack.c.b16 %v2377, %v2353
        %v2810 = vpack.c.b16 %v2378, %v2354
        %v2811 = vpack.c.b16 %v2379, %v2355
        %v2812 = vpack.c.b16 %v2380, %v2356
        %v2813 = vpack.c.b16 %v2381, %v2357
        %v2814 = vpack.c.b16 %v2382, %v2358
        %v2815 = vpack.c.b16 %v2383, %v2359
        %v2816 = vpack.c.b16 %v2384, %v2360
        %v2817 = vpack.c.b16 %v2385, %v2361
        %v2818 = vpack.c.b16 %v2386, %v2362
        %v2819 = vpack.c.b16 %v2387, %v2363
        %v2820 = vpack.c.b16 %v2388, %v2364
        %v2821 = vpack.c.b16 %v2389, %v2365
        %v2822 = vpack.c.b16 %v2390, %v2366
        %v2823 = vpack.c.b16 %v2391, %v2367
        %v2824 = vpack.c.b16 %v2392, %v2368
        %v2825 = vpack.c.b16 %v2393, %v2369
        %v2826 = vpack.c.b16 %v2418, %v2394
        %v2827 = vpack.c.b16 %v2419, %v2395
        %v2828 = vpack.c.b16 %v2420, %v2396
        %v2829 = vpack.c.b16 %v2421, %v2397
        %v2830 = vpack.c.b16 %v2422, %v2398
        %v2831 = vpack.c.b16 %v2423, %v2399
        %v2832 = vpack.c.b16 %v2424, %v2400
        %v2833 = vpack.c.b16 %v2425, %v2401
        %v2834 = vpack.c.b16 %v2426, %v2402
        %v2835 = vpack.c.b16 %v2427, %v2403
        %v2836 = vpack.c.b16 %v2428, %v2404
        %v2837 = vpack.c.b16 %v2429, %v2405
        %v2838 = vpack.c.b16 %v2430, %v2406
        %v2839 = vpack.c.b16 %v2431, %v2407
        %v2840 = vpack.c.b16 %v2432, %v2408
        %v2841 = vpack.c.b16 %v2433, %v2409
        %v2842 = vpack.c.b16 %v2434, %v2410
        %v2843 = vpack.c.b16 %v2435, %v2411
        %v2844 = vpack.c.b16 %v2436, %v2412
        %v2845 = vpack.c.b16 %v2437, %v2413
        %v2846 = vpack.c.b16 %v2438, %v2414
        %v2847 = vpack.c.b16 %v2439, %v2415
        %v2848 = vpack.c.b16 %v2440, %v2416
        %v2849 = vpack.c.b16 %v2441, %v2417
        %v2850 = vpack.c.b16 %v2466, %v2442
        %v2851 = vpack.c.b16 %v2467, %v2443
        %v2852 = vpack.c.b16 %v2468, %v2444
        %v2853 = vpack.c.b16 %v2469, %v2445
        %v2854 = vpack.c.b16 %v2470, %v2446
        %v2855 = vpack.c.b16 %v2471, %v2447
        %v2856 = vpack.c.b16 %v2472, %v2448
        %v2857 = vpack.c.b16 %v2473, %v2449
        %v2858 = vpack.c.b16 %v2474, %v2450
        %v2859 = vpack.c.b16 %v2475, %v2451
        %v2860 = vpack.c.b16 %v2476, %v2452
        %v2861 = vpack.c.b16 %v2477, %v2453
        %v2862 = vpack.c.b16 %v2478, %v2454
        %v2863 = vpack.c.b16 %v2479, %v2455
        %v2864 = vpack.c.b16 %v2480, %v2456
        %v2865 = vpack.c.b16 %v2481, %v2457
        %v2866 = vpack.c.b16 %v2482, %v2458
        %v2867 = vpack.c.b16 %v2483, %v2459
        %v2868 = vpack.c.b16 %v2484, %v2460
        %v2869 = vpack.c.b16 %v2485, %v2461
        %v2870 = vpack.c.b16 %v2486, %v2462
        %v2871 = vpack.c.b16 %v2487, %v2463
        %v2872 = vpack.c.b16 %v2488, %v2464
        %v2873 = vpack.c.b16 %v2489, %v2465
        %3258 = vmatprep.subr.bf16.mxu0 %v2659
        %3259 = vmatpush1.bf16.msra.mxu0 %v2658
        %3260 = vmatprep.subr.bf16.mxu0 %v2635
        %3261 = vmatpush1.bf16.msra.mxu0 %v2634
        %3262 = vmatprep.subr.bf16.mxu0 %v2611
        %3263 = vmatpush1.bf16.msra.mxu0 %v2610
        %3264 = vmatprep.subr.bf16.mxu0 %v2587
        %3265 = vmatpush1.bf16.msra.mxu0 %v2586
        %3266 = vmatprep.subr.bf16.mxu0 %v2563
        %3267 = vmatpush1.bf16.msra.mxu0 %v2562
        %3268 = vmatprep.subr.bf16.mxu0 %v2539
        %3269 = vmatpush1.bf16.msra.mxu0 %v2538
        %3270 = vmatprep.subr.bf16.mxu0 %v2515
        %3271 = vmatpush1.bf16.msra.mxu0 %v2514
        %3272 = vmatprep.subr.bf16.mxu0 %v2491
        %3273 = vmatpush1.bf16.msra.mxu0 %v2490
        %3274 = vmatprep.subr.bf16.mxu0 %v2851
        %3275 = vmatpush2.bf16.msra.mxu0 %v2850
        %3276 = vmatprep.subr.bf16.mxu0 %v2827
        %3277 = vmatpush2.bf16.msra.mxu0 %v2826
        %3278 = vmatprep.subr.bf16.mxu0 %v2803
        %3279 = vmatpush2.bf16.msra.mxu0 %v2802
        %3280 = vmatprep.subr.bf16.mxu0 %v2779
        %3281 = vmatpush2.bf16.msra.mxu0 %v2778
        %3282 = vmatprep.subr.bf16.mxu0 %v2755
        %3283 = vmatpush2.bf16.msra.mxu0 %v2754
        %3284 = vmatprep.subr.bf16.mxu0 %v2731
        %3285 = vmatpush2.bf16.msra.mxu0 %v2730
        %3286 = vmatprep.subr.bf16.mxu0 %v2707
        %3287 = vmatpush2.bf16.msra.mxu0 %v2706
        %3288 = vmatprep.subr.bf16.mxu0 %v2683
        %3289 = vmatpush2.bf16.msra.mxu0 %v2682
        %3290 = vmatprep.mubr.bf16.mxu0 %v827
        %3291 = vmatmul.mubr.bf16.gmra.mxu0 %v826
        %v3292 = vpop.f32.mrf.mxu0
        %v3293 = vadd.f32 %v1221, %v3292
        %v3294 = vpop.f32.mrf.mxu0
        %v3295 = vadd.f32 %v1225, %v3294
        %v3296 = vpop.f32.mrf.mxu0
        %v3297 = vpop.f32.mrf.mxu0
        %3298 = vdwg.mxu0
        %3299 = vmatprep.subr.bf16.mxu0 %v2661
        %3300 = vmatpush1.bf16.msra.mxu0 %v2660
        %3301 = vmatprep.subr.bf16.mxu0 %v2637
        %3302 = vmatpush1.bf16.msra.mxu0 %v2636
        %3303 = vmatprep.subr.bf16.mxu0 %v2613
        %3304 = vmatpush1.bf16.msra.mxu0 %v2612
        %3305 = vmatprep.subr.bf16.mxu0 %v2589
        %3306 = vmatpush1.bf16.msra.mxu0 %v2588
        %3307 = vmatprep.subr.bf16.mxu0 %v2565
        %3308 = vmatpush1.bf16.msra.mxu0 %v2564
        %3309 = vmatprep.subr.bf16.mxu0 %v2541
        %3310 = vmatpush1.bf16.msra.mxu0 %v2540
        %3311 = vmatprep.subr.bf16.mxu0 %v2517
        %3312 = vmatpush1.bf16.msra.mxu0 %v2516
        %3313 = vmatprep.subr.bf16.mxu0 %v2493
        %3314 = vmatpush1.bf16.msra.mxu0 %v2492
        %3315 = vmatprep.subr.bf16.mxu0 %v2853
        %3316 = vmatpush2.bf16.msra.mxu0 %v2852
        %3317 = vmatprep.subr.bf16.mxu0 %v2829
        %3318 = vmatpush2.bf16.msra.mxu0 %v2828
        %3319 = vmatprep.subr.bf16.mxu0 %v2805
        %3320 = vmatpush2.bf16.msra.mxu0 %v2804
        %3321 = vmatprep.subr.bf16.mxu0 %v2781
        %3322 = vmatpush2.bf16.msra.mxu0 %v2780
        %3323 = vmatprep.subr.bf16.mxu0 %v2757
        %3324 = vmatpush2.bf16.msra.mxu0 %v2756
        %3325 = vmatprep.subr.bf16.mxu0 %v2733
        %3326 = vmatpush2.bf16.msra.mxu0 %v2732
        %3327 = vmatprep.subr.bf16.mxu0 %v2709
        %3328 = vmatpush2.bf16.msra.mxu0 %v2708
        %3329 = vmatprep.subr.bf16.mxu0 %v2685
        %3330 = vmatpush2.bf16.msra.mxu0 %v2684
        %3331 = vmatprep.mubr.bf16.mxu0 %v827
        %3332 = vmatmul.mubr.bf16.gmra.mxu0 %v826
        %v3333 = vpop.f32.mrf.mxu0
        %v3334 = vadd.f32 %v1229, %v3333
        %v3335 = vpop.f32.mrf.mxu0
        %v3336 = vadd.f32 %v1233, %v3335
        %v3337 = vpop.f32.mrf.mxu0
        %v3338 = vpop.f32.mrf.mxu0
        %3339 = vdwg.mxu0
        %3340 = vmatprep.subr.bf16.mxu0 %v2663
        %3341 = vmatpush1.bf16.msra.mxu0 %v2662
        %3342 = vmatprep.subr.bf16.mxu0 %v2639
        %3343 = vmatpush1.bf16.msra.mxu0 %v2638
        %3344 = vmatprep.subr.bf16.mxu0 %v2615
        %3345 = vmatpush1.bf16.msra.mxu0 %v2614
        %3346 = vmatprep.subr.bf16.mxu0 %v2591
        %3347 = vmatpush1.bf16.msra.mxu0 %v2590
        %3348 = vmatprep.subr.bf16.mxu0 %v2567
        %3349 = vmatpush1.bf16.msra.mxu0 %v2566
        %3350 = vmatprep.subr.bf16.mxu0 %v2543
        %3351 = vmatpush1.bf16.msra.mxu0 %v2542
        %3352 = vmatprep.subr.bf16.mxu0 %v2519
        %3353 = vmatpush1.bf16.msra.mxu0 %v2518
        %3354 = vmatprep.subr.bf16.mxu0 %v2495
        %3355 = vmatpush1.bf16.msra.mxu0 %v2494
        %3356 = vmatprep.subr.bf16.mxu0 %v2855
        %3357 = vmatpush2.bf16.msra.mxu0 %v2854
        %3358 = vmatprep.subr.bf16.mxu0 %v2831
        %3359 = vmatpush2.bf16.msra.mxu0 %v2830
        %3360 = vmatprep.subr.bf16.mxu0 %v2807
        %3361 = vmatpush2.bf16.msra.mxu0 %v2806
        %3362 = vmatprep.subr.bf16.mxu0 %v2783
        %3363 = vmatpush2.bf16.msra.mxu0 %v2782
        %3364 = vmatprep.subr.bf16.mxu0 %v2759
        %3365 = vmatpush2.bf16.msra.mxu0 %v2758
        %3366 = vmatprep.subr.bf16.mxu0 %v2735
        %3367 = vmatpush2.bf16.msra.mxu0 %v2734
        %3368 = vmatprep.subr.bf16.mxu0 %v2711
        %3369 = vmatpush2.bf16.msra.mxu0 %v2710
        %3370 = vmatprep.subr.bf16.mxu0 %v2687
        %3371 = vmatpush2.bf16.msra.mxu0 %v2686
        %3372 = vmatprep.mubr.bf16.mxu0 %v827
        %3373 = vmatmul.mubr.bf16.gmra.mxu0 %v826
        %v3374 = vpop.f32.mrf.mxu0
        %v3375 = vadd.f32 %v1237, %v3374
        %v3376 = vpop.f32.mrf.mxu0
        %v3377 = vadd.f32 %v1241, %v3376
        %v3378 = vpop.f32.mrf.mxu0
        %v3379 = vpop.f32.mrf.mxu0
        %3380 = vdwg.mxu0
        %3381 = vmatprep.subr.bf16.mxu0 %v2665
        %3382 = vmatpush1.bf16.msra.mxu0 %v2664
        %3383 = vmatprep.subr.bf16.mxu0 %v2641
        %3384 = vmatpush1.bf16.msra.mxu0 %v2640
        %3385 = vmatprep.subr.bf16.mxu0 %v2617
        %3386 = vmatpush1.bf16.msra.mxu0 %v2616
        %3387 = vmatprep.subr.bf16.mxu0 %v2593
        %3388 = vmatpush1.bf16.msra.mxu0 %v2592
        %3389 = vmatprep.subr.bf16.mxu0 %v2569
        %3390 = vmatpush1.bf16.msra.mxu0 %v2568
        %3391 = vmatprep.subr.bf16.mxu0 %v2545
        %3392 = vmatpush1.bf16.msra.mxu0 %v2544
        %3393 = vmatprep.subr.bf16.mxu0 %v2521
        %3394 = vmatpush1.bf16.msra.mxu0 %v2520
        %3395 = vmatprep.subr.bf16.mxu0 %v2497
        %3396 = vmatpush1.bf16.msra.mxu0 %v2496
        %3397 = vmatprep.subr.bf16.mxu0 %v2857
        %3398 = vmatpush2.bf16.msra.mxu0 %v2856
        %3399 = vmatprep.subr.bf16.mxu0 %v2833
        %3400 = vmatpush2.bf16.msra.mxu0 %v2832
        %3401 = vmatprep.subr.bf16.mxu0 %v2809
        %3402 = vmatpush2.bf16.msra.mxu0 %v2808
        %3403 = vmatprep.subr.bf16.mxu0 %v2785
        %3404 = vmatpush2.bf16.msra.mxu0 %v2784
        %3405 = vmatprep.subr.bf16.mxu0 %v2761
        %3406 = vmatpush2.bf16.msra.mxu0 %v2760
        %3407 = vmatprep.subr.bf16.mxu0 %v2737
        %3408 = vmatpush2.bf16.msra.mxu0 %v2736
        %3409 = vmatprep.subr.bf16.mxu0 %v2713
        %3410 = vmatpush2.bf16.msra.mxu0 %v2712
        %3411 = vmatprep.subr.bf16.mxu0 %v2689
        %3412 = vmatpush2.bf16.msra.mxu0 %v2688
        %3413 = vmatprep.mubr.bf16.mxu0 %v827
        %3414 = vmatmul.mubr.bf16.gmra.mxu0 %v826
        %v3415 = vpop.f32.mrf.mxu0
        %v3416 = vadd.f32 %v1245, %v3415
        %v3417 = vpop.f32.mrf.mxu0
        %v3418 = vadd.f32 %v1249, %v3417
        %v3419 = vpop.f32.mrf.mxu0
        %v3420 = vpop.f32.mrf.mxu0
        %3421 = vdwg.mxu0
        %3422 = vmatprep.subr.bf16.mxu0 %v2667
        %3423 = vmatpush1.bf16.msra.mxu0 %v2666
        %3424 = vmatprep.subr.bf16.mxu0 %v2643
        %3425 = vmatpush1.bf16.msra.mxu0 %v2642
        %3426 = vmatprep.subr.bf16.mxu0 %v2619
        %3427 = vmatpush1.bf16.msra.mxu0 %v2618
        %3428 = vmatprep.subr.bf16.mxu0 %v2595
        %3429 = vmatpush1.bf16.msra.mxu0 %v2594
        %3430 = vmatprep.subr.bf16.mxu0 %v2571
        %3431 = vmatpush1.bf16.msra.mxu0 %v2570
        %3432 = vmatprep.subr.bf16.mxu0 %v2547
        %3433 = vmatpush1.bf16.msra.mxu0 %v2546
        %3434 = vmatprep.subr.bf16.mxu0 %v2523
        %3435 = vmatpush1.bf16.msra.mxu0 %v2522
        %3436 = vmatprep.subr.bf16.mxu0 %v2499
        %3437 = vmatpush1.bf16.msra.mxu0 %v2498
        %3438 = vmatprep.subr.bf16.mxu0 %v2859
        %3439 = vmatpush2.bf16.msra.mxu0 %v2858
        %3440 = vmatprep.subr.bf16.mxu0 %v2835
        %3441 = vmatpush2.bf16.msra.mxu0 %v2834
        %3442 = vmatprep.subr.bf16.mxu0 %v2811
        %3443 = vmatpush2.bf16.msra.mxu0 %v2810
        %3444 = vmatprep.subr.bf16.mxu0 %v2787
        %3445 = vmatpush2.bf16.msra.mxu0 %v2786
        %3446 = vmatprep.subr.bf16.mxu0 %v2763
        %3447 = vmatpush2.bf16.msra.mxu0 %v2762
        %3448 = vmatprep.subr.bf16.mxu0 %v2739
        %3449 = vmatpush2.bf16.msra.mxu0 %v2738
        %3450 = vmatprep.subr.bf16.mxu0 %v2715
        %3451 = vmatpush2.bf16.msra.mxu0 %v2714
        %3452 = vmatprep.subr.bf16.mxu0 %v2691
        %3453 = vmatpush2.bf16.msra.mxu0 %v2690
        %3454 = vmatprep.mubr.bf16.mxu0 %v827
        %3455 = vmatmul.mubr.bf16.gmra.mxu0 %v826
        %v3456 = vpop.f32.mrf.mxu0
        %v3457 = vadd.f32 %v1253, %v3456
        %v3458 = vpop.f32.mrf.mxu0
        %v3459 = vadd.f32 %v1257, %v3458
        %v3460 = vpop.f32.mrf.mxu0
        %v3461 = vpop.f32.mrf.mxu0
        %3462 = vdwg.mxu0
        %3463 = vmatprep.subr.bf16.mxu0 %v2669
        %3464 = vmatpush1.bf16.msra.mxu0 %v2668
        %3465 = vmatprep.subr.bf16.mxu0 %v2645
        %3466 = vmatpush1.bf16.msra.mxu0 %v2644
        %3467 = vmatprep.subr.bf16.mxu0 %v2621
        %3468 = vmatpush1.bf16.msra.mxu0 %v2620
        %3469 = vmatprep.subr.bf16.mxu0 %v2597
        %3470 = vmatpush1.bf16.msra.mxu0 %v2596
        %3471 = vmatprep.subr.bf16.mxu0 %v2573
        %3472 = vmatpush1.bf16.msra.mxu0 %v2572
        %3473 = vmatprep.subr.bf16.mxu0 %v2549
        %3474 = vmatpush1.bf16.msra.mxu0 %v2548
        %3475 = vmatprep.subr.bf16.mxu0 %v2525
        %3476 = vmatpush1.bf16.msra.mxu0 %v2524
        %3477 = vmatprep.subr.bf16.mxu0 %v2501
        %3478 = vmatpush1.bf16.msra.mxu0 %v2500
        %3479 = vmatprep.subr.bf16.mxu0 %v2861
        %3480 = vmatpush2.bf16.msra.mxu0 %v2860
        %3481 = vmatprep.subr.bf16.mxu0 %v2837
        %3482 = vmatpush2.bf16.msra.mxu0 %v2836
        %3483 = vmatprep.subr.bf16.mxu0 %v2813
        %3484 = vmatpush2.bf16.msra.mxu0 %v2812
        %3485 = vmatprep.subr.bf16.mxu0 %v2789
        %3486 = vmatpush2.bf16.msra.mxu0 %v2788
        %3487 = vmatprep.subr.bf16.mxu0 %v2765
        %3488 = vmatpush2.bf16.msra.mxu0 %v2764
        %3489 = vmatprep.subr.bf16.mxu0 %v2741
        %3490 = vmatpush2.bf16.msra.mxu0 %v2740
        %3491 = vmatprep.subr.bf16.mxu0 %v2717
        %3492 = vmatpush2.bf16.msra.mxu0 %v2716
        %3493 = vmatprep.subr.bf16.mxu0 %v2693
        %3494 = vmatpush2.bf16.msra.mxu0 %v2692
        %3495 = vmatprep.mubr.bf16.mxu0 %v827
        %3496 = vmatmul.mubr.bf16.gmra.mxu0 %v826
        %v3497 = vpop.f32.mrf.mxu0
        %v3498 = vadd.f32 %v1261, %v3497
        %v3499 = vpop.f32.mrf.mxu0
        %v3500 = vadd.f32 %v1265, %v3499
        %v3501 = vpop.f32.mrf.mxu0
        %v3502 = vpop.f32.mrf.mxu0
        %3503 = vdwg.mxu0
        %3504 = vmatprep.subr.bf16.mxu0 %v2671
        %3505 = vmatpush1.bf16.msra.mxu0 %v2670
        %3506 = vmatprep.subr.bf16.mxu0 %v2647
        %3507 = vmatpush1.bf16.msra.mxu0 %v2646
        %3508 = vmatprep.subr.bf16.mxu0 %v2623
        %3509 = vmatpush1.bf16.msra.mxu0 %v2622
        %3510 = vmatprep.subr.bf16.mxu0 %v2599
        %3511 = vmatpush1.bf16.msra.mxu0 %v2598
        %3512 = vmatprep.subr.bf16.mxu0 %v2575
        %3513 = vmatpush1.bf16.msra.mxu0 %v2574
        %3514 = vmatprep.subr.bf16.mxu0 %v2551
        %3515 = vmatpush1.bf16.msra.mxu0 %v2550
        %3516 = vmatprep.subr.bf16.mxu0 %v2527
        %3517 = vmatpush1.bf16.msra.mxu0 %v2526
        %3518 = vmatprep.subr.bf16.mxu0 %v2503
        %3519 = vmatpush1.bf16.msra.mxu0 %v2502
        %3520 = vmatprep.subr.bf16.mxu0 %v2863
        %3521 = vmatpush2.bf16.msra.mxu0 %v2862
        %3522 = vmatprep.subr.bf16.mxu0 %v2839
        %3523 = vmatpush2.bf16.msra.mxu0 %v2838
        %3524 = vmatprep.subr.bf16.mxu0 %v2815
        %3525 = vmatpush2.bf16.msra.mxu0 %v2814
        %3526 = vmatprep.subr.bf16.mxu0 %v2791
        %3527 = vmatpush2.bf16.msra.mxu0 %v2790
        %3528 = vmatprep.subr.bf16.mxu0 %v2767
        %3529 = vmatpush2.bf16.msra.mxu0 %v2766
        %3530 = vmatprep.subr.bf16.mxu0 %v2743
        %3531 = vmatpush2.bf16.msra.mxu0 %v2742
        %3532 = vmatprep.subr.bf16.mxu0 %v2719
        %3533 = vmatpush2.bf16.msra.mxu0 %v2718
        %3534 = vmatprep.subr.bf16.mxu0 %v2695
        %3535 = vmatpush2.bf16.msra.mxu0 %v2694
        %3536 = vmatprep.mubr.bf16.mxu0 %v827
        %3537 = vmatmul.mubr.bf16.gmra.mxu0 %v826
        %v3538 = vpop.f32.mrf.mxu0
        %v3539 = vadd.f32 %v1269, %v3538
        %v3540 = vpop.f32.mrf.mxu0
        %v3541 = vadd.f32 %v1273, %v3540
        %v3542 = vpop.f32.mrf.mxu0
        %v3543 = vpop.f32.mrf.mxu0
        %3544 = vdwg.mxu0
        %3545 = vmatprep.subr.bf16.mxu0 %v2673
        %3546 = vmatpush1.bf16.msra.mxu0 %v2672
        %3547 = vmatprep.subr.bf16.mxu0 %v2649
        %3548 = vmatpush1.bf16.msra.mxu0 %v2648
        %3549 = vmatprep.subr.bf16.mxu0 %v2625
        %3550 = vmatpush1.bf16.msra.mxu0 %v2624
        %3551 = vmatprep.subr.bf16.mxu0 %v2601
        %3552 = vmatpush1.bf16.msra.mxu0 %v2600
        %3553 = vmatprep.subr.bf16.mxu0 %v2577
        %3554 = vmatpush1.bf16.msra.mxu0 %v2576
        %3555 = vmatprep.subr.bf16.mxu0 %v2553
        %3556 = vmatpush1.bf16.msra.mxu0 %v2552
        %3557 = vmatprep.subr.bf16.mxu0 %v2529
        %3558 = vmatpush1.bf16.msra.mxu0 %v2528
        %3559 = vmatprep.subr.bf16.mxu0 %v2505
        %3560 = vmatpush1.bf16.msra.mxu0 %v2504
        %3561 = vmatprep.subr.bf16.mxu0 %v2865
        %3562 = vmatpush2.bf16.msra.mxu0 %v2864
        %3563 = vmatprep.subr.bf16.mxu0 %v2841
        %3564 = vmatpush2.bf16.msra.mxu0 %v2840
        %3565 = vmatprep.subr.bf16.mxu0 %v2817
        %3566 = vmatpush2.bf16.msra.mxu0 %v2816
        %3567 = vmatprep.subr.bf16.mxu0 %v2793
        %3568 = vmatpush2.bf16.msra.mxu0 %v2792
        %3569 = vmatprep.subr.bf16.mxu0 %v2769
        %3570 = vmatpush2.bf16.msra.mxu0 %v2768
        %3571 = vmatprep.subr.bf16.mxu0 %v2745
        %3572 = vmatpush2.bf16.msra.mxu0 %v2744
        %3573 = vmatprep.subr.bf16.mxu0 %v2721
        %3574 = vmatpush2.bf16.msra.mxu0 %v2720
        %3575 = vmatprep.subr.bf16.mxu0 %v2697
        %3576 = vmatpush2.bf16.msra.mxu0 %v2696
        %3577 = vmatprep.mubr.bf16.mxu0 %v827
        %3578 = vmatmul.mubr.bf16.gmra.mxu0 %v826
        %v3579 = vpop.f32.mrf.mxu0
        %v3580 = vadd.f32 %v1277, %v3579
        %v3581 = vpop.f32.mrf.mxu0
        %v3582 = vadd.f32 %v1281, %v3581
        %v3583 = vpop.f32.mrf.mxu0
        %v3584 = vpop.f32.mrf.mxu0
        %3585 = vdwg.mxu0
        %3586 = vmatprep.subr.bf16.mxu0 %v2675
        %3587 = vmatpush1.bf16.msra.mxu0 %v2674
        %3588 = vmatprep.subr.bf16.mxu0 %v2651
        %3589 = vmatpush1.bf16.msra.mxu0 %v2650
        %3590 = vmatprep.subr.bf16.mxu0 %v2627
        %3591 = vmatpush1.bf16.msra.mxu0 %v2626
        %3592 = vmatprep.subr.bf16.mxu0 %v2603
        %3593 = vmatpush1.bf16.msra.mxu0 %v2602
        %3594 = vmatprep.subr.bf16.mxu0 %v2579
        %3595 = vmatpush1.bf16.msra.mxu0 %v2578
        %3596 = vmatprep.subr.bf16.mxu0 %v2555
        %3597 = vmatpush1.bf16.msra.mxu0 %v2554
        %3598 = vmatprep.subr.bf16.mxu0 %v2531
        %3599 = vmatpush1.bf16.msra.mxu0 %v2530
        %3600 = vmatprep.subr.bf16.mxu0 %v2507
        %3601 = vmatpush1.bf16.msra.mxu0 %v2506
        %3602 = vmatprep.subr.bf16.mxu0 %v2867
        %3603 = vmatpush2.bf16.msra.mxu0 %v2866
        %3604 = vmatprep.subr.bf16.mxu0 %v2843
        %3605 = vmatpush2.bf16.msra.mxu0 %v2842
        %3606 = vmatprep.subr.bf16.mxu0 %v2819
        %3607 = vmatpush2.bf16.msra.mxu0 %v2818
        %3608 = vmatprep.subr.bf16.mxu0 %v2795
        %3609 = vmatpush2.bf16.msra.mxu0 %v2794
        %3610 = vmatprep.subr.bf16.mxu0 %v2771
        %3611 = vmatpush2.bf16.msra.mxu0 %v2770
        %3612 = vmatprep.subr.bf16.mxu0 %v2747
        %3613 = vmatpush2.bf16.msra.mxu0 %v2746
        %3614 = vmatprep.subr.bf16.mxu0 %v2723
        %3615 = vmatpush2.bf16.msra.mxu0 %v2722
        %3616 = vmatprep.subr.bf16.mxu0 %v2699
        %3617 = vmatpush2.bf16.msra.mxu0 %v2698
        %3618 = vmatprep.mubr.bf16.mxu0 %v827
        %3619 = vmatmul.mubr.bf16.gmra.mxu0 %v826
        %v3620 = vpop.f32.mrf.mxu0
        %v3621 = vadd.f32 %v1285, %v3620
        %v3622 = vpop.f32.mrf.mxu0
        %v3623 = vadd.f32 %v1289, %v3622
        %v3624 = vpop.f32.mrf.mxu0
        %v3625 = vpop.f32.mrf.mxu0
        %3626 = vdwg.mxu0
        %3627 = vmatprep.subr.bf16.mxu0 %v2677
        %3628 = vmatpush1.bf16.msra.mxu0 %v2676
        %3629 = vmatprep.subr.bf16.mxu0 %v2653
        %3630 = vmatpush1.bf16.msra.mxu0 %v2652
        %3631 = vmatprep.subr.bf16.mxu0 %v2629
        %3632 = vmatpush1.bf16.msra.mxu0 %v2628
        %3633 = vmatprep.subr.bf16.mxu0 %v2605
        %3634 = vmatpush1.bf16.msra.mxu0 %v2604
        %3635 = vmatprep.subr.bf16.mxu0 %v2581
        %3636 = vmatpush1.bf16.msra.mxu0 %v2580
        %3637 = vmatprep.subr.bf16.mxu0 %v2557
        %3638 = vmatpush1.bf16.msra.mxu0 %v2556
        %3639 = vmatprep.subr.bf16.mxu0 %v2533
        %3640 = vmatpush1.bf16.msra.mxu0 %v2532
        %3641 = vmatprep.subr.bf16.mxu0 %v2509
        %3642 = vmatpush1.bf16.msra.mxu0 %v2508
        %3643 = vmatprep.subr.bf16.mxu0 %v2869
        %3644 = vmatpush2.bf16.msra.mxu0 %v2868
        %3645 = vmatprep.subr.bf16.mxu0 %v2845
        %3646 = vmatpush2.bf16.msra.mxu0 %v2844
        %3647 = vmatprep.subr.bf16.mxu0 %v2821
        %3648 = vmatpush2.bf16.msra.mxu0 %v2820
        %3649 = vmatprep.subr.bf16.mxu0 %v2797
        %3650 = vmatpush2.bf16.msra.mxu0 %v2796
        %3651 = vmatprep.subr.bf16.mxu0 %v2773
        %3652 = vmatpush2.bf16.msra.mxu0 %v2772
        %3653 = vmatprep.subr.bf16.mxu0 %v2749
        %3654 = vmatpush2.bf16.msra.mxu0 %v2748
        %3655 = vmatprep.subr.bf16.mxu0 %v2725
        %3656 = vmatpush2.bf16.msra.mxu0 %v2724
        %3657 = vmatprep.subr.bf16.mxu0 %v2701
        %3658 = vmatpush2.bf16.msra.mxu0 %v2700
        %3659 = vmatprep.mubr.bf16.mxu0 %v827
        %3660 = vmatmul.mubr.bf16.gmra.mxu0 %v826
        %v3661 = vpop.f32.mrf.mxu0
        %v3662 = vadd.f32 %v1293, %v3661
        %v3663 = vpop.f32.mrf.mxu0
        %v3664 = vadd.f32 %v1297, %v3663
        %v3665 = vpop.f32.mrf.mxu0
        %v3666 = vpop.f32.mrf.mxu0
        %3667 = vdwg.mxu0
        %3668 = vmatprep.subr.bf16.mxu0 %v2679
        %3669 = vmatpush1.bf16.msra.mxu0 %v2678
        %3670 = vmatprep.subr.bf16.mxu0 %v2655
        %3671 = vmatpush1.bf16.msra.mxu0 %v2654
        %3672 = vmatprep.subr.bf16.mxu0 %v2631
        %3673 = vmatpush1.bf16.msra.mxu0 %v2630
        %3674 = vmatprep.subr.bf16.mxu0 %v2607
        %3675 = vmatpush1.bf16.msra.mxu0 %v2606
        %3676 = vmatprep.subr.bf16.mxu0 %v2583
        %3677 = vmatpush1.bf16.msra.mxu0 %v2582
        %3678 = vmatprep.subr.bf16.mxu0 %v2559
        %3679 = vmatpush1.bf16.msra.mxu0 %v2558
        %3680 = vmatprep.subr.bf16.mxu0 %v2535
        %3681 = vmatpush1.bf16.msra.mxu0 %v2534
        %3682 = vmatprep.subr.bf16.mxu0 %v2511
        %3683 = vmatpush1.bf16.msra.mxu0 %v2510
        %3684 = vmatprep.subr.bf16.mxu0 %v2871
        %3685 = vmatpush2.bf16.msra.mxu0 %v2870
        %3686 = vmatprep.subr.bf16.mxu0 %v2847
        %3687 = vmatpush2.bf16.msra.mxu0 %v2846
        %3688 = vmatprep.subr.bf16.mxu0 %v2823
        %3689 = vmatpush2.bf16.msra.mxu0 %v2822
        %3690 = vmatprep.subr.bf16.mxu0 %v2799
        %3691 = vmatpush2.bf16.msra.mxu0 %v2798
        %3692 = vmatprep.subr.bf16.mxu0 %v2775
        %3693 = vmatpush2.bf16.msra.mxu0 %v2774
        %3694 = vmatprep.subr.bf16.mxu0 %v2751
        %3695 = vmatpush2.bf16.msra.mxu0 %v2750
        %3696 = vmatprep.subr.bf16.mxu0 %v2727
        %3697 = vmatpush2.bf16.msra.mxu0 %v2726
        %3698 = vmatprep.subr.bf16.mxu0 %v2703
        %3699 = vmatpush2.bf16.msra.mxu0 %v2702
        %3700 = vmatprep.mubr.bf16.mxu0 %v827
        %3701 = vmatmul.mubr.bf16.gmra.mxu0 %v826
        %v3702 = vpop.f32.mrf.mxu0
        %v3703 = vadd.f32 %v1301, %v3702
        %v3704 = vpop.f32.mrf.mxu0
        %v3705 = vadd.f32 %v1305, %v3704
        %v3706 = vpop.f32.mrf.mxu0
        %v3707 = vpop.f32.mrf.mxu0
        %3708 = vdwg.mxu0
        %3709 = vmatprep.subr.bf16.mxu0 %v2681
        %3710 = vmatpush1.bf16.msra.mxu0 %v2680
        %3711 = vmatprep.subr.bf16.mxu0 %v2657
        %3712 = vmatpush1.bf16.msra.mxu0 %v2656
        %3713 = vmatprep.subr.bf16.mxu0 %v2633
        %3714 = vmatpush1.bf16.msra.mxu0 %v2632
        %3715 = vmatprep.subr.bf16.mxu0 %v2609
        %3716 = vmatpush1.bf16.msra.mxu0 %v2608
        %3717 = vmatprep.subr.bf16.mxu0 %v2585
        %3718 = vmatpush1.bf16.msra.mxu0 %v2584
        %3719 = vmatprep.subr.bf16.mxu0 %v2561
        %3720 = vmatpush1.bf16.msra.mxu0 %v2560
        %3721 = vmatprep.subr.bf16.mxu0 %v2537
        %3722 = vmatpush1.bf16.msra.mxu0 %v2536
        %3723 = vmatprep.subr.bf16.mxu0 %v2513
        %3724 = vmatpush1.bf16.msra.mxu0 %v2512
        %3725 = vmatprep.subr.bf16.mxu0 %v2873
        %3726 = vmatpush2.bf16.msra.mxu0 %v2872
        %3727 = vmatprep.subr.bf16.mxu0 %v2849
        %3728 = vmatpush2.bf16.msra.mxu0 %v2848
        %3729 = vmatprep.subr.bf16.mxu0 %v2825
        %3730 = vmatpush2.bf16.msra.mxu0 %v2824
        %3731 = vmatprep.subr.bf16.mxu0 %v2801
        %3732 = vmatpush2.bf16.msra.mxu0 %v2800
        %3733 = vmatprep.subr.bf16.mxu0 %v2777
        %3734 = vmatpush2.bf16.msra.mxu0 %v2776
        %3735 = vmatprep.subr.bf16.mxu0 %v2753
        %3736 = vmatpush2.bf16.msra.mxu0 %v2752
        %3737 = vmatprep.subr.bf16.mxu0 %v2729
        %3738 = vmatpush2.bf16.msra.mxu0 %v2728
        %3739 = vmatprep.subr.bf16.mxu0 %v2705
        %3740 = vmatpush2.bf16.msra.mxu0 %v2704
        %3741 = vmatprep.mubr.bf16.mxu0 %v827
        %3742 = vmatmul.mubr.bf16.gmra.mxu0 %v826
        %v3743 = vpop.f32.mrf.mxu0
        %v3744 = vadd.f32 %v1309, %v3743
        %v3745 = vpop.f32.mrf.mxu0
        %v3746 = vadd.f32 %v1313, %v3745
        %v3747 = vpop.f32.mrf.mxu0
        %v3748 = vpop.f32.mrf.mxu0
        %3749 = vdwg.mxu0
        %v3750 = vmax.f32 %v3293, 0.0
        %v3751 = vmax.f32 %v3295, 0.0
        %v3752 = vmax.f32 %v3334, 0.0
        %v3753 = vmax.f32 %v3336, 0.0
        %v3754 = vmax.f32 %v3375, 0.0
        %v3755 = vmax.f32 %v3377, 0.0
        %v3756 = vmax.f32 %v3416, 0.0
        %v3757 = vmax.f32 %v3418, 0.0
        %v3758 = vmax.f32 %v3457, 0.0
        %v3759 = vmax.f32 %v3459, 0.0
        %v3760 = vmax.f32 %v3498, 0.0
        %v3761 = vmax.f32 %v3500, 0.0
        %v3762 = vmax.f32 %v3539, 0.0
        %v3763 = vmax.f32 %v3541, 0.0
        %v3764 = vmax.f32 %v3580, 0.0
        %v3765 = vmax.f32 %v3582, 0.0
        %v3766 = vmax.f32 %v3621, 0.0
        %v3767 = vmax.f32 %v3623, 0.0
        %v3768 = vmax.f32 %v3662, 0.0
        %v3769 = vmax.f32 %v3664, 0.0
        %v3770 = vmax.f32 %v3703, 0.0
        %v3771 = vmax.f32 %v3705, 0.0
        %v3772 = vmax.f32 %v3744, 0.0
        %v3773 = vmax.f32 %v3746, 0.0
        %3774 = vst [vmem:[%s419] sm:$0xff] %v3750
        %3775 = vst [vmem:[%s419 + $0x8] sm:$0xff] %v3751
        %3776 = vst [vmem:[%s419 + $0x10] sm:$0xff] %v3752
        %3777 = vst [vmem:[%s419 + $0x18] sm:$0xff] %v3753
        %3778 = vst [vmem:[%s419 + $0x20] sm:$0xff] %v3754
        %3779 = vst [vmem:[%s419 + $0x28] sm:$0xff] %v3755
        %3780 = vst [vmem:[%s419 + $0x30] sm:$0xff] %v3756
        %3781 = vst [vmem:[%s419 + $0x38] sm:$0xff] %v3757
        %3782 = vst [vmem:[%s419 + $0x40] sm:$0xff] %v3758
        %3783 = vst [vmem:[%s419 + $0x48] sm:$0xff] %v3759
        %3784 = vst [vmem:[%s419 + $0x50] sm:$0xff] %v3760
        %3785 = vst [vmem:[%s419 + $0x58] sm:$0xff] %v3761
        %3786 = vst [vmem:[%s419 + $0x60] sm:$0xff] %v3762
        %3787 = vst [vmem:[%s419 + $0x68] sm:$0xff] %v3763
        %3788 = vst [vmem:[%s419 + $0x70] sm:$0xff] %v3764
        %3789 = vst [vmem:[%s419 + $0x78] sm:$0xff] %v3765
        %3790 = vst [vmem:[%s419 + $0x80] sm:$0xff] %v3766
        %3791 = vst [vmem:[%s419 + $0x88] sm:$0xff] %v3767
        %3792 = vst [vmem:[%s419 + $0x90] sm:$0xff] %v3768
        %3793 = vst [vmem:[%s419 + $0x98] sm:$0xff] %v3769
        %3794 = vst [vmem:[%s419 + $0xa0] sm:$0xff] %v3770
        %3795 = vst [vmem:[%s419 + $0xa8] sm:$0xff] %v3771
        %3796 = vst [vmem:[%s419 + $0xb0] sm:$0xff] %v3772
        %3797 = vst [vmem:[%s419 + $0xb8] sm:$0xff] %v3773
        %s3798 = sand.u32 %s211, 1
        %s3799 = scalar_lea.sflag [#allocation4], %s3798
        %s3800 = sand.u32 %s211, 1
        %s3801 = smul.addr %s3800, 192
        %s3802 = scalar_lea.vmem [#allocation14], %s3801
        // Predicated region
        $region77: #{tpu_custom_call.1} parent=47 // pred_check
          %p3803 = pneg %p221
        $region78: #{tpu_custom_call.1} parent=47 // pred_check_branch
          %3805 = sbr.rel (%p3803) target = $region80
        $region79: #{tpu_custom_call.1} parent=47 // pred_region
          %s3806 = smul.u32 24, %s31
          %s3808 = ssub.s32 3072, 3072
          %3809 = vsyncadd %s3799, %s3808
          %s3810 = smul.addr %s32, 48
          %s3811 = sadd.s32 %s3806, %s3810
          %s3812 = smul.addr %s3811, 128
          %s3813 = scalar_lea.hbm %s7, %s3812
          %s3815 = sshll.u32 %s3802, 4
          %s3816 = int_to_ptr.vmem [resolvable:$true] %s3815
          %3818 = dma.vmem_to_hbm [thread:$0]  %s3816, 3072, %s3813, %s3799
        $region80: #{tpu_custom_call.1} parent=47 // pred_fallthru
          _
      $region48: #{tpu_custom_call.1} parent=5 // pred_fallthru
        _
      %p3819 = scmp.le.s32.totalorder 2, %s22
      // Predicated region
      $region81: #{tpu_custom_call.1} parent=5 // pred_check
        %p3820 = pneg %p3819
      $region82: #{tpu_custom_call.1} parent=5 // pred_check_branch
        %3822 = sbr.rel (%p3820) target = $region84
      $region83: #{tpu_custom_call.1} parent=5 // pred_region
        %s3823 = ssub.s32 %s22, 2
        // Predicated region
        $region85: #{tpu_custom_call.1} parent=83 // pred_check
          %p3824 = pneg %p227
        $region86: #{tpu_custom_call.1} parent=83 // pred_check_branch
          %3826 = sbr.rel (%p3824) target = $region88
        $region87: #{tpu_custom_call.1} parent=83 // pred_region
          %s3827 = sand.u32 %s212, 1
          %s3828 = scalar_lea.sflag [#allocation4], %s3827
          %s3829 = sand.u32 %s212, 1
          %s3830 = smul.addr %s3829, 192
          %s3831 = scalar_lea.vmem [#allocation14], %s3830
          %3832 = dma.done %s3828, 3072
        $region88: #{tpu_custom_call.1} parent=83 // pred_fallthru
          _
      $region84: #{tpu_custom_call.1} parent=5 // pred_fallthru
        _
    $region6: #{tpu_custom_call.1} parent=1 // loop_footer
      %s26 = sadd.s32 1, %s22
    $region7: #{tpu_custom_call.1} parent=1 // loop_footer_branch
      %21 = sbr.rel target = $region3
    $region8: #{tpu_custom_call.1} parent=1 // loop_exit
      _
    %3833 = vsyncpa [#allocation3], 1
    %s3834 = scalar_lea.sflag [#allocation3], 1
    %3835 = vsyncpa %s3834, 1
    %3836 = vsyncpa [#allocation6], 1
    %3837 = vsyncpa [#allocation9], 1
    %3838 = vsyncpa [#allocation12], 1
    %s3839 = scalar_lea.sflag [#allocation12], 1
    %3840 = vsyncpa %s3839, 1
    %3841 = vsyncpa [#allocation4], 1
    %s3842 = scalar_lea.sflag [#allocation4], 1
    %3843 = vsyncpa %s3842, 1

</llo_original>
